<compile_context>
chip_gen: v7x
topology: tpu7x:2x2x1
jax: 0.10.0
libtpu: 0.0.40
codegen_flags: <defaults>
</compile_context>

<pallas_src>
import numpy as np
import jax
import jax.numpy as jnp
from jax.experimental import pallas as pl
from jax.experimental.pallas import tpu as pltpu


def _conv_input_masks(D, H, W):
    """(27, N) float32 *input-side* validity masks g_k for the 27 taps of a 3x3x3 conv
    with padding 1.  They satisfy, for any map m and tap shift sh_k = (-off_k) % N:
        roll(g_k * m, sh_k)[n] == out_valid_k[n] * m[n + off_k]
    which is exactly the zero-padded conv contribution of tap k (wrap-around neighbors
    are zeroed)."""
    N = D * H * W
    HW = H * W
    n = np.arange(N)
    d, h, w = n // HW, (n // W) % H, n % W
    g = np.empty((27, N), np.float32)
    for kd in range(3):
        for kh in range(3):
            for kw in range(3):
                k = kd * 9 + kh * 3 + kw
                dd, hh, ww = d + kd - 1, h + kh - 1, w + kw - 1
                out_valid = ((dd >= 0) & (dd < D) & (hh >= 0) & (hh < H)
                             & (ww >= 0) & (ww < W)).astype(np.float32)
                off = (kd - 1) * HW + (kh - 1) * W + (kw - 1)
                g[k] = np.roll(out_valid, off)     # move the mask to input coordinates
    return g


def _make_kernel(D, H, W, C, bb, ew_dtype):
    N = D * H * W
    HW = H * W
    inv_n = 1.0 / N
    inv_c = 1.0 / C

    def kernel(x_ref, w21_ref, wm_ref, o_ref):
        ones_col = jnp.ones((N, 1), ew_dtype)

        # ---------- channel pooling: mean via MXU, max via lane reduce ----------
        pooled_cols = []
        for b in range(bb):                                   # bb <= 8: tiny static unroll
            x_b = x_ref[b].astype(ew_dtype)                   # (C, N)
            mean_b = jnp.dot(x_b, ones_col,
                             preferred_element_type=jnp.float32) * inv_n        # (C, 1) MXU
            max_b = jnp.max(x_b, axis=1, keepdims=True).astype(jnp.float32)     # (C, 1) XLU
            pooled_cols.append(mean_b + max_b)
        pooled = pooled_cols[0] if bb == 1 else jnp.concatenate(pooled_cols, axis=1)  # (C, bb)

        # ---------- fused channel MLP: ONE MXU dot for the whole block; exact softmax ----------
        logits = jnp.dot(w21_ref[...], pooled, preferred_element_type=jnp.float32)    # (C, bb)
        logits = logits - jnp.max(logits, axis=0, keepdims=True)
        e = jnp.exp(logits)
        att = e / jnp.sum(e, axis=0, keepdims=True)            # (C, bb) f32, exact

        # ---------- spatial max / avg maps (avg via MXU, max via sublane reduce) ----------
        max_rows, avg_rows = [], []
        for b in range(bb):
            x_b = x_ref[b].astype(ew_dtype)                    # re-read from VMEM: bounds live ranges
            att_b = att[:, b:b + 1].astype(ew_dtype)           # (C, 1)
            p_b = att_b * x_b                                  # (C, N) elementwise (ew dtype)
            max_rows.append(jnp.max(p_b, axis=0, keepdims=True))                  # (1, N)
            s_b = jax.lax.dot_general(att_b, x_b, (((0,), (0,)), ((), ())),
                                      preferred_element_type=jnp.float32)         # (1, N) MXU
            avg_rows.append(s_b * inv_c)
        sp_max = (max_rows[0] if bb == 1
                  else jnp.concatenate(max_rows, axis=0)).astype(ew_dtype)         # (bb, N)
        sp_avg = (avg_rows[0] if bb == 1
                  else jnp.concatenate(avg_rows, axis=0)).astype(ew_dtype)         # (bb, N)

        # ---------- 3x3x3 Conv3d(2 -> 1, pad=1): 27 taps, ONE batched roll per tap ----------
        accs = [jnp.zeros((bb, N), jnp.float32) for _ in range(3)]   # partial accumulators
        for kd in range(3):
            for kh in range(3):
                for kw in range(3):
                    k = kd * 9 + kh * 3 + kw
                    off = (kd - 1) * HW + (kh - 1) * W + (kw - 1)
                    wm = wm_ref[k:k + 1, :]                    # (1, N) weight*mask, max path
                    wa = wm_ref[27 + k:28 + k, :]              # (1, N) weight*mask, avg path
                    comb = wm * sp_max + wa * sp_avg           # (bb, N)
                    sh = (-off) % N
                    if sh:
                        comb = pltpu.roll(comb, sh, axis=1)    # one XLU roll per tap
                    accs[k % 3] = accs[k % 3] + comb           # promotes to f32
        conv = accs[0] + accs[1] + accs[2]                     # (bb, N) f32

        # ---------- sigmoid gate + residual:  out = (1 + sigmoid(conv)) * x ----------
        gate = pl.reciprocal(1.0 + jnp.exp(-conv), approx=True)     # EUP, off the VALU slot
        fused = (gate + 1.0).astype(ew_dtype)                       # (bb, N)

        for b in range(bb):
            x_b = x_ref[b].astype(ew_dtype)
            o_ref[b] = (fused[b:b + 1, :] * x_b).astype(o_ref.dtype)

    return kernel


def _tpu_device_kind():
    try:
        return jax.devices()[0].device_kind.lower()
    except Exception:
        return ""


def _pick_block_batch(B, per_elem_bytes, kind):
    """Batch elements per grid step: big enough to amortize ~0.35us per-step overhead,
    small enough for scoped VMEM, capped at 8 to bound the static unroll of the tiny
    per-batch pooling/map passes.  Keep >=2 grid steps only on dual-TC parts (v7x)."""
    is_v7 = "v7" in kind
    dual_tc = is_v7 or (kind == "")
    target = (4 if is_v7 else 2) * 1024 * 1024
    bb = max(1, min(B, target // max(per_elem_bytes, 1)))
    if dual_tc and B >= 2:
        bb = max(1, min(bb, B // 2))       # engage both v7x TensorCores
    bb = min(bb, 8)
    while B % bb:
        bb -= 1
    return bb


def res_cbam_forward(x, w1, w2, wc):
    """x: (B, C, D, H, W); w1 = ch_Linear1.weight (C//4, C); w2 = ch_Linear2.weight (C, C//4);
    wc = sp_Conv.weight (1, 2, 3, 3, 3).  All layers are bias-free, as in the module."""
    B, C, D, H, W = x.shape
    N = D * H * W
    assert N % 128 == 0, "D*H*W must be a multiple of 128 for the lane-dense rolled conv"
    # TODO(synk): generalize the roll-based conv (pad N to a lane multiple) for other shapes.

    ew_dtype = jnp.bfloat16 if x.dtype == jnp.bfloat16 else jnp.float32

    x2 = x.reshape(B, C, N)                                       # free view, native layout
    w21 = w2.astype(jnp.float32) @ w1.astype(jnp.float32)         # (C, C) fused channel MLP

    # Conv weights folded into input-side validity masks:
    # rows 0..26 -> max path, rows 27..53 -> avg path (matches [sp_max, sp_avg] concat order).
    in_masks = np.concatenate([_conv_input_masks(D, H, W)] * 2, axis=0)        # (54, N)
    cw = wc.astype(jnp.float32).reshape(-1)                                    # (54,)
    wmasks = (cw[:, None] * jnp.asarray(in_masks)).astype(ew_dtype)            # (54, N)

    elem_size = np.dtype(x.dtype).itemsize
    bb = _pick_block_batch(B, C * N * elem_size, _tpu_device_kind())
    kernel = _make_kernel(D, H, W, C, bb, ew_dtype)

    # VMEM budget: double-buffered x/out blocks + resident wmasks + w21 (+ headroom).
    mask_bytes = 54 * N * np.dtype(ew_dtype).itemsize
    vmem_need = 4 * bb * C * N * elem_size + 2 * mask_bytes + 2 * C * C * 4 + (1 << 20)
    cp_kwargs = dict(dimension_semantics=("parallel",))
    if vmem_need > 12 * 1024 * 1024:       # v5e's scoped default is only 16 MiB: be explicit
        cp_kwargs["vmem_limit_bytes"] = int(min(vmem_need + (4 << 20), 48 * 1024 * 1024))

    out = pl.pallas_call(
        kernel,
        out_shape=jax.ShapeDtypeStruct((B, C, N), x.dtype),
        grid=(B // bb,),
        in_specs=[
            pl.BlockSpec((bb, C, N), lambda b: (b, 0, 0)),   # x block, lane-dense
            pl.BlockSpec((C, C), lambda b: (0, 0)),          # fused channel-MLP weight
            pl.BlockSpec((54, N), lambda b: (0, 0)),         # weighted conv-tap input masks
        ],
        out_specs=pl.BlockSpec((bb, C, N), lambda b: (b, 0, 0)),
        compiler_params=pltpu.CompilerParams(**cp_kwargs),
    )(x2, w21, wmasks)

    return out.reshape(B, C, D, H, W)


def res_cbam_reference(x, w1, w2, wc):
    """Pure-JAX mirror of the PyTorch forward (NCDHW), for correctness checking."""
    B, C, D, H, W = x.shape
    avg = jnp.mean(x, axis=(2, 3, 4))
    mx = jnp.max(x, axis=(2, 3, 4))
    avg_lin = (avg @ w1.T) @ w2.T
    max_lin = (mx @ w1.T) @ w2.T
    att = jax.nn.softmax(avg_lin + max_lin, axis=1)
    ch_out = att[:, :, None, None, None] * x
    sp_max = jnp.max(ch_out, axis=1, keepdims=True)
    sp_avg = jnp.sum(ch_out, axis=1, keepdims=True) / C
    sp_in = jnp.concatenate([sp_max, sp_avg], axis=1)
    conv = jax.lax.conv_general_dilated(
        sp_in, wc, window_strides=(1, 1, 1),
        padding=((1, 1), (1, 1), (1, 1)),
        dimension_numbers=("NCDHW", "OIDHW", "NCDHW"))
    sp = jax.nn.sigmoid(conv)
    return sp * x + x


if __name__ == "__main__":
    # in_planes = 8, feature_size = 8  ->  x: (B, C, S, S, S)
    B, C, S = 2, 8, 8
    key = jax.random.PRNGKey(0)
    kx, k1, k2, k3 = jax.random.split(key, 4)

    x = jax.random.normal(kx, (B, C, S, S, S), jnp.float32)
    w1 = jax.random.normal(k1, (C // 4, C), jnp.float32) * (1.0 / (C ** 0.5))          # ch_Linear1.weight
    w2 = jax.random.normal(k2, (C, C // 4), jnp.float32) * (1.0 / ((C // 4) ** 0.5))   # ch_Linear2.weight
    wc = jax.random.normal(k3, (1, 2, 3, 3, 3), jnp.float32) * 0.2                     # sp_Conv.weight

    out = jax.jit(res_cbam_forward)(x, w1, w2, wc)
    out = jax.block_until_ready(out)

    ref = res_cbam_reference(x, w1, w2, wc)
    assert out.shape == x.shape and out.dtype == x.dtype
    if not jnp.allclose(out, ref, rtol=2e-2, atol=2e-2):
        err = float(jnp.max(jnp.abs(out - ref)))
        raise AssertionError(f"Pallas output does not match reference (max abs err {err})")

    print("KERNEL_OK")
</pallas_src>

<mosaic_0001>
module attributes {stable_mosaic.version = 11 : i64} {
  func.func @kernel(%arg0: i32, %arg1: memref<2x8x512xf32, #tpu.memory_space<vmem>>, %arg2: memref<8x8xf32, #tpu.memory_space<vmem>>, %arg3: memref<54x512xf32, #tpu.memory_space<vmem>>, %arg4: memref<2x8x512xf32, #tpu.memory_space<vmem>>) attributes {dimension_semantics = [#tpu.dimension_semantics<parallel>], iteration_bounds = array<i64: 1>, scalar_prefetch = 0 : i64, scratch_operands = 0 : i64, tpu.core_type = #tpu.core_type<tc>, window_params = [{transform_indices = @transform_0, window_bounds = array<i64: 2, 8, 512>}, {pipeline_mode = #tpu.pipeline_mode<synchronous>, transform_indices = @transform_1, window_bounds = array<i64: 8, 8>}, {pipeline_mode = #tpu.pipeline_mode<synchronous>, transform_indices = @transform_2, window_bounds = array<i64: 54, 512>}, {transform_indices = @transform_3, window_bounds = array<i64: 2, 8, 512>}]} {
    %cst = arith.constant 1.000000e+00 : f32
    %0 = vector.broadcast %cst : f32 to vector<512x1xf32>
    %c0 = arith.constant 0 : index
    %c0_0 = arith.constant 0 : index
    %c0_1 = arith.constant 0 : index
    %1 = vector.load %arg1[%c0, %c0_0, %c0_1] : memref<2x8x512xf32, #tpu.memory_space<vmem>>, vector<1x8x512xf32>
    %2 = vector.shape_cast %1 : vector<1x8x512xf32> to vector<8x512xf32>
    %cst_2 = arith.constant dense<0.000000e+00> : vector<8x1xf32>
    %3 = tpu.matmul %2, %0, %cst_2 {dimension_numbers = #tpu.dot_dimension_numbers<[1], [0], [0], [1], [0, 0, 1, 1], [], []>} : vector<8x512xf32>, vector<512x1xf32>, vector<8x1xf32> -> vector<8x1xf32>
    %cst_3 = arith.constant 0.001953125 : f32
    %4 = vector.broadcast %cst_3 : f32 to vector<8x1xf32>
    %5 = arith.mulf %3, %4 : vector<8x1xf32>
    %cst_4 = arith.constant dense<0xFF800000> : vector<8xf32>
    %6 = vector.multi_reduction <maximumf>, %2, %cst_4 [1] : vector<8x512xf32> to vector<8xf32>
    %7 = vector.shape_cast %6 : vector<8xf32> to vector<8x1xf32>
    %8 = arith.addf %5, %7 : vector<8x1xf32>
    %c1 = arith.constant 1 : index
    %c0_5 = arith.constant 0 : index
    %c0_6 = arith.constant 0 : index
    %9 = vector.load %arg1[%c1, %c0_5, %c0_6] : memref<2x8x512xf32, #tpu.memory_space<vmem>>, vector<1x8x512xf32>
    %10 = vector.shape_cast %9 : vector<1x8x512xf32> to vector<8x512xf32>
    %cst_7 = arith.constant dense<0.000000e+00> : vector<8x1xf32>
    %11 = tpu.matmul %10, %0, %cst_7 {dimension_numbers = #tpu.dot_dimension_numbers<[1], [0], [0], [1], [0, 0, 1, 1], [], []>} : vector<8x512xf32>, vector<512x1xf32>, vector<8x1xf32> -> vector<8x1xf32>
    %cst_8 = arith.constant 0.001953125 : f32
    %12 = vector.broadcast %cst_8 : f32 to vector<8x1xf32>
    %13 = arith.mulf %11, %12 : vector<8x1xf32>
    %cst_9 = arith.constant dense<0xFF800000> : vector<8xf32>
    %14 = vector.multi_reduction <maximumf>, %10, %cst_9 [1] : vector<8x512xf32> to vector<8xf32>
    %15 = vector.shape_cast %14 : vector<8xf32> to vector<8x1xf32>
    %16 = arith.addf %13, %15 : vector<8x1xf32>
    %17 = tpu.concatenate %8, %16 in 1 : vector<8x1xf32>, vector<8x1xf32> -> vector<8x2xf32>
    %c0_10 = arith.constant 0 : index
    %c0_11 = arith.constant 0 : index
    %18 = vector.load %arg2[%c0_10, %c0_11] : memref<8x8xf32, #tpu.memory_space<vmem>>, vector<8x8xf32>
    %cst_12 = arith.constant dense<0.000000e+00> : vector<8x2xf32>
    %19 = tpu.matmul %18, %17, %cst_12 {dimension_numbers = #tpu.dot_dimension_numbers<[1], [0], [0], [1], [0, 0, 1, 1], [], []>} : vector<8x8xf32>, vector<8x2xf32>, vector<8x2xf32> -> vector<8x2xf32>
    %cst_13 = arith.constant dense<0xFF800000> : vector<2xf32>
    %20 = vector.multi_reduction <maximumf>, %19, %cst_13 [0] : vector<8x2xf32> to vector<2xf32>
    %21 = vector.shape_cast %20 : vector<2xf32> to vector<1x2xf32>
    %22 = vector.broadcast %21 : vector<1x2xf32> to vector<8x2xf32>
    %23 = arith.subf %19, %22 : vector<8x2xf32>
    %24 = math.exp %23 : vector<8x2xf32>
    %cst_14 = arith.constant dense<0.000000e+00> : vector<2xf32>
    %25 = vector.multi_reduction <add>, %24, %cst_14 [0] : vector<8x2xf32> to vector<2xf32>
    %26 = vector.shape_cast %25 : vector<2xf32> to vector<1x2xf32>
    %27 = vector.broadcast %26 : vector<1x2xf32> to vector<8x2xf32>
    %28 = arith.divf %24, %27 : vector<8x2xf32>
    %c0_15 = arith.constant 0 : index
    %c0_16 = arith.constant 0 : index
    %c0_17 = arith.constant 0 : index
    %29 = vector.load %arg1[%c0_15, %c0_16, %c0_17] : memref<2x8x512xf32, #tpu.memory_space<vmem>>, vector<1x8x512xf32>
    %30 = vector.shape_cast %29 : vector<1x8x512xf32> to vector<8x512xf32>
    %31 = vector.extract_strided_slice %28 {offsets = [0, 0], sizes = [8, 1], strides = [1, 1]} : vector<8x2xf32> to vector<8x1xf32>
    %32 = vector.broadcast %31 : vector<8x1xf32> to vector<8x512xf32>
    %33 = arith.mulf %32, %30 : vector<8x512xf32>
    %cst_18 = arith.constant dense<0xFF800000> : vector<512xf32>
    %34 = vector.multi_reduction <maximumf>, %33, %cst_18 [0] : vector<8x512xf32> to vector<512xf32>
    %35 = vector.shape_cast %34 : vector<512xf32> to vector<1x512xf32>
    %cst_19 = arith.constant dense<0.000000e+00> : vector<1x512xf32>
    %36 = tpu.matmul %31, %30, %cst_19 {dimension_numbers = #tpu.dot_dimension_numbers<[0], [0], [1], [1], [0, 1, 1, 1], [], []>} : vector<8x1xf32>, vector<8x512xf32>, vector<1x512xf32> -> vector<1x512xf32>
    %cst_20 = arith.constant 1.250000e-01 : f32
    %37 = vector.broadcast %cst_20 : f32 to vector<1x512xf32>
    %38 = arith.mulf %36, %37 : vector<1x512xf32>
    %c1_21 = arith.constant 1 : index
    %c0_22 = arith.constant 0 : index
    %c0_23 = arith.constant 0 : index
    %39 = vector.load %arg1[%c1_21, %c0_22, %c0_23] : memref<2x8x512xf32, #tpu.memory_space<vmem>>, vector<1x8x512xf32>
    %40 = vector.shape_cast %39 : vector<1x8x512xf32> to vector<8x512xf32>
    %41 = vector.extract_strided_slice %28 {offsets = [0, 1], sizes = [8, 1], strides = [1, 1]} : vector<8x2xf32> to vector<8x1xf32>
    %42 = vector.broadcast %41 : vector<8x1xf32> to vector<8x512xf32>
    %43 = arith.mulf %42, %40 : vector<8x512xf32>
    %cst_24 = arith.constant dense<0xFF800000> : vector<512xf32>
    %44 = vector.multi_reduction <maximumf>, %43, %cst_24 [0] : vector<8x512xf32> to vector<512xf32>
    %45 = vector.shape_cast %44 : vector<512xf32> to vector<1x512xf32>
    %cst_25 = arith.constant dense<0.000000e+00> : vector<1x512xf32>
    %46 = tpu.matmul %41, %40, %cst_25 {dimension_numbers = #tpu.dot_dimension_numbers<[0], [0], [1], [1], [0, 1, 1, 1], [], []>} : vector<8x1xf32>, vector<8x512xf32>, vector<1x512xf32> -> vector<1x512xf32>
    %cst_26 = arith.constant 1.250000e-01 : f32
    %47 = vector.broadcast %cst_26 : f32 to vector<1x512xf32>
    %48 = arith.mulf %46, %47 : vector<1x512xf32>
    %49 = tpu.concatenate %35, %45 in 0 : vector<1x512xf32>, vector<1x512xf32> -> vector<2x512xf32>
    %50 = tpu.concatenate %38, %48 in 0 : vector<1x512xf32>, vector<1x512xf32> -> vector<2x512xf32>
    %cst_27 = arith.constant 0.000000e+00 : f32
    %51 = vector.broadcast %cst_27 : f32 to vector<2x512xf32>
    %cst_28 = arith.constant 0.000000e+00 : f32
    %52 = vector.broadcast %cst_28 : f32 to vector<2x512xf32>
    %cst_29 = arith.constant 0.000000e+00 : f32
    %53 = vector.broadcast %cst_29 : f32 to vector<2x512xf32>
    %c0_30 = arith.constant 0 : index
    %c0_31 = arith.constant 0 : index
    %54 = vector.load %arg3[%c0_30, %c0_31] : memref<54x512xf32, #tpu.memory_space<vmem>>, vector<1x512xf32>
    %c27 = arith.constant 27 : index
    %c0_32 = arith.constant 0 : index
    %55 = vector.load %arg3[%c27, %c0_32] : memref<54x512xf32, #tpu.memory_space<vmem>>, vector<1x512xf32>
    %56 = vector.broadcast %54 : vector<1x512xf32> to vector<2x512xf32>
    %57 = arith.mulf %56, %49 : vector<2x512xf32>
    %58 = vector.broadcast %55 : vector<1x512xf32> to vector<2x512xf32>
    %59 = arith.mulf %58, %50 : vector<2x512xf32>
    %60 = arith.addf %57, %59 : vector<2x512xf32>
    %c73_i32 = arith.constant 73 : i32
    %61 = tpu.dynamic_rotate %60 by %c73_i32 dim 1 : vector<2x512xf32>, i32 -> vector<2x512xf32>
    %62 = arith.addf %51, %61 : vector<2x512xf32>
    %c1_33 = arith.constant 1 : index
    %c0_34 = arith.constant 0 : index
    %63 = vector.load %arg3[%c1_33, %c0_34] : memref<54x512xf32, #tpu.memory_space<vmem>>, vector<1x512xf32>
    %c28 = arith.constant 28 : index
    %c0_35 = arith.constant 0 : index
    %64 = vector.load %arg3[%c28, %c0_35] : memref<54x512xf32, #tpu.memory_space<vmem>>, vector<1x512xf32>
    %65 = vector.broadcast %63 : vector<1x512xf32> to vector<2x512xf32>
    %66 = arith.mulf %65, %49 : vector<2x512xf32>
    %67 = vector.broadcast %64 : vector<1x512xf32> to vector<2x512xf32>
    %68 = arith.mulf %67, %50 : vector<2x512xf32>
    %69 = arith.addf %66, %68 : vector<2x512xf32>
    %c72_i32 = arith.constant 72 : i32
    %70 = tpu.dynamic_rotate %69 by %c72_i32 dim 1 : vector<2x512xf32>, i32 -> vector<2x512xf32>
    %71 = arith.addf %52, %70 : vector<2x512xf32>
    %c2 = arith.constant 2 : index
    %c0_36 = arith.constant 0 : index
    %72 = vector.load %arg3[%c2, %c0_36] : memref<54x512xf32, #tpu.memory_space<vmem>>, vector<1x512xf32>
    %c29 = arith.constant 29 : index
    %c0_37 = arith.constant 0 : index
    %73 = vector.load %arg3[%c29, %c0_37] : memref<54x512xf32, #tpu.memory_space<vmem>>, vector<1x512xf32>
    %74 = vector.broadcast %72 : vector<1x512xf32> to vector<2x512xf32>
    %75 = arith.mulf %74, %49 : vector<2x512xf32>
    %76 = vector.broadcast %73 : vector<1x512xf32> to vector<2x512xf32>
    %77 = arith.mulf %76, %50 : vector<2x512xf32>
    %78 = arith.addf %75, %77 : vector<2x512xf32>
    %c71_i32 = arith.constant 71 : i32
    %79 = tpu.dynamic_rotate %78 by %c71_i32 dim 1 : vector<2x512xf32>, i32 -> vector<2x512xf32>
    %80 = arith.addf %53, %79 : vector<2x512xf32>
    %c3 = arith.constant 3 : index
    %c0_38 = arith.constant 0 : index
    %81 = vector.load %arg3[%c3, %c0_38] : memref<54x512xf32, #tpu.memory_space<vmem>>, vector<1x512xf32>
    %c30 = arith.constant 30 : index
    %c0_39 = arith.constant 0 : index
    %82 = vector.load %arg3[%c30, %c0_39] : memref<54x512xf32, #tpu.memory_space<vmem>>, vector<1x512xf32>
    %83 = vector.broadcast %81 : vector<1x512xf32> to vector<2x512xf32>
    %84 = arith.mulf %83, %49 : vector<2x512xf32>
    %85 = vector.broadcast %82 : vector<1x512xf32> to vector<2x512xf32>
    %86 = arith.mulf %85, %50 : vector<2x512xf32>
    %87 = arith.addf %84, %86 : vector<2x512xf32>
    %c65_i32 = arith.constant 65 : i32
    %88 = tpu.dynamic_rotate %87 by %c65_i32 dim 1 : vector<2x512xf32>, i32 -> vector<2x512xf32>
    %89 = arith.addf %62, %88 : vector<2x512xf32>
    %c4 = arith.constant 4 : index
    %c0_40 = arith.constant 0 : index
    %90 = vector.load %arg3[%c4, %c0_40] : memref<54x512xf32, #tpu.memory_space<vmem>>, vector<1x512xf32>
    %c31 = arith.constant 31 : index
    %c0_41 = arith.constant 0 : index
    %91 = vector.load %arg3[%c31, %c0_41] : memref<54x512xf32, #tpu.memory_space<vmem>>, vector<1x512xf32>
    %92 = vector.broadcast %90 : vector<1x512xf32> to vector<2x512xf32>
    %93 = arith.mulf %92, %49 : vector<2x512xf32>
    %94 = vector.broadcast %91 : vector<1x512xf32> to vector<2x512xf32>
    %95 = arith.mulf %94, %50 : vector<2x512xf32>
    %96 = arith.addf %93, %95 : vector<2x512xf32>
    %c64_i32 = arith.constant 64 : i32
    %97 = tpu.dynamic_rotate %96 by %c64_i32 dim 1 : vector<2x512xf32>, i32 -> vector<2x512xf32>
    %98 = arith.addf %71, %97 : vector<2x512xf32>
    %c5 = arith.constant 5 : index
    %c0_42 = arith.constant 0 : index
    %99 = vector.load %arg3[%c5, %c0_42] : memref<54x512xf32, #tpu.memory_space<vmem>>, vector<1x512xf32>
    %c32 = arith.constant 32 : index
    %c0_43 = arith.constant 0 : index
    %100 = vector.load %arg3[%c32, %c0_43] : memref<54x512xf32, #tpu.memory_space<vmem>>, vector<1x512xf32>
    %101 = vector.broadcast %99 : vector<1x512xf32> to vector<2x512xf32>
    %102 = arith.mulf %101, %49 : vector<2x512xf32>
    %103 = vector.broadcast %100 : vector<1x512xf32> to vector<2x512xf32>
    %104 = arith.mulf %103, %50 : vector<2x512xf32>
    %105 = arith.addf %102, %104 : vector<2x512xf32>
    %c63_i32 = arith.constant 63 : i32
    %106 = tpu.dynamic_rotate %105 by %c63_i32 dim 1 : vector<2x512xf32>, i32 -> vector<2x512xf32>
    %107 = arith.addf %80, %106 : vector<2x512xf32>
    %c6 = arith.constant 6 : index
    %c0_44 = arith.constant 0 : index
    %108 = vector.load %arg3[%c6, %c0_44] : memref<54x512xf32, #tpu.memory_space<vmem>>, vector<1x512xf32>
    %c33 = arith.constant 33 : index
    %c0_45 = arith.constant 0 : index
    %109 = vector.load %arg3[%c33, %c0_45] : memref<54x512xf32, #tpu.memory_space<vmem>>, vector<1x512xf32>
    %110 = vector.broadcast %108 : vector<1x512xf32> to vector<2x512xf32>
    %111 = arith.mulf %110, %49 : vector<2x512xf32>
    %112 = vector.broadcast %109 : vector<1x512xf32> to vector<2x512xf32>
    %113 = arith.mulf %112, %50 : vector<2x512xf32>
    %114 = arith.addf %111, %113 : vector<2x512xf32>
    %c57_i32 = arith.constant 57 : i32
    %115 = tpu.dynamic_rotate %114 by %c57_i32 dim 1 : vector<2x512xf32>, i32 -> vector<2x512xf32>
    %116 = arith.addf %89, %115 : vector<2x512xf32>
    %c7 = arith.constant 7 : index
    %c0_46 = arith.constant 0 : index
    %117 = vector.load %arg3[%c7, %c0_46] : memref<54x512xf32, #tpu.memory_space<vmem>>, vector<1x512xf32>
    %c34 = arith.constant 34 : index
    %c0_47 = arith.constant 0 : index
    %118 = vector.load %arg3[%c34, %c0_47] : memref<54x512xf32, #tpu.memory_space<vmem>>, vector<1x512xf32>
    %119 = vector.broadcast %117 : vector<1x512xf32> to vector<2x512xf32>
    %120 = arith.mulf %119, %49 : vector<2x512xf32>
    %121 = vector.broadcast %118 : vector<1x512xf32> to vector<2x512xf32>
    %122 = arith.mulf %121, %50 : vector<2x512xf32>
    %123 = arith.addf %120, %122 : vector<2x512xf32>
    %c56_i32 = arith.constant 56 : i32
    %124 = tpu.dynamic_rotate %123 by %c56_i32 dim 1 : vector<2x512xf32>, i32 -> vector<2x512xf32>
    %125 = arith.addf %98, %124 : vector<2x512xf32>
    %c8 = arith.constant 8 : index
    %c0_48 = arith.constant 0 : index
    %126 = vector.load %arg3[%c8, %c0_48] : memref<54x512xf32, #tpu.memory_space<vmem>>, vector<1x512xf32>
    %c35 = arith.constant 35 : index
    %c0_49 = arith.constant 0 : index
    %127 = vector.load %arg3[%c35, %c0_49] : memref<54x512xf32, #tpu.memory_space<vmem>>, vector<1x512xf32>
    %128 = vector.broadcast %126 : vector<1x512xf32> to vector<2x512xf32>
    %129 = arith.mulf %128, %49 : vector<2x512xf32>
    %130 = vector.broadcast %127 : vector<1x512xf32> to vector<2x512xf32>
    %131 = arith.mulf %130, %50 : vector<2x512xf32>
    %132 = arith.addf %129, %131 : vector<2x512xf32>
    %c55_i32 = arith.constant 55 : i32
    %133 = tpu.dynamic_rotate %132 by %c55_i32 dim 1 : vector<2x512xf32>, i32 -> vector<2x512xf32>
    %134 = arith.addf %107, %133 : vector<2x512xf32>
    %c9 = arith.constant 9 : index
    %c0_50 = arith.constant 0 : index
    %135 = vector.load %arg3[%c9, %c0_50] : memref<54x512xf32, #tpu.memory_space<vmem>>, vector<1x512xf32>
    %c36 = arith.constant 36 : index
    %c0_51 = arith.constant 0 : index
    %136 = vector.load %arg3[%c36, %c0_51] : memref<54x512xf32, #tpu.memory_space<vmem>>, vector<1x512xf32>
    %137 = vector.broadcast %135 : vector<1x512xf32> to vector<2x512xf32>
    %138 = arith.mulf %137, %49 : vector<2x512xf32>
    %139 = vector.broadcast %136 : vector<1x512xf32> to vector<2x512xf32>
    %140 = arith.mulf %139, %50 : vector<2x512xf32>
    %141 = arith.addf %138, %140 : vector<2x512xf32>
    %c9_i32 = arith.constant 9 : i32
    %142 = tpu.dynamic_rotate %141 by %c9_i32 dim 1 : vector<2x512xf32>, i32 -> vector<2x512xf32>
    %143 = arith.addf %116, %142 : vector<2x512xf32>
    %c10 = arith.constant 10 : index
    %c0_52 = arith.constant 0 : index
    %144 = vector.load %arg3[%c10, %c0_52] : memref<54x512xf32, #tpu.memory_space<vmem>>, vector<1x512xf32>
    %c37 = arith.constant 37 : index
    %c0_53 = arith.constant 0 : index
    %145 = vector.load %arg3[%c37, %c0_53] : memref<54x512xf32, #tpu.memory_space<vmem>>, vector<1x512xf32>
    %146 = vector.broadcast %144 : vector<1x512xf32> to vector<2x512xf32>
    %147 = arith.mulf %146, %49 : vector<2x512xf32>
    %148 = vector.broadcast %145 : vector<1x512xf32> to vector<2x512xf32>
    %149 = arith.mulf %148, %50 : vector<2x512xf32>
    %150 = arith.addf %147, %149 : vector<2x512xf32>
    %c8_i32 = arith.constant 8 : i32
    %151 = tpu.dynamic_rotate %150 by %c8_i32 dim 1 : vector<2x512xf32>, i32 -> vector<2x512xf32>
    %152 = arith.addf %125, %151 : vector<2x512xf32>
    %c11 = arith.constant 11 : index
    %c0_54 = arith.constant 0 : index
    %153 = vector.load %arg3[%c11, %c0_54] : memref<54x512xf32, #tpu.memory_space<vmem>>, vector<1x512xf32>
    %c38 = arith.constant 38 : index
    %c0_55 = arith.constant 0 : index
    %154 = vector.load %arg3[%c38, %c0_55] : memref<54x512xf32, #tpu.memory_space<vmem>>, vector<1x512xf32>
    %155 = vector.broadcast %153 : vector<1x512xf32> to vector<2x512xf32>
    %156 = arith.mulf %155, %49 : vector<2x512xf32>
    %157 = vector.broadcast %154 : vector<1x512xf32> to vector<2x512xf32>
    %158 = arith.mulf %157, %50 : vector<2x512xf32>
    %159 = arith.addf %156, %158 : vector<2x512xf32>
    %c7_i32 = arith.constant 7 : i32
    %160 = tpu.dynamic_rotate %159 by %c7_i32 dim 1 : vector<2x512xf32>, i32 -> vector<2x512xf32>
    %161 = arith.addf %134, %160 : vector<2x512xf32>
    %c12 = arith.constant 12 : index
    %c0_56 = arith.constant 0 : index
    %162 = vector.load %arg3[%c12, %c0_56] : memref<54x512xf32, #tpu.memory_space<vmem>>, vector<1x512xf32>
    %c39 = arith.constant 39 : index
    %c0_57 = arith.constant 0 : index
    %163 = vector.load %arg3[%c39, %c0_57] : memref<54x512xf32, #tpu.memory_space<vmem>>, vector<1x512xf32>
    %164 = vector.broadcast %162 : vector<1x512xf32> to vector<2x512xf32>
    %165 = arith.mulf %164, %49 : vector<2x512xf32>
    %166 = vector.broadcast %163 : vector<1x512xf32> to vector<2x512xf32>
    %167 = arith.mulf %166, %50 : vector<2x512xf32>
    %168 = arith.addf %165, %167 : vector<2x512xf32>
    %c1_i32 = arith.constant 1 : i32
    %169 = tpu.dynamic_rotate %168 by %c1_i32 dim 1 : vector<2x512xf32>, i32 -> vector<2x512xf32>
    %170 = arith.addf %143, %169 : vector<2x512xf32>
    %c13 = arith.constant 13 : index
    %c0_58 = arith.constant 0 : index
    %171 = vector.load %arg3[%c13, %c0_58] : memref<54x512xf32, #tpu.memory_space<vmem>>, vector<1x512xf32>
    %c40 = arith.constant 40 : index
    %c0_59 = arith.constant 0 : index
    %172 = vector.load %arg3[%c40, %c0_59] : memref<54x512xf32, #tpu.memory_space<vmem>>, vector<1x512xf32>
    %173 = vector.broadcast %171 : vector<1x512xf32> to vector<2x512xf32>
    %174 = arith.mulf %173, %49 : vector<2x512xf32>
    %175 = vector.broadcast %172 : vector<1x512xf32> to vector<2x512xf32>
    %176 = arith.mulf %175, %50 : vector<2x512xf32>
    %177 = arith.addf %174, %176 : vector<2x512xf32>
    %178 = arith.addf %152, %177 : vector<2x512xf32>
    %c14 = arith.constant 14 : index
    %c0_60 = arith.constant 0 : index
    %179 = vector.load %arg3[%c14, %c0_60] : memref<54x512xf32, #tpu.memory_space<vmem>>, vector<1x512xf32>
    %c41 = arith.constant 41 : index
    %c0_61 = arith.constant 0 : index
    %180 = vector.load %arg3[%c41, %c0_61] : memref<54x512xf32, #tpu.memory_space<vmem>>, vector<1x512xf32>
    %181 = vector.broadcast %179 : vector<1x512xf32> to vector<2x512xf32>
    %182 = arith.mulf %181, %49 : vector<2x512xf32>
    %183 = vector.broadcast %180 : vector<1x512xf32> to vector<2x512xf32>
    %184 = arith.mulf %183, %50 : vector<2x512xf32>
    %185 = arith.addf %182, %184 : vector<2x512xf32>
    %c511_i32 = arith.constant 511 : i32
    %186 = tpu.dynamic_rotate %185 by %c511_i32 dim 1 : vector<2x512xf32>, i32 -> vector<2x512xf32>
    %187 = arith.addf %161, %186 : vector<2x512xf32>
    %c15 = arith.constant 15 : index
    %c0_62 = arith.constant 0 : index
    %188 = vector.load %arg3[%c15, %c0_62] : memref<54x512xf32, #tpu.memory_space<vmem>>, vector<1x512xf32>
    %c42 = arith.constant 42 : index
    %c0_63 = arith.constant 0 : index
    %189 = vector.load %arg3[%c42, %c0_63] : memref<54x512xf32, #tpu.memory_space<vmem>>, vector<1x512xf32>
    %190 = vector.broadcast %188 : vector<1x512xf32> to vector<2x512xf32>
    %191 = arith.mulf %190, %49 : vector<2x512xf32>
    %192 = vector.broadcast %189 : vector<1x512xf32> to vector<2x512xf32>
    %193 = arith.mulf %192, %50 : vector<2x512xf32>
    %194 = arith.addf %191, %193 : vector<2x512xf32>
    %c505_i32 = arith.constant 505 : i32
    %195 = tpu.dynamic_rotate %194 by %c505_i32 dim 1 : vector<2x512xf32>, i32 -> vector<2x512xf32>
    %196 = arith.addf %170, %195 : vector<2x512xf32>
    %c16 = arith.constant 16 : index
    %c0_64 = arith.constant 0 : index
    %197 = vector.load %arg3[%c16, %c0_64] : memref<54x512xf32, #tpu.memory_space<vmem>>, vector<1x512xf32>
    %c43 = arith.constant 43 : index
    %c0_65 = arith.constant 0 : index
    %198 = vector.load %arg3[%c43, %c0_65] : memref<54x512xf32, #tpu.memory_space<vmem>>, vector<1x512xf32>
    %199 = vector.broadcast %197 : vector<1x512xf32> to vector<2x512xf32>
    %200 = arith.mulf %199, %49 : vector<2x512xf32>
    %201 = vector.broadcast %198 : vector<1x512xf32> to vector<2x512xf32>
    %202 = arith.mulf %201, %50 : vector<2x512xf32>
    %203 = arith.addf %200, %202 : vector<2x512xf32>
    %c504_i32 = arith.constant 504 : i32
    %204 = tpu.dynamic_rotate %203 by %c504_i32 dim 1 : vector<2x512xf32>, i32 -> vector<2x512xf32>
    %205 = arith.addf %178, %204 : vector<2x512xf32>
    %c17 = arith.constant 17 : index
    %c0_66 = arith.constant 0 : index
    %206 = vector.load %arg3[%c17, %c0_66] : memref<54x512xf32, #tpu.memory_space<vmem>>, vector<1x512xf32>
    %c44 = arith.constant 44 : index
    %c0_67 = arith.constant 0 : index
    %207 = vector.load %arg3[%c44, %c0_67] : memref<54x512xf32, #tpu.memory_space<vmem>>, vector<1x512xf32>
    %208 = vector.broadcast %206 : vector<1x512xf32> to vector<2x512xf32>
    %209 = arith.mulf %208, %49 : vector<2x512xf32>
    %210 = vector.broadcast %207 : vector<1x512xf32> to vector<2x512xf32>
    %211 = arith.mulf %210, %50 : vector<2x512xf32>
    %212 = arith.addf %209, %211 : vector<2x512xf32>
    %c503_i32 = arith.constant 503 : i32
    %213 = tpu.dynamic_rotate %212 by %c503_i32 dim 1 : vector<2x512xf32>, i32 -> vector<2x512xf32>
    %214 = arith.addf %187, %213 : vector<2x512xf32>
    %c18 = arith.constant 18 : index
    %c0_68 = arith.constant 0 : index
    %215 = vector.load %arg3[%c18, %c0_68] : memref<54x512xf32, #tpu.memory_space<vmem>>, vector<1x512xf32>
    %c45 = arith.constant 45 : index
    %c0_69 = arith.constant 0 : index
    %216 = vector.load %arg3[%c45, %c0_69] : memref<54x512xf32, #tpu.memory_space<vmem>>, vector<1x512xf32>
    %217 = vector.broadcast %215 : vector<1x512xf32> to vector<2x512xf32>
    %218 = arith.mulf %217, %49 : vector<2x512xf32>
    %219 = vector.broadcast %216 : vector<1x512xf32> to vector<2x512xf32>
    %220 = arith.mulf %219, %50 : vector<2x512xf32>
    %221 = arith.addf %218, %220 : vector<2x512xf32>
    %c457_i32 = arith.constant 457 : i32
    %222 = tpu.dynamic_rotate %221 by %c457_i32 dim 1 : vector<2x512xf32>, i32 -> vector<2x512xf32>
    %223 = arith.addf %196, %222 : vector<2x512xf32>
    %c19 = arith.constant 19 : index
    %c0_70 = arith.constant 0 : index
    %224 = vector.load %arg3[%c19, %c0_70] : memref<54x512xf32, #tpu.memory_space<vmem>>, vector<1x512xf32>
    %c46 = arith.constant 46 : index
    %c0_71 = arith.constant 0 : index
    %225 = vector.load %arg3[%c46, %c0_71] : memref<54x512xf32, #tpu.memory_space<vmem>>, vector<1x512xf32>
    %226 = vector.broadcast %224 : vector<1x512xf32> to vector<2x512xf32>
    %227 = arith.mulf %226, %49 : vector<2x512xf32>
    %228 = vector.broadcast %225 : vector<1x512xf32> to vector<2x512xf32>
    %229 = arith.mulf %228, %50 : vector<2x512xf32>
    %230 = arith.addf %227, %229 : vector<2x512xf32>
    %c456_i32 = arith.constant 456 : i32
    %231 = tpu.dynamic_rotate %230 by %c456_i32 dim 1 : vector<2x512xf32>, i32 -> vector<2x512xf32>
    %232 = arith.addf %205, %231 : vector<2x512xf32>
    %c20 = arith.constant 20 : index
    %c0_72 = arith.constant 0 : index
    %233 = vector.load %arg3[%c20, %c0_72] : memref<54x512xf32, #tpu.memory_space<vmem>>, vector<1x512xf32>
    %c47 = arith.constant 47 : index
    %c0_73 = arith.constant 0 : index
    %234 = vector.load %arg3[%c47, %c0_73] : memref<54x512xf32, #tpu.memory_space<vmem>>, vector<1x512xf32>
    %235 = vector.broadcast %233 : vector<1x512xf32> to vector<2x512xf32>
    %236 = arith.mulf %235, %49 : vector<2x512xf32>
    %237 = vector.broadcast %234 : vector<1x512xf32> to vector<2x512xf32>
    %238 = arith.mulf %237, %50 : vector<2x512xf32>
    %239 = arith.addf %236, %238 : vector<2x512xf32>
    %c455_i32 = arith.constant 455 : i32
    %240 = tpu.dynamic_rotate %239 by %c455_i32 dim 1 : vector<2x512xf32>, i32 -> vector<2x512xf32>
    %241 = arith.addf %214, %240 : vector<2x512xf32>
    %c21 = arith.constant 21 : index
    %c0_74 = arith.constant 0 : index
    %242 = vector.load %arg3[%c21, %c0_74] : memref<54x512xf32, #tpu.memory_space<vmem>>, vector<1x512xf32>
    %c48 = arith.constant 48 : index
    %c0_75 = arith.constant 0 : index
    %243 = vector.load %arg3[%c48, %c0_75] : memref<54x512xf32, #tpu.memory_space<vmem>>, vector<1x512xf32>
    %244 = vector.broadcast %242 : vector<1x512xf32> to vector<2x512xf32>
    %245 = arith.mulf %244, %49 : vector<2x512xf32>
    %246 = vector.broadcast %243 : vector<1x512xf32> to vector<2x512xf32>
    %247 = arith.mulf %246, %50 : vector<2x512xf32>
    %248 = arith.addf %245, %247 : vector<2x512xf32>
    %c449_i32 = arith.constant 449 : i32
    %249 = tpu.dynamic_rotate %248 by %c449_i32 dim 1 : vector<2x512xf32>, i32 -> vector<2x512xf32>
    %250 = arith.addf %223, %249 : vector<2x512xf32>
    %c22 = arith.constant 22 : index
    %c0_76 = arith.constant 0 : index
    %251 = vector.load %arg3[%c22, %c0_76] : memref<54x512xf32, #tpu.memory_space<vmem>>, vector<1x512xf32>
    %c49 = arith.constant 49 : index
    %c0_77 = arith.constant 0 : index
    %252 = vector.load %arg3[%c49, %c0_77] : memref<54x512xf32, #tpu.memory_space<vmem>>, vector<1x512xf32>
    %253 = vector.broadcast %251 : vector<1x512xf32> to vector<2x512xf32>
    %254 = arith.mulf %253, %49 : vector<2x512xf32>
    %255 = vector.broadcast %252 : vector<1x512xf32> to vector<2x512xf32>
    %256 = arith.mulf %255, %50 : vector<2x512xf32>
    %257 = arith.addf %254, %256 : vector<2x512xf32>
    %c448_i32 = arith.constant 448 : i32
    %258 = tpu.dynamic_rotate %257 by %c448_i32 dim 1 : vector<2x512xf32>, i32 -> vector<2x512xf32>
    %259 = arith.addf %232, %258 : vector<2x512xf32>
    %c23 = arith.constant 23 : index
    %c0_78 = arith.constant 0 : index
    %260 = vector.load %arg3[%c23, %c0_78] : memref<54x512xf32, #tpu.memory_space<vmem>>, vector<1x512xf32>
    %c50 = arith.constant 50 : index
    %c0_79 = arith.constant 0 : index
    %261 = vector.load %arg3[%c50, %c0_79] : memref<54x512xf32, #tpu.memory_space<vmem>>, vector<1x512xf32>
    %262 = vector.broadcast %260 : vector<1x512xf32> to vector<2x512xf32>
    %263 = arith.mulf %262, %49 : vector<2x512xf32>
    %264 = vector.broadcast %261 : vector<1x512xf32> to vector<2x512xf32>
    %265 = arith.mulf %264, %50 : vector<2x512xf32>
    %266 = arith.addf %263, %265 : vector<2x512xf32>
    %c447_i32 = arith.constant 447 : i32
    %267 = tpu.dynamic_rotate %266 by %c447_i32 dim 1 : vector<2x512xf32>, i32 -> vector<2x512xf32>
    %268 = arith.addf %241, %267 : vector<2x512xf32>
    %c24 = arith.constant 24 : index
    %c0_80 = arith.constant 0 : index
    %269 = vector.load %arg3[%c24, %c0_80] : memref<54x512xf32, #tpu.memory_space<vmem>>, vector<1x512xf32>
    %c51 = arith.constant 51 : index
    %c0_81 = arith.constant 0 : index
    %270 = vector.load %arg3[%c51, %c0_81] : memref<54x512xf32, #tpu.memory_space<vmem>>, vector<1x512xf32>
    %271 = vector.broadcast %269 : vector<1x512xf32> to vector<2x512xf32>
    %272 = arith.mulf %271, %49 : vector<2x512xf32>
    %273 = vector.broadcast %270 : vector<1x512xf32> to vector<2x512xf32>
    %274 = arith.mulf %273, %50 : vector<2x512xf32>
    %275 = arith.addf %272, %274 : vector<2x512xf32>
    %c441_i32 = arith.constant 441 : i32
    %276 = tpu.dynamic_rotate %275 by %c441_i32 dim 1 : vector<2x512xf32>, i32 -> vector<2x512xf32>
    %277 = arith.addf %250, %276 : vector<2x512xf32>
    %c25 = arith.constant 25 : index
    %c0_82 = arith.constant 0 : index
    %278 = vector.load %arg3[%c25, %c0_82] : memref<54x512xf32, #tpu.memory_space<vmem>>, vector<1x512xf32>
    %c52 = arith.constant 52 : index
    %c0_83 = arith.constant 0 : index
    %279 = vector.load %arg3[%c52, %c0_83] : memref<54x512xf32, #tpu.memory_space<vmem>>, vector<1x512xf32>
    %280 = vector.broadcast %278 : vector<1x512xf32> to vector<2x512xf32>
    %281 = arith.mulf %280, %49 : vector<2x512xf32>
    %282 = vector.broadcast %279 : vector<1x512xf32> to vector<2x512xf32>
    %283 = arith.mulf %282, %50 : vector<2x512xf32>
    %284 = arith.addf %281, %283 : vector<2x512xf32>
    %c440_i32 = arith.constant 440 : i32
    %285 = tpu.dynamic_rotate %284 by %c440_i32 dim 1 : vector<2x512xf32>, i32 -> vector<2x512xf32>
    %286 = arith.addf %259, %285 : vector<2x512xf32>
    %c26 = arith.constant 26 : index
    %c0_84 = arith.constant 0 : index
    %287 = vector.load %arg3[%c26, %c0_84] : memref<54x512xf32, #tpu.memory_space<vmem>>, vector<1x512xf32>
    %c53 = arith.constant 53 : index
    %c0_85 = arith.constant 0 : index
    %288 = vector.load %arg3[%c53, %c0_85] : memref<54x512xf32, #tpu.memory_space<vmem>>, vector<1x512xf32>
    %289 = vector.broadcast %287 : vector<1x512xf32> to vector<2x512xf32>
    %290 = arith.mulf %289, %49 : vector<2x512xf32>
    %291 = vector.broadcast %288 : vector<1x512xf32> to vector<2x512xf32>
    %292 = arith.mulf %291, %50 : vector<2x512xf32>
    %293 = arith.addf %290, %292 : vector<2x512xf32>
    %c439_i32 = arith.constant 439 : i32
    %294 = tpu.dynamic_rotate %293 by %c439_i32 dim 1 : vector<2x512xf32>, i32 -> vector<2x512xf32>
    %295 = arith.addf %268, %294 : vector<2x512xf32>
    %296 = arith.addf %277, %286 : vector<2x512xf32>
    %297 = arith.addf %296, %295 : vector<2x512xf32>
    %cst_86 = arith.constant 0.000000e+00 : f32
    %298 = vector.broadcast %cst_86 : f32 to vector<2x512xf32>
    %299 = arith.subf %298, %297 : vector<2x512xf32>
    %300 = math.exp %299 : vector<2x512xf32>
    %cst_87 = arith.constant 1.000000e+00 : f32
    %301 = vector.broadcast %cst_87 : f32 to vector<2x512xf32>
    %302 = arith.addf %301, %300 : vector<2x512xf32>
    %303 = tpu.reciprocal %302 {approx = true} : vector<2x512xf32> -> vector<2x512xf32>
    %cst_88 = arith.constant 1.000000e+00 : f32
    %304 = vector.broadcast %cst_88 : f32 to vector<2x512xf32>
    %305 = arith.addf %303, %304 : vector<2x512xf32>
    %c0_89 = arith.constant 0 : index
    %c0_90 = arith.constant 0 : index
    %c0_91 = arith.constant 0 : index
    %306 = vector.load %arg1[%c0_89, %c0_90, %c0_91] : memref<2x8x512xf32, #tpu.memory_space<vmem>>, vector<1x8x512xf32>
    %307 = vector.shape_cast %306 : vector<1x8x512xf32> to vector<8x512xf32>
    %308 = vector.extract_strided_slice %305 {offsets = [0, 0], sizes = [1, 512], strides = [1, 1]} : vector<2x512xf32> to vector<1x512xf32>
    %309 = vector.broadcast %308 : vector<1x512xf32> to vector<8x512xf32>
    %310 = arith.mulf %309, %307 : vector<8x512xf32>
    %c0_92 = arith.constant 0 : index
    %c0_93 = arith.constant 0 : index
    %c0_94 = arith.constant 0 : index
    %311 = vector.load %arg4[%c0_92, %c0_93, %c0_94] : memref<2x8x512xf32, #tpu.memory_space<vmem>>, vector<1x8x512xf32>
    %312 = vector.shape_cast %311 : vector<1x8x512xf32> to vector<8x512xf32>
    %313 = vector.shape_cast %310 : vector<8x512xf32> to vector<1x8x512xf32>
    tpu.vector_store %arg4[%c0_92, %c0_93, %c0_94], %313 {strides = array<i32>} : memref<2x8x512xf32, #tpu.memory_space<vmem>>, vector<1x8x512xf32>,
    %c1_95 = arith.constant 1 : index
    %c0_96 = arith.constant 0 : index
    %c0_97 = arith.constant 0 : index
    %314 = vector.load %arg1[%c1_95, %c0_96, %c0_97] : memref<2x8x512xf32, #tpu.memory_space<vmem>>, vector<1x8x512xf32>
    %315 = vector.shape_cast %314 : vector<1x8x512xf32> to vector<8x512xf32>
    %316 = vector.extract_strided_slice %305 {offsets = [1, 0], sizes = [1, 512], strides = [1, 1]} : vector<2x512xf32> to vector<1x512xf32>
    %317 = vector.broadcast %316 : vector<1x512xf32> to vector<8x512xf32>
    %318 = arith.mulf %317, %315 : vector<8x512xf32>
    %c1_98 = arith.constant 1 : index
    %c0_99 = arith.constant 0 : index
    %c0_100 = arith.constant 0 : index
    %319 = vector.load %arg4[%c1_98, %c0_99, %c0_100] : memref<2x8x512xf32, #tpu.memory_space<vmem>>, vector<1x8x512xf32>
    %320 = vector.shape_cast %319 : vector<1x8x512xf32> to vector<8x512xf32>
    %321 = vector.shape_cast %318 : vector<8x512xf32> to vector<1x8x512xf32>
    tpu.vector_store %arg4[%c1_98, %c0_99, %c0_100], %321 {strides = array<i32>} : memref<2x8x512xf32, #tpu.memory_space<vmem>>, vector<1x8x512xf32>,
    return
  }
  func.func @transform_0(%arg0: i32) -> (i32, i32, i32) {
    %c0_i32 = arith.constant 0 : i32
    %c0_i32_0 = arith.constant 0 : i32
    %c0_i32_1 = arith.constant 0 : i32
    return %arg0, %c0_i32, %c0_i32_0 : i32, i32, i32
  }
  func.func @transform_1(%arg0: i32) -> (i32, i32) {
    %c0_i32 = arith.constant 0 : i32
    %c0_i32_0 = arith.constant 0 : i32
    %c0_i32_1 = arith.constant 0 : i32
    return %c0_i32, %c0_i32_0 : i32, i32
  }
  func.func @transform_2(%arg0: i32) -> (i32, i32) {
    %c0_i32 = arith.constant 0 : i32
    %c0_i32_0 = arith.constant 0 : i32
    %c0_i32_1 = arith.constant 0 : i32
    return %c0_i32, %c0_i32_0 : i32, i32
  }
  func.func @transform_3(%arg0: i32) -> (i32, i32, i32) {
    %c0_i32 = arith.constant 0 : i32
    %c0_i32_0 = arith.constant 0 : i32
    %c0_i32_1 = arith.constant 0 : i32
    return %arg0, %c0_i32, %c0_i32_0 : i32, i32, i32
  }
}

</mosaic_0001>

<llo_original>
// kernel: mul.5
$region0: #{mul.5}
  %s0 = inlined_call_operand.vmem [shape: f32[1,2,3,3,3], index: 0, kind: input, shape index: {}]
  %s1 = inlined_call_operand.vmem [shape: f32[54], index: 1, kind: output, shape index: {}]
  $region1: #{mul.5} parent=0
    #allocation0 [shape = 'u8[4096]{0}', space=vmem, size = 0x1000, scoped, tag = 'scoped mem for output reshape']
    #allocation1 [shape = 'u8[24576]{0}', space=vmem, size = 0x6000, scoped, tag = 'scoped mem for input reshape']
    %s3 = sshllo.u32 0, 4
    %s4 = smul.addr 4, 5
    %s5 = scalar_lea.vmem %s0, %s4
    %v6 = vld [vmem:[%s5] sm:%s3]
    %s7 = scalar_lea.vmem [#allocation1], 40
    %8 = vst [vmem:[%s7] sm:%s3] %v6
    %s9 = smul.addr 4, 4
    %s10 = scalar_lea.vmem %s0, %s9
    %v11 = vld [vmem:[%s10] sm:%s3]
    %s12 = scalar_lea.vmem [#allocation1], 32
    %13 = vst [vmem:[%s12] sm:%s3] %v11
    %s14 = smul.addr 4, 3
    %s15 = scalar_lea.vmem %s0, %s14
    %v16 = vld [vmem:[%s15] sm:%s3]
    %s17 = scalar_lea.vmem [#allocation1], 24
    %18 = vst [vmem:[%s17] sm:%s3] %v16
    %s19 = smul.addr 4, 2
    %s20 = scalar_lea.vmem %s0, %s19
    %v21 = vld [vmem:[%s20] sm:%s3]
    %s22 = scalar_lea.vmem [#allocation1], 16
    %23 = vst [vmem:[%s22] sm:%s3] %v21
    %s24 = scalar_lea.vmem %s0, 4
    %v25 = vld [vmem:[%s24] sm:%s3]
    %s26 = scalar_lea.vmem [#allocation1], 8
    %27 = vst [vmem:[%s26] sm:%s3] %v25
    %v28 = vld [vmem:[%s0] sm:%s3]
    %29 = vst [vmem:[#allocation1] sm:%s3] %v28
    %v30 = vld [vmem:[#allocation1] sm:$0x1]
    %vm31 = vcmask 23552
    %32 = vst.msk [vmem:[#allocation0] sm:$0x1] %vm31, %v30
    %s33 = scalar_lea.vmem [#allocation1], 42
    %v34 = vld [vmem:[%s33] sm:$0x1]
    %35 = vrot.lane.b32.xlu0 %v34, 51
    %v36 = vpop.permute.xlu0 %35
    %vm37 = vcmask 441752
    %38 = vst.msk [vmem:[#allocation0] sm:$0x1] %vm37, %v36
    %s39 = scalar_lea.vmem [#allocation1], 41
    %v40 = vld [vmem:[%s39] sm:$0x1]
    %41 = vrot.lane.b32.xlu0 %v40, 48
    %v42 = vpop.permute.xlu0 %41
    %vm43 = vcmask 417152
    %44 = vst.msk [vmem:[#allocation0] sm:$0x1] %vm43, %v42
    %s45 = scalar_lea.vmem [#allocation1], 40
    %v46 = vld [vmem:[%s45] sm:$0x1]
    %47 = vrot.lane.b32.xlu0 %v46, 45
    %v48 = vpop.permute.xlu0 %47
    %vm49 = vcmask 392552
    %50 = vst.msk [vmem:[#allocation0] sm:$0x1] %vm49, %v48
    %s51 = scalar_lea.vmem [#allocation1], 34
    %v52 = vld [vmem:[%s51] sm:$0x1]
    %53 = vrot.lane.b32.xlu0 %v52, 42
    %v54 = vpop.permute.xlu0 %53
    %vm55 = vcmask 367952
    %56 = vst.msk [vmem:[#allocation0] sm:$0x1] %vm55, %v54
    %s57 = scalar_lea.vmem [#allocation1], 33
    %v58 = vld [vmem:[%s57] sm:$0x1]
    %59 = vrot.lane.b32.xlu0 %v58, 39
    %v60 = vpop.permute.xlu0 %59
    %vm61 = vcmask 343352
    %62 = vst.msk [vmem:[#allocation0] sm:$0x1] %vm61, %v60
    %s63 = scalar_lea.vmem [#allocation1], 32
    %v64 = vld [vmem:[%s63] sm:$0x1]
    %65 = vrot.lane.b32.xlu0 %v64, 36
    %v66 = vpop.permute.xlu0 %65
    %vm67 = vcmask 318752
    %68 = vst.msk [vmem:[#allocation0] sm:$0x1] %vm67, %v66
    %s69 = scalar_lea.vmem [#allocation1], 26
    %v70 = vld [vmem:[%s69] sm:$0x1]
    %71 = vrot.lane.b32.xlu0 %v70, 33
    %v72 = vpop.permute.xlu0 %71
    %vm73 = vcmask 294152
    %74 = vst.msk [vmem:[#allocation0] sm:$0x1] %vm73, %v72
    %s75 = scalar_lea.vmem [#allocation1], 25
    %v76 = vld [vmem:[%s75] sm:$0x1]
    %77 = vrot.lane.b32.xlu0 %v76, 30
    %v78 = vpop.permute.xlu0 %77
    %vm79 = vcmask 269552
    %80 = vst.msk [vmem:[#allocation0] sm:$0x1] %vm79, %v78
    %s81 = scalar_lea.vmem [#allocation1], 24
    %v82 = vld [vmem:[%s81] sm:$0x1]
    %83 = vrot.lane.b32.xlu0 %v82, 27
    %v84 = vpop.permute.xlu0 %83
    %vm85 = vcmask 244952
    %86 = vst.msk [vmem:[#allocation0] sm:$0x1] %vm85, %v84
    %s87 = scalar_lea.vmem [#allocation1], 18
    %v88 = vld [vmem:[%s87] sm:$0x1]
    %89 = vrot.lane.b32.xlu0 %v88, 24
    %v90 = vpop.permute.xlu0 %89
    %vm91 = vcmask 220352
    %92 = vst.msk [vmem:[#allocation0] sm:$0x1] %vm91, %v90
    %s93 = scalar_lea.vmem [#allocation1], 17
    %v94 = vld [vmem:[%s93] sm:$0x1]
    %95 = vrot.lane.b32.xlu0 %v94, 21
    %v96 = vpop.permute.xlu0 %95
    %vm97 = vcmask 195752
    %98 = vst.msk [vmem:[#allocation0] sm:$0x1] %vm97, %v96
    %s99 = scalar_lea.vmem [#allocation1], 16
    %v100 = vld [vmem:[%s99] sm:$0x1]
    %101 = vrot.lane.b32.xlu0 %v100, 18
    %v102 = vpop.permute.xlu0 %101
    %vm103 = vcmask 171152
    %104 = vst.msk [vmem:[#allocation0] sm:$0x1] %vm103, %v102
    %s105 = scalar_lea.vmem [#allocation1], 10
    %v106 = vld [vmem:[%s105] sm:$0x1]
    %107 = vrot.lane.b32.xlu0 %v106, 15
    %v108 = vpop.permute.xlu0 %107
    %vm109 = vcmask 146552
    %110 = vst.msk [vmem:[#allocation0] sm:$0x1] %vm109, %v108
    %s111 = scalar_lea.vmem [#allocation1], 9
    %v112 = vld [vmem:[%s111] sm:$0x1]
    %113 = vrot.lane.b32.xlu0 %v112, 12
    %v114 = vpop.permute.xlu0 %113
    %vm115 = vcmask 121952
    %116 = vst.msk [vmem:[#allocation0] sm:$0x1] %vm115, %v114
    %s117 = scalar_lea.vmem [#allocation1], 8
    %v118 = vld [vmem:[%s117] sm:$0x1]
    %119 = vrot.lane.b32.xlu0 %v118, 9
    %v120 = vpop.permute.xlu0 %119
    %vm121 = vcmask 97352
    %122 = vst.msk [vmem:[#allocation0] sm:$0x1] %vm121, %v120
    %s123 = scalar_lea.vmem [#allocation1], 2
    %v124 = vld [vmem:[%s123] sm:$0x1]
    %125 = vrot.lane.b32.xlu0 %v124, 6
    %v126 = vpop.permute.xlu0 %125
    %vm127 = vcmask 72752
    %128 = vst.msk [vmem:[#allocation0] sm:$0x1] %vm127, %v126
    %s129 = scalar_lea.vmem [#allocation1], 1
    %v130 = vld [vmem:[%s129] sm:$0x1]
    %131 = vrot.lane.b32.xlu0 %v130, 3
    %v132 = vpop.permute.xlu0 %131
    %vm133 = vcmask 48152
    %134 = vst.msk [vmem:[#allocation0] sm:$0x1] %vm133, %v132
    %s136 = sshllo.u32 0, 1
    %v138 = vld [vmem:[#allocation0] sm:%s136]
    %s139 = sshllo.u32 0, 1
    %140 = vst [vmem:[%s1] sm:%s139] %v138

// kernel: res_cbam_forward.1
$region0: #{res_cbam_forward.1}
  #allocation0 [shape = 'u32[]', space=smem, size = 0x4, offset = 0x4, fixed_abs, tag = 'smem constant byte address 0x4 - core index']
  #allocation1 [shape = 'u32[144,128]{1,0:T(1,128)}', space=vmem, size = 0x12000, scoped, tag = 'internal scratch']
  %s0 = inlined_call_operand.vmem [shape: f32[2,8,512], index: 0, kind: input, shape index: {}]
  %s1 = inlined_call_operand.vmem [shape: f32[8,8], index: 1, kind: input, shape index: {}]
  %s2 = inlined_call_operand.vmem [shape: f32[54,512], index: 2, kind: input, shape index: {}]
  %s3 = inlined_call_operand.vmem [shape: f32[2,8,512], index: 3, kind: output, shape index: {}]
  %s4 = sld [smem:[#allocation0]]
  $region22: #{res_cbam_forward.1} parent=0
    _
  %s6 = ssub.s32 1, %s4
  %s7 = scalar_select 0, %s6, %s4
  // Predicated region
  $region2: #{res_cbam_forward.1} parent=0 // pred_check
    _
  $region3: #{res_cbam_forward.1} parent=0 // pred_check_branch
    %9 = sbr.rel (0) target = $region5
  $region4: #{res_cbam_forward.1} parent=0 // pred_region
    _
  $region5: #{res_cbam_forward.1} parent=0 // pred_fallthru
    _
  // Predicated region
  $region6: #{res_cbam_forward.1} parent=0 // pred_check
    _
  $region7: #{res_cbam_forward.1} parent=0 // pred_check_branch
    %11 = sbr.rel (0) target = $region9
  $region8: #{res_cbam_forward.1} parent=0 // pred_region
    _
  $region9: #{res_cbam_forward.1} parent=0 // pred_fallthru
    _
  // Predicated region
  $region10: #{res_cbam_forward.1} parent=0 // pred_check
    _
  $region11: #{res_cbam_forward.1} parent=0 // pred_check_branch
    %13 = sbr.rel (0) target = $region13
  $region12: #{res_cbam_forward.1} parent=0 // pred_region
    _
  $region13: #{res_cbam_forward.1} parent=0 // pred_fallthru
    _
  %v14 = vld [vmem:[%s0] sm:$0xff]
  %v15 = vld [vmem:[%s0 + $0x8] sm:$0xff]
  %v16 = vld [vmem:[%s0 + $0x10] sm:$0xff]
  %v17 = vld [vmem:[%s0 + $0x18] sm:$0xff]
  %18 = vmatprep.subr.mxu0 0.0
  %19 = vmatpush1.msra.mxu0 1.0
  %20 = vmatprep.subr.mxu0 0.0
  %21 = vmatpush1.msra.mxu0 1.0
  %22 = vmatprep.subr.mxu0 0.0
  %23 = vmatpush1.msra.mxu0 1.0
  %24 = vmatprep.subr.mxu0 0.0
  %25 = vmatpush1.msra.mxu0 1.0
  %26 = vmatprep.subr.mxu0 0.0
  %27 = vmatpush1.msra.mxu0 1.0
  %28 = vmatprep.subr.mxu0 0.0
  %29 = vmatpush1.msra.mxu0 1.0
  %30 = vmatprep.subr.mxu0 0.0
  %31 = vmatpush1.msra.mxu0 1.0
  %32 = vmatprep.subr.mxu0 0.0
  %33 = vmatpush1.msra.mxu0 1.0
  %34 = vmatprep.subr.mxu0 0.0
  %35 = vmatpush1.msra.mxu0 1.0
  %36 = vmatprep.subr.mxu0 0.0
  %37 = vmatpush1.msra.mxu0 1.0
  %38 = vmatprep.subr.mxu0 0.0
  %39 = vmatpush1.msra.mxu0 1.0
  %40 = vmatprep.subr.mxu0 0.0
  %41 = vmatpush1.msra.mxu0 1.0
  %42 = vmatprep.subr.mxu0 0.0
  %43 = vmatpush1.msra.mxu0 1.0
  %44 = vmatprep.subr.mxu0 0.0
  %45 = vmatpush1.msra.mxu0 1.0
  %46 = vmatprep.subr.mxu0 0.0
  %47 = vmatpush1.msra.mxu0 1.0
  %48 = vmatprep.subr.mxu0 0.0
  %49 = vmatpush1.msra.mxu0 1.0
  %50 = vmatprep.subr.mxu0 0.0
  %51 = vmatpush1.msra.mxu0 1.0
  %52 = vmatprep.subr.mxu0 0.0
  %53 = vmatpush1.msra.mxu0 1.0
  %54 = vmatprep.subr.mxu0 0.0
  %55 = vmatpush1.msra.mxu0 1.0
  %56 = vmatprep.subr.mxu0 0.0
  %57 = vmatpush1.msra.mxu0 1.0
  %58 = vmatprep.subr.mxu0 0.0
  %59 = vmatpush1.msra.mxu0 1.0
  %60 = vmatprep.subr.mxu0 0.0
  %61 = vmatpush1.msra.mxu0 1.0
  %62 = vmatprep.subr.mxu0 0.0
  %63 = vmatpush1.msra.mxu0 1.0
  %64 = vmatprep.subr.mxu0 0.0
  %65 = vmatpush1.msra.mxu0 1.0
  %66 = vmatprep.subr.mxu0 0.0
  %67 = vmatpush1.msra.mxu0 1.0
  %68 = vmatprep.subr.mxu0 0.0
  %69 = vmatpush1.msra.mxu0 1.0
  %70 = vmatprep.subr.mxu0 0.0
  %71 = vmatpush1.msra.mxu0 1.0
  %72 = vmatprep.subr.mxu0 0.0
  %73 = vmatpush1.msra.mxu0 1.0
  %74 = vmatprep.subr.mxu0 0.0
  %75 = vmatpush1.msra.mxu0 1.0
  %76 = vmatprep.subr.mxu0 0.0
  %77 = vmatpush1.msra.mxu0 1.0
  %78 = vmatprep.subr.mxu0 0.0
  %79 = vmatpush1.msra.mxu0 1.0
  %80 = vmatprep.subr.mxu0 0.0
  %81 = vmatpush1.msra.mxu0 1.0
  %82 = vmatprep.mubr.f32.mxu0 %v15
  %83 = vmatmul.mubr.f32.gmra.mrb[0].mxu0 %v14
  %v84 = vpop.f32.mrb[0].mxu0
  %v85 = vadd.f32 0.0, %v84
  %v86 = vpop.f32.mrb[0].mxu0
  %87 = vdwg.mxu0
  %88 = vmatprep.subr.mxu0 0.0
  %89 = vmatpush1.msra.mxu0 1.0
  %90 = vmatprep.subr.mxu0 0.0
  %91 = vmatpush1.msra.mxu0 1.0
  %92 = vmatprep.subr.mxu0 0.0
  %93 = vmatpush1.msra.mxu0 1.0
  %94 = vmatprep.subr.mxu0 0.0
  %95 = vmatpush1.msra.mxu0 1.0
  %96 = vmatprep.subr.mxu0 0.0
  %97 = vmatpush1.msra.mxu0 1.0
  %98 = vmatprep.subr.mxu0 0.0
  %99 = vmatpush1.msra.mxu0 1.0
  %100 = vmatprep.subr.mxu0 0.0
  %101 = vmatpush1.msra.mxu0 1.0
  %102 = vmatprep.subr.mxu0 0.0
  %103 = vmatpush1.msra.mxu0 1.0
  %104 = vmatprep.subr.mxu0 0.0
  %105 = vmatpush1.msra.mxu0 1.0
  %106 = vmatprep.subr.mxu0 0.0
  %107 = vmatpush1.msra.mxu0 1.0
  %108 = vmatprep.subr.mxu0 0.0
  %109 = vmatpush1.msra.mxu0 1.0
  %110 = vmatprep.subr.mxu0 0.0
  %111 = vmatpush1.msra.mxu0 1.0
  %112 = vmatprep.subr.mxu0 0.0
  %113 = vmatpush1.msra.mxu0 1.0
  %114 = vmatprep.subr.mxu0 0.0
  %115 = vmatpush1.msra.mxu0 1.0
  %116 = vmatprep.subr.mxu0 0.0
  %117 = vmatpush1.msra.mxu0 1.0
  %118 = vmatprep.subr.mxu0 0.0
  %119 = vmatpush1.msra.mxu0 1.0
  %120 = vmatprep.subr.mxu0 0.0
  %121 = vmatpush1.msra.mxu0 1.0
  %122 = vmatprep.subr.mxu0 0.0
  %123 = vmatpush1.msra.mxu0 1.0
  %124 = vmatprep.subr.mxu0 0.0
  %125 = vmatpush1.msra.mxu0 1.0
  %126 = vmatprep.subr.mxu0 0.0
  %127 = vmatpush1.msra.mxu0 1.0
  %128 = vmatprep.subr.mxu0 0.0
  %129 = vmatpush1.msra.mxu0 1.0
  %130 = vmatprep.subr.mxu0 0.0
  %131 = vmatpush1.msra.mxu0 1.0
  %132 = vmatprep.subr.mxu0 0.0
  %133 = vmatpush1.msra.mxu0 1.0
  %134 = vmatprep.subr.mxu0 0.0
  %135 = vmatpush1.msra.mxu0 1.0
  %136 = vmatprep.subr.mxu0 0.0
  %137 = vmatpush1.msra.mxu0 1.0
  %138 = vmatprep.subr.mxu0 0.0
  %139 = vmatpush1.msra.mxu0 1.0
  %140 = vmatprep.subr.mxu0 0.0
  %141 = vmatpush1.msra.mxu0 1.0
  %142 = vmatprep.subr.mxu0 0.0
  %143 = vmatpush1.msra.mxu0 1.0
  %144 = vmatprep.subr.mxu0 0.0
  %145 = vmatpush1.msra.mxu0 1.0
  %146 = vmatprep.subr.mxu0 0.0
  %147 = vmatpush1.msra.mxu0 1.0
  %148 = vmatprep.subr.mxu0 0.0
  %149 = vmatpush1.msra.mxu0 1.0
  %150 = vmatprep.subr.mxu0 0.0
  %151 = vmatpush1.msra.mxu0 1.0
  %152 = vmatprep.mubr.f32.mxu0 %v17
  %153 = vmatmul.mubr.f32.gmra.mrb[0].mxu0 %v16
  %v154 = vpop.f32.mrb[0].mxu0
  %v155 = vadd.f32 %v85, %v154
  %v156 = vpop.f32.mrb[0].mxu0
  %157 = vdwg.mxu0
  %v158 = vmul.f32 %v155, 0.001953125
  %v159 = vmax.f32 %v14, %v15
  %v160 = vmax.f32 %v16, %v17
  %v161 = vmax.f32 %v159, %v160
  %162 = vmax.xlane.f32.xlu0 %v161
  %v163 = vpop.xlane.xlu0 %162
  %v164 = vadd.f32 %v158, %v163
  %s165 = scalar_lea.vmem %s0, 32
  %v166 = vld [vmem:[%s165] sm:$0xff]
  %v167 = vld [vmem:[%s165 + $0x8] sm:$0xff]
  %v168 = vld [vmem:[%s165 + $0x10] sm:$0xff]
  %v169 = vld [vmem:[%s165 + $0x18] sm:$0xff]
  %170 = vmatprep.subr.mxu0 0.0
  %171 = vmatpush1.msra.mxu0 1.0
  %172 = vmatprep.subr.mxu0 0.0
  %173 = vmatpush1.msra.mxu0 1.0
  %174 = vmatprep.subr.mxu0 0.0
  %175 = vmatpush1.msra.mxu0 1.0
  %176 = vmatprep.subr.mxu0 0.0
  %177 = vmatpush1.msra.mxu0 1.0
  %178 = vmatprep.subr.mxu0 0.0
  %179 = vmatpush1.msra.mxu0 1.0
  %180 = vmatprep.subr.mxu0 0.0
  %181 = vmatpush1.msra.mxu0 1.0
  %182 = vmatprep.subr.mxu0 0.0
  %183 = vmatpush1.msra.mxu0 1.0
  %184 = vmatprep.subr.mxu0 0.0
  %185 = vmatpush1.msra.mxu0 1.0
  %186 = vmatprep.subr.mxu0 0.0
  %187 = vmatpush1.msra.mxu0 1.0
  %188 = vmatprep.subr.mxu0 0.0
  %189 = vmatpush1.msra.mxu0 1.0
  %190 = vmatprep.subr.mxu0 0.0
  %191 = vmatpush1.msra.mxu0 1.0
  %192 = vmatprep.subr.mxu0 0.0
  %193 = vmatpush1.msra.mxu0 1.0
  %194 = vmatprep.subr.mxu0 0.0
  %195 = vmatpush1.msra.mxu0 1.0
  %196 = vmatprep.subr.mxu0 0.0
  %197 = vmatpush1.msra.mxu0 1.0
  %198 = vmatprep.subr.mxu0 0.0
  %199 = vmatpush1.msra.mxu0 1.0
  %200 = vmatprep.subr.mxu0 0.0
  %201 = vmatpush1.msra.mxu0 1.0
  %202 = vmatprep.subr.mxu0 0.0
  %203 = vmatpush1.msra.mxu0 1.0
  %204 = vmatprep.subr.mxu0 0.0
  %205 = vmatpush1.msra.mxu0 1.0
  %206 = vmatprep.subr.mxu0 0.0
  %207 = vmatpush1.msra.mxu0 1.0
  %208 = vmatprep.subr.mxu0 0.0
  %209 = vmatpush1.msra.mxu0 1.0
  %210 = vmatprep.subr.mxu0 0.0
  %211 = vmatpush1.msra.mxu0 1.0
  %212 = vmatprep.subr.mxu0 0.0
  %213 = vmatpush1.msra.mxu0 1.0
  %214 = vmatprep.subr.mxu0 0.0
  %215 = vmatpush1.msra.mxu0 1.0
  %216 = vmatprep.subr.mxu0 0.0
  %217 = vmatpush1.msra.mxu0 1.0
  %218 = vmatprep.subr.mxu0 0.0
  %219 = vmatpush1.msra.mxu0 1.0
  %220 = vmatprep.subr.mxu0 0.0
  %221 = vmatpush1.msra.mxu0 1.0
  %222 = vmatprep.subr.mxu0 0.0
  %223 = vmatpush1.msra.mxu0 1.0
  %224 = vmatprep.subr.mxu0 0.0
  %225 = vmatpush1.msra.mxu0 1.0
  %226 = vmatprep.subr.mxu0 0.0
  %227 = vmatpush1.msra.mxu0 1.0
  %228 = vmatprep.subr.mxu0 0.0
  %229 = vmatpush1.msra.mxu0 1.0
  %230 = vmatprep.subr.mxu0 0.0
  %231 = vmatpush1.msra.mxu0 1.0
  %232 = vmatprep.subr.mxu0 0.0
  %233 = vmatpush1.msra.mxu0 1.0
  %234 = vmatprep.mubr.f32.mxu0 %v167
  %235 = vmatmul.mubr.f32.gmra.mrb[0].mxu0 %v166
  %v236 = vpop.f32.mrb[0].mxu0
  %v237 = vadd.f32 0.0, %v236
  %v238 = vpop.f32.mrb[0].mxu0
  %239 = vdwg.mxu0
  %240 = vmatprep.subr.mxu0 0.0
  %241 = vmatpush1.msra.mxu0 1.0
  %242 = vmatprep.subr.mxu0 0.0
  %243 = vmatpush1.msra.mxu0 1.0
  %244 = vmatprep.subr.mxu0 0.0
  %245 = vmatpush1.msra.mxu0 1.0
  %246 = vmatprep.subr.mxu0 0.0
  %247 = vmatpush1.msra.mxu0 1.0
  %248 = vmatprep.subr.mxu0 0.0
  %249 = vmatpush1.msra.mxu0 1.0
  %250 = vmatprep.subr.mxu0 0.0
  %251 = vmatpush1.msra.mxu0 1.0
  %252 = vmatprep.subr.mxu0 0.0
  %253 = vmatpush1.msra.mxu0 1.0
  %254 = vmatprep.subr.mxu0 0.0
  %255 = vmatpush1.msra.mxu0 1.0
  %256 = vmatprep.subr.mxu0 0.0
  %257 = vmatpush1.msra.mxu0 1.0
  %258 = vmatprep.subr.mxu0 0.0
  %259 = vmatpush1.msra.mxu0 1.0
  %260 = vmatprep.subr.mxu0 0.0
  %261 = vmatpush1.msra.mxu0 1.0
  %262 = vmatprep.subr.mxu0 0.0
  %263 = vmatpush1.msra.mxu0 1.0
  %264 = vmatprep.subr.mxu0 0.0
  %265 = vmatpush1.msra.mxu0 1.0
  %266 = vmatprep.subr.mxu0 0.0
  %267 = vmatpush1.msra.mxu0 1.0
  %268 = vmatprep.subr.mxu0 0.0
  %269 = vmatpush1.msra.mxu0 1.0
  %270 = vmatprep.subr.mxu0 0.0
  %271 = vmatpush1.msra.mxu0 1.0
  %272 = vmatprep.subr.mxu0 0.0
  %273 = vmatpush1.msra.mxu0 1.0
  %274 = vmatprep.subr.mxu0 0.0
  %275 = vmatpush1.msra.mxu0 1.0
  %276 = vmatprep.subr.mxu0 0.0
  %277 = vmatpush1.msra.mxu0 1.0
  %278 = vmatprep.subr.mxu0 0.0
  %279 = vmatpush1.msra.mxu0 1.0
  %280 = vmatprep.subr.mxu0 0.0
  %281 = vmatpush1.msra.mxu0 1.0
  %282 = vmatprep.subr.mxu0 0.0
  %283 = vmatpush1.msra.mxu0 1.0
  %284 = vmatprep.subr.mxu0 0.0
  %285 = vmatpush1.msra.mxu0 1.0
  %286 = vmatprep.subr.mxu0 0.0
  %287 = vmatpush1.msra.mxu0 1.0
  %288 = vmatprep.subr.mxu0 0.0
  %289 = vmatpush1.msra.mxu0 1.0
  %290 = vmatprep.subr.mxu0 0.0
  %291 = vmatpush1.msra.mxu0 1.0
  %292 = vmatprep.subr.mxu0 0.0
  %293 = vmatpush1.msra.mxu0 1.0
  %294 = vmatprep.subr.mxu0 0.0
  %295 = vmatpush1.msra.mxu0 1.0
  %296 = vmatprep.subr.mxu0 0.0
  %297 = vmatpush1.msra.mxu0 1.0
  %298 = vmatprep.subr.mxu0 0.0
  %299 = vmatpush1.msra.mxu0 1.0
  %300 = vmatprep.subr.mxu0 0.0
  %301 = vmatpush1.msra.mxu0 1.0
  %302 = vmatprep.subr.mxu0 0.0
  %303 = vmatpush1.msra.mxu0 1.0
  %304 = vmatprep.mubr.f32.mxu0 %v169
  %305 = vmatmul.mubr.f32.gmra.mrb[0].mxu0 %v168
  %v306 = vpop.f32.mrb[0].mxu0
  %v307 = vadd.f32 %v237, %v306
  %v308 = vpop.f32.mrb[0].mxu0
  %309 = vdwg.mxu0
  %v310 = vmul.f32 %v307, 0.001953125
  %v311 = vmax.f32 %v166, %v167
  %v312 = vmax.f32 %v168, %v169
  %v313 = vmax.f32 %v311, %v312
  %314 = vmax.xlane.f32.xlu0 %v313
  %v315 = vpop.xlane.xlu0 %314
  %v316 = vadd.f32 %v310, %v315
  %318 = vrot.lane.b32.xlu0 %v316, 1
  %v319 = vpop.permute.xlu0 %318
  %vm321 = vcmask 7168
  %v322 = vsel %vm321, %v164, %v319
  %v323 = vld [vmem:[%s1] sm:$0xff]
  %vm324 = vcmask 64512
  %v326 = vsel %vm324, %v323, 0
  %328 = vmatprep.subr.mxu0 0.0
  %329 = vmatpush1.msra.mxu0 %v322
  %330 = vmatprep.subr.mxu0 0.0
  %331 = vmatpush1.msra.mxu0 0.0
  %332 = vmatprep.subr.mxu0 0.0
  %333 = vmatpush1.msra.mxu0 0.0
  %334 = vmatprep.subr.mxu0 0.0
  %335 = vmatpush1.msra.mxu0 0.0
  %336 = vmatprep.subr.mxu0 0.0
  %337 = vmatpush1.msra.mxu0 0.0
  %338 = vmatprep.subr.mxu0 0.0
  %339 = vmatpush1.msra.mxu0 0.0
  %340 = vmatprep.subr.mxu0 0.0
  %341 = vmatpush1.msra.mxu0 0.0
  %342 = vmatprep.subr.mxu0 0.0
  %343 = vmatpush1.msra.mxu0 0.0
  %344 = vmatprep.subr.mxu0 0.0
  %345 = vmatpush1.msra.mxu0 0.0
  %346 = vmatprep.subr.mxu0 0.0
  %347 = vmatpush1.msra.mxu0 0.0
  %348 = vmatprep.subr.mxu0 0.0
  %349 = vmatpush1.msra.mxu0 0.0
  %350 = vmatprep.subr.mxu0 0.0
  %351 = vmatpush1.msra.mxu0 0.0
  %352 = vmatprep.subr.mxu0 0.0
  %353 = vmatpush1.msra.mxu0 0.0
  %354 = vmatprep.subr.mxu0 0.0
  %355 = vmatpush1.msra.mxu0 0.0
  %356 = vmatprep.subr.mxu0 0.0
  %357 = vmatpush1.msra.mxu0 0.0
  %358 = vmatprep.subr.mxu0 0.0
  %359 = vmatpush1.msra.mxu0 0.0
  %360 = vmatprep.subr.mxu0 0.0
  %361 = vmatpush1.msra.mxu0 0.0
  %362 = vmatprep.subr.mxu0 0.0
  %363 = vmatpush1.msra.mxu0 0.0
  %364 = vmatprep.subr.mxu0 0.0
  %365 = vmatpush1.msra.mxu0 0.0
  %366 = vmatprep.subr.mxu0 0.0
  %367 = vmatpush1.msra.mxu0 0.0
  %368 = vmatprep.subr.mxu0 0.0
  %369 = vmatpush1.msra.mxu0 0.0
  %370 = vmatprep.subr.mxu0 0.0
  %371 = vmatpush1.msra.mxu0 0.0
  %372 = vmatprep.subr.mxu0 0.0
  %373 = vmatpush1.msra.mxu0 0.0
  %374 = vmatprep.subr.mxu0 0.0
  %375 = vmatpush1.msra.mxu0 0.0
  %376 = vmatprep.subr.mxu0 0.0
  %377 = vmatpush1.msra.mxu0 0.0
  %378 = vmatprep.subr.mxu0 0.0
  %379 = vmatpush1.msra.mxu0 0.0
  %380 = vmatprep.subr.mxu0 0.0
  %381 = vmatpush1.msra.mxu0 0.0
  %382 = vmatprep.subr.mxu0 0.0
  %383 = vmatpush1.msra.mxu0 0.0
  %384 = vmatprep.subr.mxu0 0.0
  %385 = vmatpush1.msra.mxu0 0.0
  %386 = vmatprep.subr.mxu0 0.0
  %387 = vmatpush1.msra.mxu0 0.0
  %388 = vmatprep.subr.mxu0 0.0
  %389 = vmatpush1.msra.mxu0 0.0
  %390 = vmatprep.subr.mxu0 0.0
  %391 = vmatpush1.msra.mxu0 0.0
  %392 = vmatprep.mubr.f32.mxu0 0.0
  %393 = vmatmul.mubr.f32.gmra.mrb[0].mxu0 %v326
  %v394 = vpop.f32.mrb[0].mxu0
  %v395 = vadd.f32 0.0, %v394
  %v396 = vpop.f32.mrb[0].mxu0
  %397 = vdwg.mxu0
  %vm398 = vcmask 15360
  %v399 = vsel %vm398, %v395, -inf
  %v400 = vrot.slane %v399, 4
  %v401 = vmax.f32 %v399, %v400
  %v402 = vrot.slane %v401, 2
  %v403 = vmax.f32 %v401, %v402
  %v404 = vrot.slane %v403, 1
  %v405 = vmax.f32 %v403, %v404
  %v406 = vsub.f32 %v395, %v405
  %v407 = vmul.f32 %v406, 1.442695
  %v408 = vpow.pop %v407
  %v409 = vsel %vm398, %v408, 0.0
  %v410 = vrot.slane %v409, 4
  %v411 = vadd.f32 %v409, %v410
  %v412 = vrot.slane %v411, 2
  %v413 = vadd.f32 %v411, %v412
  %v414 = vrot.slane %v413, 1
  %v415 = vadd.f32 %v413, %v414
  %v416 = vrcp.pop %v415
  %v417 = vmul.f32 %v408, %v416
  %419 = vset.pattern.permute.xlu0 0
  %420 = vperm.xlu0 %419, %v417
  %v421 = vpop.permute.xlu0 %420
  %v423 = vmul.f32 %v421, %v14
  %v424 = vmul.f32 %v421, %v15
  %v425 = vmul.f32 %v421, %v16
  %v426 = vmul.f32 %v421, %v17
  %v427 = vrot.slane %v423, 4
  %v428 = vmax.f32 %v423, %v427
  %v429 = vrot.slane %v428, 2
  %v430 = vmax.f32 %v428, %v429
  %v431 = vrot.slane %v430, 1
  %v432 = vmax.f32 %v430, %v431
  %v433 = vrot.slane %v424, 4
  %v434 = vmax.f32 %v424, %v433
  %v435 = vrot.slane %v434, 2
  %v436 = vmax.f32 %v434, %v435
  %v437 = vrot.slane %v436, 1
  %v438 = vmax.f32 %v436, %v437
  %v439 = vrot.slane %v425, 4
  %v440 = vmax.f32 %v425, %v439
  %v441 = vrot.slane %v440, 2
  %v442 = vmax.f32 %v440, %v441
  %v443 = vrot.slane %v442, 1
  %v444 = vmax.f32 %v442, %v443
  %v445 = vrot.slane %v426, 4
  %v446 = vmax.f32 %v426, %v445
  %v447 = vrot.slane %v446, 2
  %v448 = vmax.f32 %v446, %v447
  %v449 = vrot.slane %v448, 1
  %v450 = vmax.f32 %v448, %v449
  %451 = vxpose.xlu0.b32.start [1/16] %v417, 128
  %452 = vxpose.xlu0.b32.cont [2/16] 0.0, 128
  %453 = vxpose.xlu0.b32.cont [3/16] 0.0, 128
  %454 = vxpose.xlu0.b32.cont [4/16] 0.0, 128
  %455 = vxpose.xlu0.b32.cont [5/16] 0.0, 128
  %456 = vxpose.xlu0.b32.cont [6/16] 0.0, 128
  %457 = vxpose.xlu0.b32.cont [7/16] 0.0, 128
  %458 = vxpose.xlu0.b32.cont [8/16] 0.0, 128
  %459 = vxpose.xlu0.b32.cont [9/16] 0.0, 128
  %460 = vxpose.xlu0.b32.cont [10/16] 0.0, 128
  %461 = vxpose.xlu0.b32.cont [11/16] 0.0, 128
  %462 = vxpose.xlu0.b32.cont [12/16] 0.0, 128
  %463 = vxpose.xlu0.b32.cont [13/16] 0.0, 128
  %464 = vxpose.xlu0.b32.cont [14/16] 0.0, 128
  %465 = vxpose.xlu0.b32.cont [15/16] 0.0, 128
  %466 = vxpose.xlu0.b32.end [16/16] 0.0, 128
  %v467 = vpop.trf.xlu0
  %v468 = vpop.trf.xlu0
  %v469 = vpop.trf.xlu0
  %v470 = vpop.trf.xlu0
  %v471 = vpop.trf.xlu0
  %v472 = vpop.trf.xlu0
  %v473 = vpop.trf.xlu0
  %v474 = vpop.trf.xlu0
  %v475 = vpop.trf.xlu0
  %v476 = vpop.trf.xlu0
  %v477 = vpop.trf.xlu0
  %v478 = vpop.trf.xlu0
  %v479 = vpop.trf.xlu0
  %v480 = vpop.trf.xlu0
  %v481 = vpop.trf.xlu0
  %v482 = vpop.trf.xlu0
  %v484 = vsel %vm324, %v467, 0
  %486 = vmatprep.subr.mxu0 %v15
  %487 = vmatpush1.msra.mxu0 %v14
  %488 = vmatprep.subr.mxu0 0.0
  %489 = vmatpush1.msra.mxu0 0.0
  %490 = vmatprep.subr.mxu0 0.0
  %491 = vmatpush1.msra.mxu0 0.0
  %492 = vmatprep.subr.mxu0 0.0
  %493 = vmatpush1.msra.mxu0 0.0
  %494 = vmatprep.subr.mxu0 0.0
  %495 = vmatpush1.msra.mxu0 0.0
  %496 = vmatprep.subr.mxu0 0.0
  %497 = vmatpush1.msra.mxu0 0.0
  %498 = vmatprep.subr.mxu0 0.0
  %499 = vmatpush1.msra.mxu0 0.0
  %500 = vmatprep.subr.mxu0 0.0
  %501 = vmatpush1.msra.mxu0 0.0
  %502 = vmatprep.subr.mxu0 0.0
  %503 = vmatpush1.msra.mxu0 0.0
  %504 = vmatprep.subr.mxu0 0.0
  %505 = vmatpush1.msra.mxu0 0.0
  %506 = vmatprep.subr.mxu0 0.0
  %507 = vmatpush1.msra.mxu0 0.0
  %508 = vmatprep.subr.mxu0 0.0
  %509 = vmatpush1.msra.mxu0 0.0
  %510 = vmatprep.subr.mxu0 0.0
  %511 = vmatpush1.msra.mxu0 0.0
  %512 = vmatprep.subr.mxu0 0.0
  %513 = vmatpush1.msra.mxu0 0.0
  %514 = vmatprep.subr.mxu0 0.0
  %515 = vmatpush1.msra.mxu0 0.0
  %516 = vmatprep.subr.mxu0 0.0
  %517 = vmatpush1.msra.mxu0 0.0
  %518 = vmatprep.subr.mxu0 0.0
  %519 = vmatpush1.msra.mxu0 0.0
  %520 = vmatprep.subr.mxu0 0.0
  %521 = vmatpush1.msra.mxu0 0.0
  %522 = vmatprep.subr.mxu0 0.0
  %523 = vmatpush1.msra.mxu0 0.0
  %524 = vmatprep.subr.mxu0 0.0
  %525 = vmatpush1.msra.mxu0 0.0
  %526 = vmatprep.subr.mxu0 0.0
  %527 = vmatpush1.msra.mxu0 0.0
  %528 = vmatprep.subr.mxu0 0.0
  %529 = vmatpush1.msra.mxu0 0.0
  %530 = vmatprep.subr.mxu0 0.0
  %531 = vmatpush1.msra.mxu0 0.0
  %532 = vmatprep.subr.mxu0 0.0
  %533 = vmatpush1.msra.mxu0 0.0
  %534 = vmatprep.subr.mxu0 0.0
  %535 = vmatpush1.msra.mxu0 0.0
  %536 = vmatprep.subr.mxu0 0.0
  %537 = vmatpush1.msra.mxu0 0.0
  %538 = vmatprep.subr.mxu0 0.0
  %539 = vmatpush1.msra.mxu0 0.0
  %540 = vmatprep.subr.mxu0 0.0
  %541 = vmatpush1.msra.mxu0 0.0
  %542 = vmatprep.subr.mxu0 0.0
  %543 = vmatpush1.msra.mxu0 0.0
  %544 = vmatprep.subr.mxu0 0.0
  %545 = vmatpush1.msra.mxu0 0.0
  %546 = vmatprep.subr.mxu0 0.0
  %547 = vmatpush1.msra.mxu0 0.0
  %548 = vmatprep.subr.mxu0 0.0
  %549 = vmatpush1.msra.mxu0 0.0
  %550 = vmatprep.mubr.f32.mxu0 0.0
  %551 = vmatmul.mubr.f32.gmra.mrb[0].mxu0 %v484
  %v552 = vpop.f32.mrb[0].mxu0
  %v553 = vadd.f32 0.0, %v552
  %v554 = vpop.f32.mrb[0].mxu0
  %v555 = vadd.f32 0.0, %v554
  %556 = vdwg.mxu0
  %557 = vmatprep.subr.mxu0 %v17
  %558 = vmatpush1.msra.mxu0 %v16
  %559 = vmatprep.subr.mxu0 0.0
  %560 = vmatpush1.msra.mxu0 0.0
  %561 = vmatprep.subr.mxu0 0.0
  %562 = vmatpush1.msra.mxu0 0.0
  %563 = vmatprep.subr.mxu0 0.0
  %564 = vmatpush1.msra.mxu0 0.0
  %565 = vmatprep.subr.mxu0 0.0
  %566 = vmatpush1.msra.mxu0 0.0
  %567 = vmatprep.subr.mxu0 0.0
  %568 = vmatpush1.msra.mxu0 0.0
  %569 = vmatprep.subr.mxu0 0.0
  %570 = vmatpush1.msra.mxu0 0.0
  %571 = vmatprep.subr.mxu0 0.0
  %572 = vmatpush1.msra.mxu0 0.0
  %573 = vmatprep.subr.mxu0 0.0
  %574 = vmatpush1.msra.mxu0 0.0
  %575 = vmatprep.subr.mxu0 0.0
  %576 = vmatpush1.msra.mxu0 0.0
  %577 = vmatprep.subr.mxu0 0.0
  %578 = vmatpush1.msra.mxu0 0.0
  %579 = vmatprep.subr.mxu0 0.0
  %580 = vmatpush1.msra.mxu0 0.0
  %581 = vmatprep.subr.mxu0 0.0
  %582 = vmatpush1.msra.mxu0 0.0
  %583 = vmatprep.subr.mxu0 0.0
  %584 = vmatpush1.msra.mxu0 0.0
  %585 = vmatprep.subr.mxu0 0.0
  %586 = vmatpush1.msra.mxu0 0.0
  %587 = vmatprep.subr.mxu0 0.0
  %588 = vmatpush1.msra.mxu0 0.0
  %589 = vmatprep.subr.mxu0 0.0
  %590 = vmatpush1.msra.mxu0 0.0
  %591 = vmatprep.subr.mxu0 0.0
  %592 = vmatpush1.msra.mxu0 0.0
  %593 = vmatprep.subr.mxu0 0.0
  %594 = vmatpush1.msra.mxu0 0.0
  %595 = vmatprep.subr.mxu0 0.0
  %596 = vmatpush1.msra.mxu0 0.0
  %597 = vmatprep.subr.mxu0 0.0
  %598 = vmatpush1.msra.mxu0 0.0
  %599 = vmatprep.subr.mxu0 0.0
  %600 = vmatpush1.msra.mxu0 0.0
  %601 = vmatprep.subr.mxu0 0.0
  %602 = vmatpush1.msra.mxu0 0.0
  %603 = vmatprep.subr.mxu0 0.0
  %604 = vmatpush1.msra.mxu0 0.0
  %605 = vmatprep.subr.mxu0 0.0
  %606 = vmatpush1.msra.mxu0 0.0
  %607 = vmatprep.subr.mxu0 0.0
  %608 = vmatpush1.msra.mxu0 0.0
  %609 = vmatprep.subr.mxu0 0.0
  %610 = vmatpush1.msra.mxu0 0.0
  %611 = vmatprep.subr.mxu0 0.0
  %612 = vmatpush1.msra.mxu0 0.0
  %613 = vmatprep.subr.mxu0 0.0
  %614 = vmatpush1.msra.mxu0 0.0
  %615 = vmatprep.subr.mxu0 0.0
  %616 = vmatpush1.msra.mxu0 0.0
  %617 = vmatprep.subr.mxu0 0.0
  %618 = vmatpush1.msra.mxu0 0.0
  %619 = vmatprep.subr.mxu0 0.0
  %620 = vmatpush1.msra.mxu0 0.0
  %621 = vmatprep.mubr.f32.mxu0 0.0
  %622 = vmatmul.mubr.f32.gmra.mrb[0].mxu0 %v484
  %v623 = vpop.f32.mrb[0].mxu0
  %v624 = vadd.f32 0.0, %v623
  %v625 = vpop.f32.mrb[0].mxu0
  %v626 = vadd.f32 0.0, %v625
  %627 = vdwg.mxu0
  %v628 = vmul.f32 %v553, 0.125
  %v629 = vmul.f32 %v555, 0.125
  %v630 = vmul.f32 %v624, 0.125
  %v631 = vmul.f32 %v626, 0.125
  %632 = vset.pattern.permute.xlu0 1
  %633 = vperm.xlu0 %632, %v417
  %v634 = vpop.permute.xlu0 %633
  %v636 = vmul.f32 %v634, %v166
  %v637 = vmul.f32 %v634, %v167
  %v638 = vmul.f32 %v634, %v168
  %v639 = vmul.f32 %v634, %v169
  %v640 = vrot.slane %v636, 4
  %v641 = vmax.f32 %v636, %v640
  %v642 = vrot.slane %v641, 2
  %v643 = vmax.f32 %v641, %v642
  %v644 = vrot.slane %v643, 1
  %v645 = vmax.f32 %v643, %v644
  %v646 = vrot.slane %v637, 4
  %v647 = vmax.f32 %v637, %v646
  %v648 = vrot.slane %v647, 2
  %v649 = vmax.f32 %v647, %v648
  %v650 = vrot.slane %v649, 1
  %v651 = vmax.f32 %v649, %v650
  %v652 = vrot.slane %v638, 4
  %v653 = vmax.f32 %v638, %v652
  %v654 = vrot.slane %v653, 2
  %v655 = vmax.f32 %v653, %v654
  %v656 = vrot.slane %v655, 1
  %v657 = vmax.f32 %v655, %v656
  %v658 = vrot.slane %v639, 4
  %v659 = vmax.f32 %v639, %v658
  %v660 = vrot.slane %v659, 2
  %v661 = vmax.f32 %v659, %v660
  %v662 = vrot.slane %v661, 1
  %v663 = vmax.f32 %v661, %v662
  %664 = vrot.lane.b32.xlu0 %v417, 127
  %v665 = vpop.permute.xlu0 %664
  %667 = vxpose.xlu0.b32.start [1/16] %v665, 128
  %668 = vxpose.xlu0.b32.cont [2/16] 0.0, 128
  %669 = vxpose.xlu0.b32.cont [3/16] 0.0, 128
  %670 = vxpose.xlu0.b32.cont [4/16] 0.0, 128
  %671 = vxpose.xlu0.b32.cont [5/16] 0.0, 128
  %672 = vxpose.xlu0.b32.cont [6/16] 0.0, 128
  %673 = vxpose.xlu0.b32.cont [7/16] 0.0, 128
  %674 = vxpose.xlu0.b32.cont [8/16] 0.0, 128
  %675 = vxpose.xlu0.b32.cont [9/16] 0.0, 128
  %676 = vxpose.xlu0.b32.cont [10/16] 0.0, 128
  %677 = vxpose.xlu0.b32.cont [11/16] 0.0, 128
  %678 = vxpose.xlu0.b32.cont [12/16] 0.0, 128
  %679 = vxpose.xlu0.b32.cont [13/16] 0.0, 128
  %680 = vxpose.xlu0.b32.cont [14/16] 0.0, 128
  %681 = vxpose.xlu0.b32.cont [15/16] 0.0, 128
  %682 = vxpose.xlu0.b32.end [16/16] 0.0, 128
  %v683 = vpop.trf.xlu0
  %v684 = vpop.trf.xlu0
  %v685 = vpop.trf.xlu0
  %v686 = vpop.trf.xlu0
  %v687 = vpop.trf.xlu0
  %v688 = vpop.trf.xlu0
  %v689 = vpop.trf.xlu0
  %v690 = vpop.trf.xlu0
  %v691 = vpop.trf.xlu0
  %v692 = vpop.trf.xlu0
  %v693 = vpop.trf.xlu0
  %v694 = vpop.trf.xlu0
  %v695 = vpop.trf.xlu0
  %v696 = vpop.trf.xlu0
  %v697 = vpop.trf.xlu0
  %v698 = vpop.trf.xlu0
  %v700 = vsel %vm324, %v683, 0
  %702 = vmatprep.subr.mxu0 %v167
  %703 = vmatpush1.msra.mxu0 %v166
  %704 = vmatprep.subr.mxu0 0.0
  %705 = vmatpush1.msra.mxu0 0.0
  %706 = vmatprep.subr.mxu0 0.0
  %707 = vmatpush1.msra.mxu0 0.0
  %708 = vmatprep.subr.mxu0 0.0
  %709 = vmatpush1.msra.mxu0 0.0
  %710 = vmatprep.subr.mxu0 0.0
  %711 = vmatpush1.msra.mxu0 0.0
  %712 = vmatprep.subr.mxu0 0.0
  %713 = vmatpush1.msra.mxu0 0.0
  %714 = vmatprep.subr.mxu0 0.0
  %715 = vmatpush1.msra.mxu0 0.0
  %716 = vmatprep.subr.mxu0 0.0
  %717 = vmatpush1.msra.mxu0 0.0
  %718 = vmatprep.subr.mxu0 0.0
  %719 = vmatpush1.msra.mxu0 0.0
  %720 = vmatprep.subr.mxu0 0.0
  %721 = vmatpush1.msra.mxu0 0.0
  %722 = vmatprep.subr.mxu0 0.0
  %723 = vmatpush1.msra.mxu0 0.0
  %724 = vmatprep.subr.mxu0 0.0
  %725 = vmatpush1.msra.mxu0 0.0
  %726 = vmatprep.subr.mxu0 0.0
  %727 = vmatpush1.msra.mxu0 0.0
  %728 = vmatprep.subr.mxu0 0.0
  %729 = vmatpush1.msra.mxu0 0.0
  %730 = vmatprep.subr.mxu0 0.0
  %731 = vmatpush1.msra.mxu0 0.0
  %732 = vmatprep.subr.mxu0 0.0
  %733 = vmatpush1.msra.mxu0 0.0
  %734 = vmatprep.subr.mxu0 0.0
  %735 = vmatpush1.msra.mxu0 0.0
  %736 = vmatprep.subr.mxu0 0.0
  %737 = vmatpush1.msra.mxu0 0.0
  %738 = vmatprep.subr.mxu0 0.0
  %739 = vmatpush1.msra.mxu0 0.0
  %740 = vmatprep.subr.mxu0 0.0
  %741 = vmatpush1.msra.mxu0 0.0
  %742 = vmatprep.subr.mxu0 0.0
  %743 = vmatpush1.msra.mxu0 0.0
  %744 = vmatprep.subr.mxu0 0.0
  %745 = vmatpush1.msra.mxu0 0.0
  %746 = vmatprep.subr.mxu0 0.0
  %747 = vmatpush1.msra.mxu0 0.0
  %748 = vmatprep.subr.mxu0 0.0
  %749 = vmatpush1.msra.mxu0 0.0
  %750 = vmatprep.subr.mxu0 0.0
  %751 = vmatpush1.msra.mxu0 0.0
  %752 = vmatprep.subr.mxu0 0.0
  %753 = vmatpush1.msra.mxu0 0.0
  %754 = vmatprep.subr.mxu0 0.0
  %755 = vmatpush1.msra.mxu0 0.0
  %756 = vmatprep.subr.mxu0 0.0
  %757 = vmatpush1.msra.mxu0 0.0
  %758 = vmatprep.subr.mxu0 0.0
  %759 = vmatpush1.msra.mxu0 0.0
  %760 = vmatprep.subr.mxu0 0.0
  %761 = vmatpush1.msra.mxu0 0.0
  %762 = vmatprep.subr.mxu0 0.0
  %763 = vmatpush1.msra.mxu0 0.0
  %764 = vmatprep.subr.mxu0 0.0
  %765 = vmatpush1.msra.mxu0 0.0
  %766 = vmatprep.mubr.f32.mxu0 0.0
  %767 = vmatmul.mubr.f32.gmra.mrb[0].mxu0 %v700
  %v768 = vpop.f32.mrb[0].mxu0
  %v769 = vadd.f32 0.0, %v768
  %v770 = vpop.f32.mrb[0].mxu0
  %v771 = vadd.f32 0.0, %v770
  %772 = vdwg.mxu0
  %773 = vmatprep.subr.mxu0 %v169
  %774 = vmatpush1.msra.mxu0 %v168
  %775 = vmatprep.subr.mxu0 0.0
  %776 = vmatpush1.msra.mxu0 0.0
  %777 = vmatprep.subr.mxu0 0.0
  %778 = vmatpush1.msra.mxu0 0.0
  %779 = vmatprep.subr.mxu0 0.0
  %780 = vmatpush1.msra.mxu0 0.0
  %781 = vmatprep.subr.mxu0 0.0
  %782 = vmatpush1.msra.mxu0 0.0
  %783 = vmatprep.subr.mxu0 0.0
  %784 = vmatpush1.msra.mxu0 0.0
  %785 = vmatprep.subr.mxu0 0.0
  %786 = vmatpush1.msra.mxu0 0.0
  %787 = vmatprep.subr.mxu0 0.0
  %788 = vmatpush1.msra.mxu0 0.0
  %789 = vmatprep.subr.mxu0 0.0
  %790 = vmatpush1.msra.mxu0 0.0
  %791 = vmatprep.subr.mxu0 0.0
  %792 = vmatpush1.msra.mxu0 0.0
  %793 = vmatprep.subr.mxu0 0.0
  %794 = vmatpush1.msra.mxu0 0.0
  %795 = vmatprep.subr.mxu0 0.0
  %796 = vmatpush1.msra.mxu0 0.0
  %797 = vmatprep.subr.mxu0 0.0
  %798 = vmatpush1.msra.mxu0 0.0
  %799 = vmatprep.subr.mxu0 0.0
  %800 = vmatpush1.msra.mxu0 0.0
  %801 = vmatprep.subr.mxu0 0.0
  %802 = vmatpush1.msra.mxu0 0.0
  %803 = vmatprep.subr.mxu0 0.0
  %804 = vmatpush1.msra.mxu0 0.0
  %805 = vmatprep.subr.mxu0 0.0
  %806 = vmatpush1.msra.mxu0 0.0
  %807 = vmatprep.subr.mxu0 0.0
  %808 = vmatpush1.msra.mxu0 0.0
  %809 = vmatprep.subr.mxu0 0.0
  %810 = vmatpush1.msra.mxu0 0.0
  %811 = vmatprep.subr.mxu0 0.0
  %812 = vmatpush1.msra.mxu0 0.0
  %813 = vmatprep.subr.mxu0 0.0
  %814 = vmatpush1.msra.mxu0 0.0
  %815 = vmatprep.subr.mxu0 0.0
  %816 = vmatpush1.msra.mxu0 0.0
  %817 = vmatprep.subr.mxu0 0.0
  %818 = vmatpush1.msra.mxu0 0.0
  %819 = vmatprep.subr.mxu0 0.0
  %820 = vmatpush1.msra.mxu0 0.0
  %821 = vmatprep.subr.mxu0 0.0
  %822 = vmatpush1.msra.mxu0 0.0
  %823 = vmatprep.subr.mxu0 0.0
  %824 = vmatpush1.msra.mxu0 0.0
  %825 = vmatprep.subr.mxu0 0.0
  %826 = vmatpush1.msra.mxu0 0.0
  %827 = vmatprep.subr.mxu0 0.0
  %828 = vmatpush1.msra.mxu0 0.0
  %829 = vmatprep.subr.mxu0 0.0
  %830 = vmatpush1.msra.mxu0 0.0
  %831 = vmatprep.subr.mxu0 0.0
  %832 = vmatpush1.msra.mxu0 0.0
  %833 = vmatprep.subr.mxu0 0.0
  %834 = vmatpush1.msra.mxu0 0.0
  %835 = vmatprep.subr.mxu0 0.0
  %836 = vmatpush1.msra.mxu0 0.0
  %837 = vmatprep.mubr.f32.mxu0 0.0
  %838 = vmatmul.mubr.f32.gmra.mrb[0].mxu0 %v700
  %v839 = vpop.f32.mrb[0].mxu0
  %v840 = vadd.f32 0.0, %v839
  %v841 = vpop.f32.mrb[0].mxu0
  %v842 = vadd.f32 0.0, %v841
  %843 = vdwg.mxu0
  %v844 = vmul.f32 %v769, 0.125
  %v845 = vmul.f32 %v771, 0.125
  %v846 = vmul.f32 %v840, 0.125
  %v847 = vmul.f32 %v842, 0.125
  %vm848 = vcmask 1040384
  %v849 = vsel %vm848, %v432, %v645
  %v850 = vsel %vm848, %v438, %v651
  %v851 = vsel %vm848, %v444, %v657
  %v852 = vsel %vm848, %v450, %v663
  %v857 = vrot.slane %v844, 7
  %v858 = vrot.slane %v845, 7
  %v859 = vrot.slane %v846, 7
  %v860 = vrot.slane %v847, 7
  %v865 = vsel %vm848, %v628, %v857
  %v866 = vsel %vm848, %v629, %v858
  %v867 = vsel %vm848, %v630, %v859
  %v868 = vsel %vm848, %v631, %v860
  %v869 = vld [vmem:[%s2] ss:$8 sm:$0xf]
  %s870 = scalar_lea.vmem %s2, 99
  %v871 = vld [vmem:[%s870] ss:$8 sm:$0xf]
  %v873 = vlaneseq
  %v874 = vshrl.u32 %v873, 7
  %v875 = vsub.s32 0, %v874
  %v876 = vrot.slane %v869, %v875
  %v877 = vlaneseq
  %v878 = vshrl.u32 %v877, 7
  %v879 = vsub.s32 1, %v878
  %v880 = vrot.slane %v869, %v879
  %v881 = vlaneseq
  %v882 = vshrl.u32 %v881, 7
  %v883 = vsub.s32 2, %v882
  %v884 = vrot.slane %v869, %v883
  %v885 = vlaneseq
  %v886 = vshrl.u32 %v885, 7
  %v887 = vsub.s32 3, %v886
  %v888 = vrot.slane %v869, %v887
  %v893 = vmul.f32 %v876, %v849
  %v894 = vmul.f32 %v880, %v850
  %v895 = vmul.f32 %v884, %v851
  %v896 = vmul.f32 %v888, %v852
  %v898 = vlaneseq
  %v899 = vshrl.u32 %v898, 7
  %v900 = vsub.s32 0, %v899
  %v901 = vrot.slane %v871, %v900
  %v902 = vlaneseq
  %v903 = vshrl.u32 %v902, 7
  %v904 = vsub.s32 1, %v903
  %v905 = vrot.slane %v871, %v904
  %v906 = vlaneseq
  %v907 = vshrl.u32 %v906, 7
  %v908 = vsub.s32 2, %v907
  %v909 = vrot.slane %v871, %v908
  %v910 = vlaneseq
  %v911 = vshrl.u32 %v910, 7
  %v912 = vsub.s32 3, %v911
  %v913 = vrot.slane %v871, %v912
  %v918 = vmul.f32 %v901, %v865
  %v919 = vmul.f32 %v905, %v866
  %v920 = vmul.f32 %v909, %v867
  %v921 = vmul.f32 %v913, %v868
  %v922 = vadd.f32 %v893, %v918
  %v923 = vadd.f32 %v894, %v919
  %v924 = vadd.f32 %v895, %v920
  %v925 = vadd.f32 %v896, %v921
  %926 = vrot.lane.b32.xlu0 %v922, 73
  %v927 = vpop.permute.xlu0 %926
  %928 = vrot.lane.b32.xlu0 %v923, 73
  %v929 = vpop.permute.xlu0 %928
  %930 = vrot.lane.b32.xlu0 %v924, 73
  %v931 = vpop.permute.xlu0 %930
  %932 = vrot.lane.b32.xlu0 %v925, 73
  %v933 = vpop.permute.xlu0 %932
  %v934 = vlaneseq
  %v935 = vand.u32 %v934, 127
  %vm936 = vcmp.lt.s32.totalorder %v935, 73
  %v937 = vsel %vm936, %v931, %v933
  %v938 = vsel %vm936, %v929, %v931
  %v939 = vsel %vm936, %v927, %v929
  %v940 = vsel %vm936, %v933, %v927
  %v941 = vadd.f32 %v940, 0.0
  %v942 = vadd.f32 %v939, 0.0
  %v943 = vadd.f32 %v938, 0.0
  %v944 = vadd.f32 %v937, 0.0
  %s945 = scalar_lea.vmem %s2, 1
  %v946 = vld [vmem:[%s945] ss:$8 sm:$0xf]
  %s947 = scalar_lea.vmem %s2, 100
  %v948 = vld [vmem:[%s947] ss:$8 sm:$0xf]
  %v950 = vlaneseq
  %v951 = vshrl.u32 %v950, 7
  %v952 = vsub.s32 0, %v951
  %v953 = vrot.slane %v946, %v952
  %v954 = vlaneseq
  %v955 = vshrl.u32 %v954, 7
  %v956 = vsub.s32 1, %v955
  %v957 = vrot.slane %v946, %v956
  %v958 = vlaneseq
  %v959 = vshrl.u32 %v958, 7
  %v960 = vsub.s32 2, %v959
  %v961 = vrot.slane %v946, %v960
  %v962 = vlaneseq
  %v963 = vshrl.u32 %v962, 7
  %v964 = vsub.s32 3, %v963
  %v965 = vrot.slane %v946, %v964
  %v970 = vmul.f32 %v953, %v849
  %v971 = vmul.f32 %v957, %v850
  %v972 = vmul.f32 %v961, %v851
  %v973 = vmul.f32 %v965, %v852
  %v975 = vlaneseq
  %v976 = vshrl.u32 %v975, 7
  %v977 = vsub.s32 0, %v976
  %v978 = vrot.slane %v948, %v977
  %v979 = vlaneseq
  %v980 = vshrl.u32 %v979, 7
  %v981 = vsub.s32 1, %v980
  %v982 = vrot.slane %v948, %v981
  %v983 = vlaneseq
  %v984 = vshrl.u32 %v983, 7
  %v985 = vsub.s32 2, %v984
  %v986 = vrot.slane %v948, %v985
  %v987 = vlaneseq
  %v988 = vshrl.u32 %v987, 7
  %v989 = vsub.s32 3, %v988
  %v990 = vrot.slane %v948, %v989
  %v995 = vmul.f32 %v978, %v865
  %v996 = vmul.f32 %v982, %v866
  %v997 = vmul.f32 %v986, %v867
  %v998 = vmul.f32 %v990, %v868
  %v999 = vadd.f32 %v970, %v995
  %v1000 = vadd.f32 %v971, %v996
  %v1001 = vadd.f32 %v972, %v997
  %v1002 = vadd.f32 %v973, %v998
  %1003 = vrot.lane.b32.xlu0 %v999, 72
  %v1004 = vpop.permute.xlu0 %1003
  %1005 = vrot.lane.b32.xlu0 %v1000, 72
  %v1006 = vpop.permute.xlu0 %1005
  %1007 = vrot.lane.b32.xlu0 %v1001, 72
  %v1008 = vpop.permute.xlu0 %1007
  %1009 = vrot.lane.b32.xlu0 %v1002, 72
  %v1010 = vpop.permute.xlu0 %1009
  %vm1011 = vcmp.lt.s32.totalorder %v935, 72
  %v1012 = vsel %vm1011, %v1008, %v1010
  %v1013 = vsel %vm1011, %v1006, %v1008
  %v1014 = vsel %vm1011, %v1004, %v1006
  %v1015 = vsel %vm1011, %v1010, %v1004
  %v1016 = vadd.f32 %v1015, 0.0
  %v1017 = vadd.f32 %v1014, 0.0
  %v1018 = vadd.f32 %v1013, 0.0
  %v1019 = vadd.f32 %v1012, 0.0
  %s1020 = scalar_lea.vmem %s2, 2
  %v1021 = vld [vmem:[%s1020] ss:$8 sm:$0xf]
  %s1022 = scalar_lea.vmem %s2, 101
  %v1023 = vld [vmem:[%s1022] ss:$8 sm:$0xf]
  %v1025 = vlaneseq
  %v1026 = vshrl.u32 %v1025, 7
  %v1027 = vsub.s32 0, %v1026
  %v1028 = vrot.slane %v1021, %v1027
  %v1029 = vlaneseq
  %v1030 = vshrl.u32 %v1029, 7
  %v1031 = vsub.s32 1, %v1030
  %v1032 = vrot.slane %v1021, %v1031
  %v1033 = vlaneseq
  %v1034 = vshrl.u32 %v1033, 7
  %v1035 = vsub.s32 2, %v1034
  %v1036 = vrot.slane %v1021, %v1035
  %v1037 = vlaneseq
  %v1038 = vshrl.u32 %v1037, 7
  %v1039 = vsub.s32 3, %v1038
  %v1040 = vrot.slane %v1021, %v1039
  %v1045 = vmul.f32 %v1028, %v849
  %v1046 = vmul.f32 %v1032, %v850
  %v1047 = vmul.f32 %v1036, %v851
  %v1048 = vmul.f32 %v1040, %v852
  %v1050 = vlaneseq
  %v1051 = vshrl.u32 %v1050, 7
  %v1052 = vsub.s32 0, %v1051
  %v1053 = vrot.slane %v1023, %v1052
  %v1054 = vlaneseq
  %v1055 = vshrl.u32 %v1054, 7
  %v1056 = vsub.s32 1, %v1055
  %v1057 = vrot.slane %v1023, %v1056
  %v1058 = vlaneseq
  %v1059 = vshrl.u32 %v1058, 7
  %v1060 = vsub.s32 2, %v1059
  %v1061 = vrot.slane %v1023, %v1060
  %v1062 = vlaneseq
  %v1063 = vshrl.u32 %v1062, 7
  %v1064 = vsub.s32 3, %v1063
  %v1065 = vrot.slane %v1023, %v1064
  %v1070 = vmul.f32 %v1053, %v865
  %v1071 = vmul.f32 %v1057, %v866
  %v1072 = vmul.f32 %v1061, %v867
  %v1073 = vmul.f32 %v1065, %v868
  %v1074 = vadd.f32 %v1045, %v1070
  %v1075 = vadd.f32 %v1046, %v1071
  %v1076 = vadd.f32 %v1047, %v1072
  %v1077 = vadd.f32 %v1048, %v1073
  %1078 = vrot.lane.b32.xlu0 %v1074, 71
  %v1079 = vpop.permute.xlu0 %1078
  %1080 = vrot.lane.b32.xlu0 %v1075, 71
  %v1081 = vpop.permute.xlu0 %1080
  %1082 = vrot.lane.b32.xlu0 %v1076, 71
  %v1083 = vpop.permute.xlu0 %1082
  %1084 = vrot.lane.b32.xlu0 %v1077, 71
  %v1085 = vpop.permute.xlu0 %1084
  %vm1086 = vcmp.lt.s32.totalorder %v935, 71
  %v1087 = vsel %vm1086, %v1083, %v1085
  %v1088 = vsel %vm1086, %v1081, %v1083
  %v1089 = vsel %vm1086, %v1079, %v1081
  %v1090 = vsel %vm1086, %v1085, %v1079
  %v1091 = vadd.f32 %v1090, 0.0
  %v1092 = vadd.f32 %v1089, 0.0
  %v1093 = vadd.f32 %v1088, 0.0
  %v1094 = vadd.f32 %v1087, 0.0
  %s1095 = scalar_lea.vmem %s2, 3
  %v1096 = vld [vmem:[%s1095] ss:$8 sm:$0xf]
  %s1097 = scalar_lea.vmem %s2, 102
  %v1098 = vld [vmem:[%s1097] ss:$8 sm:$0xf]
  %v1100 = vlaneseq
  %v1101 = vshrl.u32 %v1100, 7
  %v1102 = vsub.s32 0, %v1101
  %v1103 = vrot.slane %v1096, %v1102
  %v1104 = vlaneseq
  %v1105 = vshrl.u32 %v1104, 7
  %v1106 = vsub.s32 1, %v1105
  %v1107 = vrot.slane %v1096, %v1106
  %v1108 = vlaneseq
  %v1109 = vshrl.u32 %v1108, 7
  %v1110 = vsub.s32 2, %v1109
  %v1111 = vrot.slane %v1096, %v1110
  %v1112 = vlaneseq
  %v1113 = vshrl.u32 %v1112, 7
  %v1114 = vsub.s32 3, %v1113
  %v1115 = vrot.slane %v1096, %v1114
  %v1120 = vmul.f32 %v1103, %v849
  %v1121 = vmul.f32 %v1107, %v850
  %v1122 = vmul.f32 %v1111, %v851
  %v1123 = vmul.f32 %v1115, %v852
  %v1125 = vlaneseq
  %v1126 = vshrl.u32 %v1125, 7
  %v1127 = vsub.s32 0, %v1126
  %v1128 = vrot.slane %v1098, %v1127
  %v1129 = vlaneseq
  %v1130 = vshrl.u32 %v1129, 7
  %v1131 = vsub.s32 1, %v1130
  %v1132 = vrot.slane %v1098, %v1131
  %v1133 = vlaneseq
  %v1134 = vshrl.u32 %v1133, 7
  %v1135 = vsub.s32 2, %v1134
  %v1136 = vrot.slane %v1098, %v1135
  %v1137 = vlaneseq
  %v1138 = vshrl.u32 %v1137, 7
  %v1139 = vsub.s32 3, %v1138
  %v1140 = vrot.slane %v1098, %v1139
  %v1145 = vmul.f32 %v1128, %v865
  %v1146 = vmul.f32 %v1132, %v866
  %v1147 = vmul.f32 %v1136, %v867
  %v1148 = vmul.f32 %v1140, %v868
  %v1149 = vadd.f32 %v1120, %v1145
  %v1150 = vadd.f32 %v1121, %v1146
  %v1151 = vadd.f32 %v1122, %v1147
  %v1152 = vadd.f32 %v1123, %v1148
  %1153 = vrot.lane.b32.xlu0 %v1149, 65
  %v1154 = vpop.permute.xlu0 %1153
  %1155 = vrot.lane.b32.xlu0 %v1150, 65
  %v1156 = vpop.permute.xlu0 %1155
  %1157 = vrot.lane.b32.xlu0 %v1151, 65
  %v1158 = vpop.permute.xlu0 %1157
  %1159 = vrot.lane.b32.xlu0 %v1152, 65
  %v1160 = vpop.permute.xlu0 %1159
  %vm1161 = vcmp.lt.s32.totalorder %v935, 65
  %v1162 = vsel %vm1161, %v1158, %v1160
  %v1163 = vsel %vm1161, %v1156, %v1158
  %v1164 = vsel %vm1161, %v1154, %v1156
  %v1165 = vsel %vm1161, %v1160, %v1154
  %v1166 = vadd.f32 %v941, %v1165
  %v1167 = vadd.f32 %v942, %v1164
  %v1168 = vadd.f32 %v943, %v1163
  %v1169 = vadd.f32 %v944, %v1162
  %s1170 = scalar_lea.vmem %s2, 4
  %v1171 = vld [vmem:[%s1170] ss:$8 sm:$0xf]
  %s1172 = scalar_lea.vmem %s2, 103
  %v1173 = vld [vmem:[%s1172] ss:$8 sm:$0xf]
  %v1175 = vlaneseq
  %v1176 = vshrl.u32 %v1175, 7
  %v1177 = vsub.s32 0, %v1176
  %v1178 = vrot.slane %v1171, %v1177
  %v1179 = vlaneseq
  %v1180 = vshrl.u32 %v1179, 7
  %v1181 = vsub.s32 1, %v1180
  %v1182 = vrot.slane %v1171, %v1181
  %v1183 = vlaneseq
  %v1184 = vshrl.u32 %v1183, 7
  %v1185 = vsub.s32 2, %v1184
  %v1186 = vrot.slane %v1171, %v1185
  %v1187 = vlaneseq
  %v1188 = vshrl.u32 %v1187, 7
  %v1189 = vsub.s32 3, %v1188
  %v1190 = vrot.slane %v1171, %v1189
  %v1195 = vmul.f32 %v1178, %v849
  %v1196 = vmul.f32 %v1182, %v850
  %v1197 = vmul.f32 %v1186, %v851
  %v1198 = vmul.f32 %v1190, %v852
  %v1200 = vlaneseq
  %v1201 = vshrl.u32 %v1200, 7
  %v1202 = vsub.s32 0, %v1201
  %v1203 = vrot.slane %v1173, %v1202
  %v1204 = vlaneseq
  %v1205 = vshrl.u32 %v1204, 7
  %v1206 = vsub.s32 1, %v1205
  %v1207 = vrot.slane %v1173, %v1206
  %v1208 = vlaneseq
  %v1209 = vshrl.u32 %v1208, 7
  %v1210 = vsub.s32 2, %v1209
  %v1211 = vrot.slane %v1173, %v1210
  %v1212 = vlaneseq
  %v1213 = vshrl.u32 %v1212, 7
  %v1214 = vsub.s32 3, %v1213
  %v1215 = vrot.slane %v1173, %v1214
  %v1220 = vmul.f32 %v1203, %v865
  %v1221 = vmul.f32 %v1207, %v866
  %v1222 = vmul.f32 %v1211, %v867
  %v1223 = vmul.f32 %v1215, %v868
  %v1224 = vadd.f32 %v1195, %v1220
  %v1225 = vadd.f32 %v1196, %v1221
  %v1226 = vadd.f32 %v1197, %v1222
  %v1227 = vadd.f32 %v1198, %v1223
  %1228 = vrot.lane.b32.xlu0 %v1224, 64
  %v1229 = vpop.permute.xlu0 %1228
  %1230 = vrot.lane.b32.xlu0 %v1225, 64
  %v1231 = vpop.permute.xlu0 %1230
  %1232 = vrot.lane.b32.xlu0 %v1226, 64
  %v1233 = vpop.permute.xlu0 %1232
  %1234 = vrot.lane.b32.xlu0 %v1227, 64
  %v1235 = vpop.permute.xlu0 %1234
  %vm1236 = vcmp.lt.s32.totalorder %v935, 64
  %v1237 = vsel %vm1236, %v1233, %v1235
  %v1238 = vsel %vm1236, %v1231, %v1233
  %v1239 = vsel %vm1236, %v1229, %v1231
  %v1240 = vsel %vm1236, %v1235, %v1229
  %v1241 = vadd.f32 %v1016, %v1240
  %v1242 = vadd.f32 %v1017, %v1239
  %v1243 = vadd.f32 %v1018, %v1238
  %v1244 = vadd.f32 %v1019, %v1237
  %s1245 = scalar_lea.vmem %s2, 5
  %v1246 = vld [vmem:[%s1245] ss:$8 sm:$0xf]
  %s1247 = scalar_lea.vmem %s2, 128
  %v1248 = vld [vmem:[%s1247] ss:$8 sm:$0xf]
  %v1250 = vlaneseq
  %v1251 = vshrl.u32 %v1250, 7
  %v1252 = vsub.s32 0, %v1251
  %v1253 = vrot.slane %v1246, %v1252
  %v1254 = vlaneseq
  %v1255 = vshrl.u32 %v1254, 7
  %v1256 = vsub.s32 1, %v1255
  %v1257 = vrot.slane %v1246, %v1256
  %v1258 = vlaneseq
  %v1259 = vshrl.u32 %v1258, 7
  %v1260 = vsub.s32 2, %v1259
  %v1261 = vrot.slane %v1246, %v1260
  %v1262 = vlaneseq
  %v1263 = vshrl.u32 %v1262, 7
  %v1264 = vsub.s32 3, %v1263
  %v1265 = vrot.slane %v1246, %v1264
  %v1270 = vmul.f32 %v1253, %v849
  %v1271 = vmul.f32 %v1257, %v850
  %v1272 = vmul.f32 %v1261, %v851
  %v1273 = vmul.f32 %v1265, %v852
  %v1275 = vlaneseq
  %v1276 = vshrl.u32 %v1275, 7
  %v1277 = vsub.s32 0, %v1276
  %v1278 = vrot.slane %v1248, %v1277
  %v1279 = vlaneseq
  %v1280 = vshrl.u32 %v1279, 7
  %v1281 = vsub.s32 1, %v1280
  %v1282 = vrot.slane %v1248, %v1281
  %v1283 = vlaneseq
  %v1284 = vshrl.u32 %v1283, 7
  %v1285 = vsub.s32 2, %v1284
  %v1286 = vrot.slane %v1248, %v1285
  %v1287 = vlaneseq
  %v1288 = vshrl.u32 %v1287, 7
  %v1289 = vsub.s32 3, %v1288
  %v1290 = vrot.slane %v1248, %v1289
  %v1295 = vmul.f32 %v1278, %v865
  %v1296 = vmul.f32 %v1282, %v866
  %v1297 = vmul.f32 %v1286, %v867
  %v1298 = vmul.f32 %v1290, %v868
  %v1299 = vadd.f32 %v1270, %v1295
  %v1300 = vadd.f32 %v1271, %v1296
  %v1301 = vadd.f32 %v1272, %v1297
  %v1302 = vadd.f32 %v1273, %v1298
  %1303 = vrot.lane.b32.xlu0 %v1299, 63
  %v1304 = vpop.permute.xlu0 %1303
  %1305 = vrot.lane.b32.xlu0 %v1300, 63
  %v1306 = vpop.permute.xlu0 %1305
  %1307 = vrot.lane.b32.xlu0 %v1301, 63
  %v1308 = vpop.permute.xlu0 %1307
  %1309 = vrot.lane.b32.xlu0 %v1302, 63
  %v1310 = vpop.permute.xlu0 %1309
  %vm1311 = vcmp.lt.s32.totalorder %v935, 63
  %v1312 = vsel %vm1311, %v1308, %v1310
  %v1313 = vsel %vm1311, %v1306, %v1308
  %v1314 = vsel %vm1311, %v1304, %v1306
  %v1315 = vsel %vm1311, %v1310, %v1304
  %v1316 = vadd.f32 %v1091, %v1315
  %v1317 = vadd.f32 %v1092, %v1314
  %v1318 = vadd.f32 %v1093, %v1313
  %v1319 = vadd.f32 %v1094, %v1312
  %s1320 = scalar_lea.vmem %s2, 6
  %v1321 = vld [vmem:[%s1320] ss:$8 sm:$0xf]
  %s1322 = scalar_lea.vmem %s2, 129
  %v1323 = vld [vmem:[%s1322] ss:$8 sm:$0xf]
  %v1325 = vlaneseq
  %v1326 = vshrl.u32 %v1325, 7
  %v1327 = vsub.s32 0, %v1326
  %v1328 = vrot.slane %v1321, %v1327
  %v1329 = vlaneseq
  %v1330 = vshrl.u32 %v1329, 7
  %v1331 = vsub.s32 1, %v1330
  %v1332 = vrot.slane %v1321, %v1331
  %v1333 = vlaneseq
  %v1334 = vshrl.u32 %v1333, 7
  %v1335 = vsub.s32 2, %v1334
  %v1336 = vrot.slane %v1321, %v1335
  %v1337 = vlaneseq
  %v1338 = vshrl.u32 %v1337, 7
  %v1339 = vsub.s32 3, %v1338
  %v1340 = vrot.slane %v1321, %v1339
  %v1345 = vmul.f32 %v1328, %v849
  %v1346 = vmul.f32 %v1332, %v850
  %v1347 = vmul.f32 %v1336, %v851
  %v1348 = vmul.f32 %v1340, %v852
  %v1350 = vlaneseq
  %v1351 = vshrl.u32 %v1350, 7
  %v1352 = vsub.s32 0, %v1351
  %v1353 = vrot.slane %v1323, %v1352
  %v1354 = vlaneseq
  %v1355 = vshrl.u32 %v1354, 7
  %v1356 = vsub.s32 1, %v1355
  %v1357 = vrot.slane %v1323, %v1356
  %v1358 = vlaneseq
  %v1359 = vshrl.u32 %v1358, 7
  %v1360 = vsub.s32 2, %v1359
  %v1361 = vrot.slane %v1323, %v1360
  %v1362 = vlaneseq
  %v1363 = vshrl.u32 %v1362, 7
  %v1364 = vsub.s32 3, %v1363
  %v1365 = vrot.slane %v1323, %v1364
  %v1370 = vmul.f32 %v1353, %v865
  %v1371 = vmul.f32 %v1357, %v866
  %v1372 = vmul.f32 %v1361, %v867
  %v1373 = vmul.f32 %v1365, %v868
  %v1374 = vadd.f32 %v1345, %v1370
  %v1375 = vadd.f32 %v1346, %v1371
  %v1376 = vadd.f32 %v1347, %v1372
  %v1377 = vadd.f32 %v1348, %v1373
  %1378 = vrot.lane.b32.xlu0 %v1374, 57
  %v1379 = vpop.permute.xlu0 %1378
  %1380 = vrot.lane.b32.xlu0 %v1375, 57
  %v1381 = vpop.permute.xlu0 %1380
  %1382 = vrot.lane.b32.xlu0 %v1376, 57
  %v1383 = vpop.permute.xlu0 %1382
  %1384 = vrot.lane.b32.xlu0 %v1377, 57
  %v1385 = vpop.permute.xlu0 %1384
  %vm1386 = vcmp.lt.s32.totalorder %v935, 57
  %v1387 = vsel %vm1386, %v1383, %v1385
  %v1388 = vsel %vm1386, %v1381, %v1383
  %v1389 = vsel %vm1386, %v1379, %v1381
  %v1390 = vsel %vm1386, %v1385, %v1379
  %v1391 = vadd.f32 %v1166, %v1390
  %v1392 = vadd.f32 %v1167, %v1389
  %v1393 = vadd.f32 %v1168, %v1388
  %v1394 = vadd.f32 %v1169, %v1387
  %s1395 = scalar_lea.vmem %s2, 7
  %v1396 = vld [vmem:[%s1395] ss:$8 sm:$0xf]
  %s1397 = scalar_lea.vmem %s2, 130
  %v1398 = vld [vmem:[%s1397] ss:$8 sm:$0xf]
  %v1400 = vlaneseq
  %v1401 = vshrl.u32 %v1400, 7
  %v1402 = vsub.s32 0, %v1401
  %v1403 = vrot.slane %v1396, %v1402
  %v1404 = vlaneseq
  %v1405 = vshrl.u32 %v1404, 7
  %v1406 = vsub.s32 1, %v1405
  %v1407 = vrot.slane %v1396, %v1406
  %v1408 = vlaneseq
  %v1409 = vshrl.u32 %v1408, 7
  %v1410 = vsub.s32 2, %v1409
  %v1411 = vrot.slane %v1396, %v1410
  %v1412 = vlaneseq
  %v1413 = vshrl.u32 %v1412, 7
  %v1414 = vsub.s32 3, %v1413
  %v1415 = vrot.slane %v1396, %v1414
  %v1420 = vmul.f32 %v1403, %v849
  %v1421 = vmul.f32 %v1407, %v850
  %v1422 = vmul.f32 %v1411, %v851
  %v1423 = vmul.f32 %v1415, %v852
  %v1425 = vlaneseq
  %v1426 = vshrl.u32 %v1425, 7
  %v1427 = vsub.s32 0, %v1426
  %v1428 = vrot.slane %v1398, %v1427
  %v1429 = vlaneseq
  %v1430 = vshrl.u32 %v1429, 7
  %v1431 = vsub.s32 1, %v1430
  %v1432 = vrot.slane %v1398, %v1431
  %v1433 = vlaneseq
  %v1434 = vshrl.u32 %v1433, 7
  %v1435 = vsub.s32 2, %v1434
  %v1436 = vrot.slane %v1398, %v1435
  %v1437 = vlaneseq
  %v1438 = vshrl.u32 %v1437, 7
  %v1439 = vsub.s32 3, %v1438
  %v1440 = vrot.slane %v1398, %v1439
  %v1445 = vmul.f32 %v1428, %v865
  %v1446 = vmul.f32 %v1432, %v866
  %v1447 = vmul.f32 %v1436, %v867
  %v1448 = vmul.f32 %v1440, %v868
  %v1449 = vadd.f32 %v1420, %v1445
  %v1450 = vadd.f32 %v1421, %v1446
  %v1451 = vadd.f32 %v1422, %v1447
  %v1452 = vadd.f32 %v1423, %v1448
  %1453 = vrot.lane.b32.xlu0 %v1449, 56
  %v1454 = vpop.permute.xlu0 %1453
  %1455 = vrot.lane.b32.xlu0 %v1450, 56
  %v1456 = vpop.permute.xlu0 %1455
  %1457 = vrot.lane.b32.xlu0 %v1451, 56
  %v1458 = vpop.permute.xlu0 %1457
  %1459 = vrot.lane.b32.xlu0 %v1452, 56
  %v1460 = vpop.permute.xlu0 %1459
  %vm1461 = vcmp.lt.s32.totalorder %v935, 56
  %v1462 = vsel %vm1461, %v1458, %v1460
  %v1463 = vsel %vm1461, %v1456, %v1458
  %v1464 = vsel %vm1461, %v1454, %v1456
  %v1465 = vsel %vm1461, %v1460, %v1454
  %v1466 = vadd.f32 %v1241, %v1465
  %v1467 = vadd.f32 %v1242, %v1464
  %v1468 = vadd.f32 %v1243, %v1463
  %v1469 = vadd.f32 %v1244, %v1462
  %s1470 = scalar_lea.vmem %s2, 32
  %v1471 = vld [vmem:[%s1470] ss:$8 sm:$0xf]
  %s1472 = scalar_lea.vmem %s2, 131
  %v1473 = vld [vmem:[%s1472] ss:$8 sm:$0xf]
  %v1475 = vlaneseq
  %v1476 = vshrl.u32 %v1475, 7
  %v1477 = vsub.s32 0, %v1476
  %v1478 = vrot.slane %v1471, %v1477
  %v1479 = vlaneseq
  %v1480 = vshrl.u32 %v1479, 7
  %v1481 = vsub.s32 1, %v1480
  %v1482 = vrot.slane %v1471, %v1481
  %v1483 = vlaneseq
  %v1484 = vshrl.u32 %v1483, 7
  %v1485 = vsub.s32 2, %v1484
  %v1486 = vrot.slane %v1471, %v1485
  %v1487 = vlaneseq
  %v1488 = vshrl.u32 %v1487, 7
  %v1489 = vsub.s32 3, %v1488
  %v1490 = vrot.slane %v1471, %v1489
  %v1495 = vmul.f32 %v1478, %v849
  %v1496 = vmul.f32 %v1482, %v850
  %v1497 = vmul.f32 %v1486, %v851
  %v1498 = vmul.f32 %v1490, %v852
  %v1500 = vlaneseq
  %v1501 = vshrl.u32 %v1500, 7
  %v1502 = vsub.s32 0, %v1501
  %v1503 = vrot.slane %v1473, %v1502
  %v1504 = vlaneseq
  %v1505 = vshrl.u32 %v1504, 7
  %v1506 = vsub.s32 1, %v1505
  %v1507 = vrot.slane %v1473, %v1506
  %v1508 = vlaneseq
  %v1509 = vshrl.u32 %v1508, 7
  %v1510 = vsub.s32 2, %v1509
  %v1511 = vrot.slane %v1473, %v1510
  %v1512 = vlaneseq
  %v1513 = vshrl.u32 %v1512, 7
  %v1514 = vsub.s32 3, %v1513
  %v1515 = vrot.slane %v1473, %v1514
  %v1520 = vmul.f32 %v1503, %v865
  %v1521 = vmul.f32 %v1507, %v866
  %v1522 = vmul.f32 %v1511, %v867
  %v1523 = vmul.f32 %v1515, %v868
  %v1524 = vadd.f32 %v1495, %v1520
  %v1525 = vadd.f32 %v1496, %v1521
  %v1526 = vadd.f32 %v1497, %v1522
  %v1527 = vadd.f32 %v1498, %v1523
  %1528 = vrot.lane.b32.xlu0 %v1524, 55
  %v1529 = vpop.permute.xlu0 %1528
  %1530 = vrot.lane.b32.xlu0 %v1525, 55
  %v1531 = vpop.permute.xlu0 %1530
  %1532 = vrot.lane.b32.xlu0 %v1526, 55
  %v1533 = vpop.permute.xlu0 %1532
  %1534 = vrot.lane.b32.xlu0 %v1527, 55
  %v1535 = vpop.permute.xlu0 %1534
  %vm1536 = vcmp.lt.s32.totalorder %v935, 55
  %v1537 = vsel %vm1536, %v1533, %v1535
  %v1538 = vsel %vm1536, %v1531, %v1533
  %v1539 = vsel %vm1536, %v1529, %v1531
  %v1540 = vsel %vm1536, %v1535, %v1529
  %v1541 = vadd.f32 %v1316, %v1540
  %v1542 = vadd.f32 %v1317, %v1539
  %v1543 = vadd.f32 %v1318, %v1538
  %v1544 = vadd.f32 %v1319, %v1537
  %s1545 = scalar_lea.vmem %s2, 33
  %v1546 = vld [vmem:[%s1545] ss:$8 sm:$0xf]
  %s1547 = scalar_lea.vmem %s2, 132
  %v1548 = vld [vmem:[%s1547] ss:$8 sm:$0xf]
  %v1550 = vlaneseq
  %v1551 = vshrl.u32 %v1550, 7
  %v1552 = vsub.s32 0, %v1551
  %v1553 = vrot.slane %v1546, %v1552
  %v1554 = vlaneseq
  %v1555 = vshrl.u32 %v1554, 7
  %v1556 = vsub.s32 1, %v1555
  %v1557 = vrot.slane %v1546, %v1556
  %v1558 = vlaneseq
  %v1559 = vshrl.u32 %v1558, 7
  %v1560 = vsub.s32 2, %v1559
  %v1561 = vrot.slane %v1546, %v1560
  %v1562 = vlaneseq
  %v1563 = vshrl.u32 %v1562, 7
  %v1564 = vsub.s32 3, %v1563
  %v1565 = vrot.slane %v1546, %v1564
  %v1570 = vmul.f32 %v1553, %v849
  %v1571 = vmul.f32 %v1557, %v850
  %v1572 = vmul.f32 %v1561, %v851
  %v1573 = vmul.f32 %v1565, %v852
  %v1575 = vlaneseq
  %v1576 = vshrl.u32 %v1575, 7
  %v1577 = vsub.s32 0, %v1576
  %v1578 = vrot.slane %v1548, %v1577
  %v1579 = vlaneseq
  %v1580 = vshrl.u32 %v1579, 7
  %v1581 = vsub.s32 1, %v1580
  %v1582 = vrot.slane %v1548, %v1581
  %v1583 = vlaneseq
  %v1584 = vshrl.u32 %v1583, 7
  %v1585 = vsub.s32 2, %v1584
  %v1586 = vrot.slane %v1548, %v1585
  %v1587 = vlaneseq
  %v1588 = vshrl.u32 %v1587, 7
  %v1589 = vsub.s32 3, %v1588
  %v1590 = vrot.slane %v1548, %v1589
  %v1595 = vmul.f32 %v1578, %v865
  %v1596 = vmul.f32 %v1582, %v866
  %v1597 = vmul.f32 %v1586, %v867
  %v1598 = vmul.f32 %v1590, %v868
  %v1599 = vadd.f32 %v1570, %v1595
  %v1600 = vadd.f32 %v1571, %v1596
  %v1601 = vadd.f32 %v1572, %v1597
  %v1602 = vadd.f32 %v1573, %v1598
  %1603 = vrot.lane.b32.xlu0 %v1599, 9
  %v1604 = vpop.permute.xlu0 %1603
  %1605 = vrot.lane.b32.xlu0 %v1600, 9
  %v1606 = vpop.permute.xlu0 %1605
  %1607 = vrot.lane.b32.xlu0 %v1601, 9
  %v1608 = vpop.permute.xlu0 %1607
  %1609 = vrot.lane.b32.xlu0 %v1602, 9
  %v1610 = vpop.permute.xlu0 %1609
  %vm1611 = vcmp.lt.s32.totalorder %v935, 9
  %v1612 = vsel %vm1611, %v1608, %v1610
  %v1613 = vsel %vm1611, %v1606, %v1608
  %v1614 = vsel %vm1611, %v1604, %v1606
  %v1615 = vsel %vm1611, %v1610, %v1604
  %v1616 = vadd.f32 %v1391, %v1615
  %v1617 = vadd.f32 %v1392, %v1614
  %v1618 = vadd.f32 %v1393, %v1613
  %v1619 = vadd.f32 %v1394, %v1612
  %s1620 = scalar_lea.vmem %s2, 34
  %v1621 = vld [vmem:[%s1620] ss:$8 sm:$0xf]
  %s1622 = scalar_lea.vmem %s2, 133
  %v1623 = vld [vmem:[%s1622] ss:$8 sm:$0xf]
  %v1625 = vlaneseq
  %v1626 = vshrl.u32 %v1625, 7
  %v1627 = vsub.s32 0, %v1626
  %v1628 = vrot.slane %v1621, %v1627
  %v1629 = vlaneseq
  %v1630 = vshrl.u32 %v1629, 7
  %v1631 = vsub.s32 1, %v1630
  %v1632 = vrot.slane %v1621, %v1631
  %v1633 = vlaneseq
  %v1634 = vshrl.u32 %v1633, 7
  %v1635 = vsub.s32 2, %v1634
  %v1636 = vrot.slane %v1621, %v1635
  %v1637 = vlaneseq
  %v1638 = vshrl.u32 %v1637, 7
  %v1639 = vsub.s32 3, %v1638
  %v1640 = vrot.slane %v1621, %v1639
  %v1645 = vmul.f32 %v1628, %v849
  %v1646 = vmul.f32 %v1632, %v850
  %v1647 = vmul.f32 %v1636, %v851
  %v1648 = vmul.f32 %v1640, %v852
  %v1650 = vlaneseq
  %v1651 = vshrl.u32 %v1650, 7
  %v1652 = vsub.s32 0, %v1651
  %v1653 = vrot.slane %v1623, %v1652
  %v1654 = vlaneseq
  %v1655 = vshrl.u32 %v1654, 7
  %v1656 = vsub.s32 1, %v1655
  %v1657 = vrot.slane %v1623, %v1656
  %v1658 = vlaneseq
  %v1659 = vshrl.u32 %v1658, 7
  %v1660 = vsub.s32 2, %v1659
  %v1661 = vrot.slane %v1623, %v1660
  %v1662 = vlaneseq
  %v1663 = vshrl.u32 %v1662, 7
  %v1664 = vsub.s32 3, %v1663
  %v1665 = vrot.slane %v1623, %v1664
  %v1670 = vmul.f32 %v1653, %v865
  %v1671 = vmul.f32 %v1657, %v866
  %v1672 = vmul.f32 %v1661, %v867
  %v1673 = vmul.f32 %v1665, %v868
  %v1674 = vadd.f32 %v1645, %v1670
  %v1675 = vadd.f32 %v1646, %v1671
  %v1676 = vadd.f32 %v1647, %v1672
  %v1677 = vadd.f32 %v1648, %v1673
  %1678 = vrot.lane.b32.xlu0 %v1674, 8
  %v1679 = vpop.permute.xlu0 %1678
  %1680 = vrot.lane.b32.xlu0 %v1675, 8
  %v1681 = vpop.permute.xlu0 %1680
  %1682 = vrot.lane.b32.xlu0 %v1676, 8
  %v1683 = vpop.permute.xlu0 %1682
  %1684 = vrot.lane.b32.xlu0 %v1677, 8
  %v1685 = vpop.permute.xlu0 %1684
  %vm1686 = vcmp.lt.s32.totalorder %v935, 8
  %v1687 = vsel %vm1686, %v1683, %v1685
  %v1688 = vsel %vm1686, %v1681, %v1683
  %v1689 = vsel %vm1686, %v1679, %v1681
  %v1690 = vsel %vm1686, %v1685, %v1679
  %v1691 = vadd.f32 %v1466, %v1690
  %v1692 = vadd.f32 %v1467, %v1689
  %v1693 = vadd.f32 %v1468, %v1688
  %v1694 = vadd.f32 %v1469, %v1687
  %s1695 = scalar_lea.vmem %s2, 35
  %v1696 = vld [vmem:[%s1695] ss:$8 sm:$0xf]
  %s1697 = scalar_lea.vmem %s2, 134
  %v1698 = vld [vmem:[%s1697] ss:$8 sm:$0xf]
  %v1700 = vlaneseq
  %v1701 = vshrl.u32 %v1700, 7
  %v1702 = vsub.s32 0, %v1701
  %v1703 = vrot.slane %v1696, %v1702
  %v1704 = vlaneseq
  %v1705 = vshrl.u32 %v1704, 7
  %v1706 = vsub.s32 1, %v1705
  %v1707 = vrot.slane %v1696, %v1706
  %v1708 = vlaneseq
  %v1709 = vshrl.u32 %v1708, 7
  %v1710 = vsub.s32 2, %v1709
  %v1711 = vrot.slane %v1696, %v1710
  %v1712 = vlaneseq
  %v1713 = vshrl.u32 %v1712, 7
  %v1714 = vsub.s32 3, %v1713
  %v1715 = vrot.slane %v1696, %v1714
  %v1720 = vmul.f32 %v1703, %v849
  %v1721 = vmul.f32 %v1707, %v850
  %v1722 = vmul.f32 %v1711, %v851
  %v1723 = vmul.f32 %v1715, %v852
  %v1725 = vlaneseq
  %v1726 = vshrl.u32 %v1725, 7
  %v1727 = vsub.s32 0, %v1726
  %v1728 = vrot.slane %v1698, %v1727
  %v1729 = vlaneseq
  %v1730 = vshrl.u32 %v1729, 7
  %v1731 = vsub.s32 1, %v1730
  %v1732 = vrot.slane %v1698, %v1731
  %v1733 = vlaneseq
  %v1734 = vshrl.u32 %v1733, 7
  %v1735 = vsub.s32 2, %v1734
  %v1736 = vrot.slane %v1698, %v1735
  %v1737 = vlaneseq
  %v1738 = vshrl.u32 %v1737, 7
  %v1739 = vsub.s32 3, %v1738
  %v1740 = vrot.slane %v1698, %v1739
  %v1745 = vmul.f32 %v1728, %v865
  %v1746 = vmul.f32 %v1732, %v866
  %v1747 = vmul.f32 %v1736, %v867
  %v1748 = vmul.f32 %v1740, %v868
  %v1749 = vadd.f32 %v1720, %v1745
  %v1750 = vadd.f32 %v1721, %v1746
  %v1751 = vadd.f32 %v1722, %v1747
  %v1752 = vadd.f32 %v1723, %v1748
  %1753 = vrot.lane.b32.xlu0 %v1749, 7
  %v1754 = vpop.permute.xlu0 %1753
  %1755 = vrot.lane.b32.xlu0 %v1750, 7
  %v1756 = vpop.permute.xlu0 %1755
  %1757 = vrot.lane.b32.xlu0 %v1751, 7
  %v1758 = vpop.permute.xlu0 %1757
  %1759 = vrot.lane.b32.xlu0 %v1752, 7
  %v1760 = vpop.permute.xlu0 %1759
  %vm1761 = vcmp.lt.s32.totalorder %v935, 7
  %v1762 = vsel %vm1761, %v1758, %v1760
  %v1763 = vsel %vm1761, %v1756, %v1758
  %v1764 = vsel %vm1761, %v1754, %v1756
  %v1765 = vsel %vm1761, %v1760, %v1754
  %v1766 = vadd.f32 %v1541, %v1765
  %v1767 = vadd.f32 %v1542, %v1764
  %v1768 = vadd.f32 %v1543, %v1763
  %v1769 = vadd.f32 %v1544, %v1762
  %s1770 = scalar_lea.vmem %s2, 36
  %v1771 = vld [vmem:[%s1770] ss:$8 sm:$0xf]
  %s1772 = scalar_lea.vmem %s2, 135
  %v1773 = vld [vmem:[%s1772] ss:$8 sm:$0xf]
  %v1775 = vlaneseq
  %v1776 = vshrl.u32 %v1775, 7
  %v1777 = vsub.s32 0, %v1776
  %v1778 = vrot.slane %v1771, %v1777
  %v1779 = vlaneseq
  %v1780 = vshrl.u32 %v1779, 7
  %v1781 = vsub.s32 1, %v1780
  %v1782 = vrot.slane %v1771, %v1781
  %v1783 = vlaneseq
  %v1784 = vshrl.u32 %v1783, 7
  %v1785 = vsub.s32 2, %v1784
  %v1786 = vrot.slane %v1771, %v1785
  %v1787 = vlaneseq
  %v1788 = vshrl.u32 %v1787, 7
  %v1789 = vsub.s32 3, %v1788
  %v1790 = vrot.slane %v1771, %v1789
  %v1795 = vmul.f32 %v1778, %v849
  %v1796 = vmul.f32 %v1782, %v850
  %v1797 = vmul.f32 %v1786, %v851
  %v1798 = vmul.f32 %v1790, %v852
  %v1800 = vlaneseq
  %v1801 = vshrl.u32 %v1800, 7
  %v1802 = vsub.s32 0, %v1801
  %v1803 = vrot.slane %v1773, %v1802
  %v1804 = vlaneseq
  %v1805 = vshrl.u32 %v1804, 7
  %v1806 = vsub.s32 1, %v1805
  %v1807 = vrot.slane %v1773, %v1806
  %v1808 = vlaneseq
  %v1809 = vshrl.u32 %v1808, 7
  %v1810 = vsub.s32 2, %v1809
  %v1811 = vrot.slane %v1773, %v1810
  %v1812 = vlaneseq
  %v1813 = vshrl.u32 %v1812, 7
  %v1814 = vsub.s32 3, %v1813
  %v1815 = vrot.slane %v1773, %v1814
  %v1820 = vmul.f32 %v1803, %v865
  %v1821 = vmul.f32 %v1807, %v866
  %v1822 = vmul.f32 %v1811, %v867
  %v1823 = vmul.f32 %v1815, %v868
  %v1824 = vadd.f32 %v1795, %v1820
  %v1825 = vadd.f32 %v1796, %v1821
  %v1826 = vadd.f32 %v1797, %v1822
  %v1827 = vadd.f32 %v1798, %v1823
  %1828 = vrot.lane.b32.xlu0 %v1824, 1
  %v1829 = vpop.permute.xlu0 %1828
  %1830 = vrot.lane.b32.xlu0 %v1825, 1
  %v1831 = vpop.permute.xlu0 %1830
  %1832 = vrot.lane.b32.xlu0 %v1826, 1
  %v1833 = vpop.permute.xlu0 %1832
  %1834 = vrot.lane.b32.xlu0 %v1827, 1
  %v1835 = vpop.permute.xlu0 %1834
  %vm1836 = vcmp.lt.s32.totalorder %v935, 1
  %v1837 = vsel %vm1836, %v1833, %v1835
  %v1838 = vsel %vm1836, %v1831, %v1833
  %v1839 = vsel %vm1836, %v1829, %v1831
  %v1840 = vsel %vm1836, %v1835, %v1829
  %v1841 = vadd.f32 %v1616, %v1840
  %v1842 = vadd.f32 %v1617, %v1839
  %v1843 = vadd.f32 %v1618, %v1838
  %v1844 = vadd.f32 %v1619, %v1837
  %s1845 = scalar_lea.vmem %s2, 37
  %v1846 = vld [vmem:[%s1845] ss:$8 sm:$0xf]
  %s1847 = scalar_lea.vmem %s2, 160
  %v1848 = vld [vmem:[%s1847] ss:$8 sm:$0xf]
  %v1850 = vlaneseq
  %v1851 = vshrl.u32 %v1850, 7
  %v1852 = vsub.s32 0, %v1851
  %v1853 = vrot.slane %v1846, %v1852
  %v1854 = vlaneseq
  %v1855 = vshrl.u32 %v1854, 7
  %v1856 = vsub.s32 1, %v1855
  %v1857 = vrot.slane %v1846, %v1856
  %v1858 = vlaneseq
  %v1859 = vshrl.u32 %v1858, 7
  %v1860 = vsub.s32 2, %v1859
  %v1861 = vrot.slane %v1846, %v1860
  %v1862 = vlaneseq
  %v1863 = vshrl.u32 %v1862, 7
  %v1864 = vsub.s32 3, %v1863
  %v1865 = vrot.slane %v1846, %v1864
  %v1870 = vmul.f32 %v1853, %v849
  %v1871 = vmul.f32 %v1857, %v850
  %v1872 = vmul.f32 %v1861, %v851
  %v1873 = vmul.f32 %v1865, %v852
  %v1875 = vlaneseq
  %v1876 = vshrl.u32 %v1875, 7
  %v1877 = vsub.s32 0, %v1876
  %v1878 = vrot.slane %v1848, %v1877
  %v1879 = vlaneseq
  %v1880 = vshrl.u32 %v1879, 7
  %v1881 = vsub.s32 1, %v1880
  %v1882 = vrot.slane %v1848, %v1881
  %v1883 = vlaneseq
  %v1884 = vshrl.u32 %v1883, 7
  %v1885 = vsub.s32 2, %v1884
  %v1886 = vrot.slane %v1848, %v1885
  %v1887 = vlaneseq
  %v1888 = vshrl.u32 %v1887, 7
  %v1889 = vsub.s32 3, %v1888
  %v1890 = vrot.slane %v1848, %v1889
  %v1895 = vmul.f32 %v1878, %v865
  %v1896 = vmul.f32 %v1882, %v866
  %v1897 = vmul.f32 %v1886, %v867
  %v1898 = vmul.f32 %v1890, %v868
  %v1899 = vadd.f32 %v1870, %v1895
  %v1900 = vadd.f32 %v1871, %v1896
  %v1901 = vadd.f32 %v1872, %v1897
  %v1902 = vadd.f32 %v1873, %v1898
  %v1903 = vadd.f32 %v1691, %v1899
  %v1904 = vadd.f32 %v1692, %v1900
  %v1905 = vadd.f32 %v1693, %v1901
  %v1906 = vadd.f32 %v1694, %v1902
  %s1907 = scalar_lea.vmem %s2, 38
  %v1908 = vld [vmem:[%s1907] ss:$8 sm:$0xf]
  %s1909 = scalar_lea.vmem %s2, 161
  %v1910 = vld [vmem:[%s1909] ss:$8 sm:$0xf]
  %v1912 = vlaneseq
  %v1913 = vshrl.u32 %v1912, 7
  %v1914 = vsub.s32 0, %v1913
  %v1915 = vrot.slane %v1908, %v1914
  %v1916 = vlaneseq
  %v1917 = vshrl.u32 %v1916, 7
  %v1918 = vsub.s32 1, %v1917
  %v1919 = vrot.slane %v1908, %v1918
  %v1920 = vlaneseq
  %v1921 = vshrl.u32 %v1920, 7
  %v1922 = vsub.s32 2, %v1921
  %v1923 = vrot.slane %v1908, %v1922
  %v1924 = vlaneseq
  %v1925 = vshrl.u32 %v1924, 7
  %v1926 = vsub.s32 3, %v1925
  %v1927 = vrot.slane %v1908, %v1926
  %v1932 = vmul.f32 %v1915, %v849
  %v1933 = vmul.f32 %v1919, %v850
  %v1934 = vmul.f32 %v1923, %v851
  %v1935 = vmul.f32 %v1927, %v852
  %v1937 = vlaneseq
  %v1938 = vshrl.u32 %v1937, 7
  %v1939 = vsub.s32 0, %v1938
  %v1940 = vrot.slane %v1910, %v1939
  %v1941 = vlaneseq
  %v1942 = vshrl.u32 %v1941, 7
  %v1943 = vsub.s32 1, %v1942
  %v1944 = vrot.slane %v1910, %v1943
  %v1945 = vlaneseq
  %v1946 = vshrl.u32 %v1945, 7
  %v1947 = vsub.s32 2, %v1946
  %v1948 = vrot.slane %v1910, %v1947
  %v1949 = vlaneseq
  %v1950 = vshrl.u32 %v1949, 7
  %v1951 = vsub.s32 3, %v1950
  %v1952 = vrot.slane %v1910, %v1951
  %v1957 = vmul.f32 %v1940, %v865
  %v1958 = vmul.f32 %v1944, %v866
  %v1959 = vmul.f32 %v1948, %v867
  %v1960 = vmul.f32 %v1952, %v868
  %v1961 = vadd.f32 %v1932, %v1957
  %v1962 = vadd.f32 %v1933, %v1958
  %v1963 = vadd.f32 %v1934, %v1959
  %v1964 = vadd.f32 %v1935, %v1960
  %1965 = vrot.lane.b32.xlu0 %v1961, 127
  %v1966 = vpop.permute.xlu0 %1965
  %1967 = vrot.lane.b32.xlu0 %v1962, 127
  %v1968 = vpop.permute.xlu0 %1967
  %1969 = vrot.lane.b32.xlu0 %v1963, 127
  %v1970 = vpop.permute.xlu0 %1969
  %1971 = vrot.lane.b32.xlu0 %v1964, 127
  %v1972 = vpop.permute.xlu0 %1971
  %vm1973 = vcmp.lt.s32.totalorder %v935, 127
  %v1974 = vsel %vm1973, %v1970, %v1972
  %v1975 = vsel %vm1973, %v1968, %v1970
  %v1976 = vsel %vm1973, %v1966, %v1968
  %v1977 = vsel %vm1973, %v1972, %v1966
  %v1978 = vadd.f32 %v1766, %v1976
  %v1979 = vadd.f32 %v1767, %v1975
  %v1980 = vadd.f32 %v1768, %v1974
  %v1981 = vadd.f32 %v1769, %v1977
  %s1982 = scalar_lea.vmem %s2, 39
  %v1983 = vld [vmem:[%s1982] ss:$8 sm:$0xf]
  %s1984 = scalar_lea.vmem %s2, 162
  %v1985 = vld [vmem:[%s1984] ss:$8 sm:$0xf]
  %v1987 = vlaneseq
  %v1988 = vshrl.u32 %v1987, 7
  %v1989 = vsub.s32 0, %v1988
  %v1990 = vrot.slane %v1983, %v1989
  %v1991 = vlaneseq
  %v1992 = vshrl.u32 %v1991, 7
  %v1993 = vsub.s32 1, %v1992
  %v1994 = vrot.slane %v1983, %v1993
  %v1995 = vlaneseq
  %v1996 = vshrl.u32 %v1995, 7
  %v1997 = vsub.s32 2, %v1996
  %v1998 = vrot.slane %v1983, %v1997
  %v1999 = vlaneseq
  %v2000 = vshrl.u32 %v1999, 7
  %v2001 = vsub.s32 3, %v2000
  %v2002 = vrot.slane %v1983, %v2001
  %v2007 = vmul.f32 %v1990, %v849
  %v2008 = vmul.f32 %v1994, %v850
  %v2009 = vmul.f32 %v1998, %v851
  %v2010 = vmul.f32 %v2002, %v852
  %v2012 = vlaneseq
  %v2013 = vshrl.u32 %v2012, 7
  %v2014 = vsub.s32 0, %v2013
  %v2015 = vrot.slane %v1985, %v2014
  %v2016 = vlaneseq
  %v2017 = vshrl.u32 %v2016, 7
  %v2018 = vsub.s32 1, %v2017
  %v2019 = vrot.slane %v1985, %v2018
  %v2020 = vlaneseq
  %v2021 = vshrl.u32 %v2020, 7
  %v2022 = vsub.s32 2, %v2021
  %v2023 = vrot.slane %v1985, %v2022
  %v2024 = vlaneseq
  %v2025 = vshrl.u32 %v2024, 7
  %v2026 = vsub.s32 3, %v2025
  %v2027 = vrot.slane %v1985, %v2026
  %v2032 = vmul.f32 %v2015, %v865
  %v2033 = vmul.f32 %v2019, %v866
  %v2034 = vmul.f32 %v2023, %v867
  %v2035 = vmul.f32 %v2027, %v868
  %v2036 = vadd.f32 %v2007, %v2032
  %v2037 = vadd.f32 %v2008, %v2033
  %v2038 = vadd.f32 %v2009, %v2034
  %v2039 = vadd.f32 %v2010, %v2035
  %2040 = vrot.lane.b32.xlu0 %v2036, 121
  %v2041 = vpop.permute.xlu0 %2040
  %2042 = vrot.lane.b32.xlu0 %v2037, 121
  %v2043 = vpop.permute.xlu0 %2042
  %2044 = vrot.lane.b32.xlu0 %v2038, 121
  %v2045 = vpop.permute.xlu0 %2044
  %2046 = vrot.lane.b32.xlu0 %v2039, 121
  %v2047 = vpop.permute.xlu0 %2046
  %vm2048 = vcmp.lt.s32.totalorder %v935, 121
  %v2049 = vsel %vm2048, %v2045, %v2047
  %v2050 = vsel %vm2048, %v2043, %v2045
  %v2051 = vsel %vm2048, %v2041, %v2043
  %v2052 = vsel %vm2048, %v2047, %v2041
  %v2053 = vadd.f32 %v1841, %v2051
  %v2054 = vadd.f32 %v1842, %v2050
  %v2055 = vadd.f32 %v1843, %v2049
  %v2056 = vadd.f32 %v1844, %v2052
  %s2057 = scalar_lea.vmem %s2, 64
  %v2058 = vld [vmem:[%s2057] ss:$8 sm:$0xf]
  %s2059 = scalar_lea.vmem %s2, 163
  %v2060 = vld [vmem:[%s2059] ss:$8 sm:$0xf]
  %v2062 = vlaneseq
  %v2063 = vshrl.u32 %v2062, 7
  %v2064 = vsub.s32 0, %v2063
  %v2065 = vrot.slane %v2058, %v2064
  %v2066 = vlaneseq
  %v2067 = vshrl.u32 %v2066, 7
  %v2068 = vsub.s32 1, %v2067
  %v2069 = vrot.slane %v2058, %v2068
  %v2070 = vlaneseq
  %v2071 = vshrl.u32 %v2070, 7
  %v2072 = vsub.s32 2, %v2071
  %v2073 = vrot.slane %v2058, %v2072
  %v2074 = vlaneseq
  %v2075 = vshrl.u32 %v2074, 7
  %v2076 = vsub.s32 3, %v2075
  %v2077 = vrot.slane %v2058, %v2076
  %v2082 = vmul.f32 %v2065, %v849
  %v2083 = vmul.f32 %v2069, %v850
  %v2084 = vmul.f32 %v2073, %v851
  %v2085 = vmul.f32 %v2077, %v852
  %v2087 = vlaneseq
  %v2088 = vshrl.u32 %v2087, 7
  %v2089 = vsub.s32 0, %v2088
  %v2090 = vrot.slane %v2060, %v2089
  %v2091 = vlaneseq
  %v2092 = vshrl.u32 %v2091, 7
  %v2093 = vsub.s32 1, %v2092
  %v2094 = vrot.slane %v2060, %v2093
  %v2095 = vlaneseq
  %v2096 = vshrl.u32 %v2095, 7
  %v2097 = vsub.s32 2, %v2096
  %v2098 = vrot.slane %v2060, %v2097
  %v2099 = vlaneseq
  %v2100 = vshrl.u32 %v2099, 7
  %v2101 = vsub.s32 3, %v2100
  %v2102 = vrot.slane %v2060, %v2101
  %v2107 = vmul.f32 %v2090, %v865
  %v2108 = vmul.f32 %v2094, %v866
  %v2109 = vmul.f32 %v2098, %v867
  %v2110 = vmul.f32 %v2102, %v868
  %v2111 = vadd.f32 %v2082, %v2107
  %v2112 = vadd.f32 %v2083, %v2108
  %v2113 = vadd.f32 %v2084, %v2109
  %v2114 = vadd.f32 %v2085, %v2110
  %2115 = vrot.lane.b32.xlu0 %v2111, 120
  %v2116 = vpop.permute.xlu0 %2115
  %2117 = vrot.lane.b32.xlu0 %v2112, 120
  %v2118 = vpop.permute.xlu0 %2117
  %2119 = vrot.lane.b32.xlu0 %v2113, 120
  %v2120 = vpop.permute.xlu0 %2119
  %2121 = vrot.lane.b32.xlu0 %v2114, 120
  %v2122 = vpop.permute.xlu0 %2121
  %vm2123 = vcmp.lt.s32.totalorder %v935, 120
  %v2124 = vsel %vm2123, %v2120, %v2122
  %v2125 = vsel %vm2123, %v2118, %v2120
  %v2126 = vsel %vm2123, %v2116, %v2118
  %v2127 = vsel %vm2123, %v2122, %v2116
  %v2128 = vadd.f32 %v1903, %v2126
  %v2129 = vadd.f32 %v1904, %v2125
  %v2130 = vadd.f32 %v1905, %v2124
  %v2131 = vadd.f32 %v1906, %v2127
  %s2132 = scalar_lea.vmem %s2, 65
  %v2133 = vld [vmem:[%s2132] ss:$8 sm:$0xf]
  %s2134 = scalar_lea.vmem %s2, 164
  %v2135 = vld [vmem:[%s2134] ss:$8 sm:$0xf]
  %v2137 = vlaneseq
  %v2138 = vshrl.u32 %v2137, 7
  %v2139 = vsub.s32 0, %v2138
  %v2140 = vrot.slane %v2133, %v2139
  %v2141 = vlaneseq
  %v2142 = vshrl.u32 %v2141, 7
  %v2143 = vsub.s32 1, %v2142
  %v2144 = vrot.slane %v2133, %v2143
  %v2145 = vlaneseq
  %v2146 = vshrl.u32 %v2145, 7
  %v2147 = vsub.s32 2, %v2146
  %v2148 = vrot.slane %v2133, %v2147
  %v2149 = vlaneseq
  %v2150 = vshrl.u32 %v2149, 7
  %v2151 = vsub.s32 3, %v2150
  %v2152 = vrot.slane %v2133, %v2151
  %v2157 = vmul.f32 %v2140, %v849
  %v2158 = vmul.f32 %v2144, %v850
  %v2159 = vmul.f32 %v2148, %v851
  %v2160 = vmul.f32 %v2152, %v852
  %v2162 = vlaneseq
  %v2163 = vshrl.u32 %v2162, 7
  %v2164 = vsub.s32 0, %v2163
  %v2165 = vrot.slane %v2135, %v2164
  %v2166 = vlaneseq
  %v2167 = vshrl.u32 %v2166, 7
  %v2168 = vsub.s32 1, %v2167
  %v2169 = vrot.slane %v2135, %v2168
  %v2170 = vlaneseq
  %v2171 = vshrl.u32 %v2170, 7
  %v2172 = vsub.s32 2, %v2171
  %v2173 = vrot.slane %v2135, %v2172
  %v2174 = vlaneseq
  %v2175 = vshrl.u32 %v2174, 7
  %v2176 = vsub.s32 3, %v2175
  %v2177 = vrot.slane %v2135, %v2176
  %v2182 = vmul.f32 %v2165, %v865
  %v2183 = vmul.f32 %v2169, %v866
  %v2184 = vmul.f32 %v2173, %v867
  %v2185 = vmul.f32 %v2177, %v868
  %v2186 = vadd.f32 %v2157, %v2182
  %v2187 = vadd.f32 %v2158, %v2183
  %v2188 = vadd.f32 %v2159, %v2184
  %v2189 = vadd.f32 %v2160, %v2185
  %2190 = vrot.lane.b32.xlu0 %v2186, 119
  %v2191 = vpop.permute.xlu0 %2190
  %2192 = vrot.lane.b32.xlu0 %v2187, 119
  %v2193 = vpop.permute.xlu0 %2192
  %2194 = vrot.lane.b32.xlu0 %v2188, 119
  %v2195 = vpop.permute.xlu0 %2194
  %2196 = vrot.lane.b32.xlu0 %v2189, 119
  %v2197 = vpop.permute.xlu0 %2196
  %vm2198 = vcmp.lt.s32.totalorder %v935, 119
  %v2199 = vsel %vm2198, %v2195, %v2197
  %v2200 = vsel %vm2198, %v2193, %v2195
  %v2201 = vsel %vm2198, %v2191, %v2193
  %v2202 = vsel %vm2198, %v2197, %v2191
  %v2203 = vadd.f32 %v1978, %v2201
  %v2204 = vadd.f32 %v1979, %v2200
  %v2205 = vadd.f32 %v1980, %v2199
  %v2206 = vadd.f32 %v1981, %v2202
  %s2207 = scalar_lea.vmem %s2, 66
  %v2208 = vld [vmem:[%s2207] ss:$8 sm:$0xf]
  %s2209 = scalar_lea.vmem %s2, 165
  %v2210 = vld [vmem:[%s2209] ss:$8 sm:$0xf]
  %v2212 = vlaneseq
  %v2213 = vshrl.u32 %v2212, 7
  %v2214 = vsub.s32 0, %v2213
  %v2215 = vrot.slane %v2208, %v2214
  %v2216 = vlaneseq
  %v2217 = vshrl.u32 %v2216, 7
  %v2218 = vsub.s32 1, %v2217
  %v2219 = vrot.slane %v2208, %v2218
  %v2220 = vlaneseq
  %v2221 = vshrl.u32 %v2220, 7
  %v2222 = vsub.s32 2, %v2221
  %v2223 = vrot.slane %v2208, %v2222
  %v2224 = vlaneseq
  %v2225 = vshrl.u32 %v2224, 7
  %v2226 = vsub.s32 3, %v2225
  %v2227 = vrot.slane %v2208, %v2226
  %v2232 = vmul.f32 %v2215, %v849
  %v2233 = vmul.f32 %v2219, %v850
  %v2234 = vmul.f32 %v2223, %v851
  %v2235 = vmul.f32 %v2227, %v852
  %v2237 = vlaneseq
  %v2238 = vshrl.u32 %v2237, 7
  %v2239 = vsub.s32 0, %v2238
  %v2240 = vrot.slane %v2210, %v2239
  %v2241 = vlaneseq
  %v2242 = vshrl.u32 %v2241, 7
  %v2243 = vsub.s32 1, %v2242
  %v2244 = vrot.slane %v2210, %v2243
  %v2245 = vlaneseq
  %v2246 = vshrl.u32 %v2245, 7
  %v2247 = vsub.s32 2, %v2246
  %v2248 = vrot.slane %v2210, %v2247
  %v2249 = vlaneseq
  %v2250 = vshrl.u32 %v2249, 7
  %v2251 = vsub.s32 3, %v2250
  %v2252 = vrot.slane %v2210, %v2251
  %v2257 = vmul.f32 %v2240, %v865
  %v2258 = vmul.f32 %v2244, %v866
  %v2259 = vmul.f32 %v2248, %v867
  %v2260 = vmul.f32 %v2252, %v868
  %v2261 = vadd.f32 %v2232, %v2257
  %v2262 = vadd.f32 %v2233, %v2258
  %v2263 = vadd.f32 %v2234, %v2259
  %v2264 = vadd.f32 %v2235, %v2260
  %2265 = vrot.lane.b32.xlu0 %v2261, 73
  %v2266 = vpop.permute.xlu0 %2265
  %2267 = vrot.lane.b32.xlu0 %v2262, 73
  %v2268 = vpop.permute.xlu0 %2267
  %2269 = vrot.lane.b32.xlu0 %v2263, 73
  %v2270 = vpop.permute.xlu0 %2269
  %2271 = vrot.lane.b32.xlu0 %v2264, 73
  %v2272 = vpop.permute.xlu0 %2271
  %v2273 = vsel %vm936, %v2270, %v2272
  %v2274 = vsel %vm936, %v2268, %v2270
  %v2275 = vsel %vm936, %v2266, %v2268
  %v2276 = vsel %vm936, %v2272, %v2266
  %v2277 = vadd.f32 %v2053, %v2275
  %v2278 = vadd.f32 %v2054, %v2274
  %v2279 = vadd.f32 %v2055, %v2273
  %v2280 = vadd.f32 %v2056, %v2276
  %s2281 = scalar_lea.vmem %s2, 67
  %v2282 = vld [vmem:[%s2281] ss:$8 sm:$0xf]
  %s2283 = scalar_lea.vmem %s2, 166
  %v2284 = vld [vmem:[%s2283] ss:$8 sm:$0xf]
  %v2286 = vlaneseq
  %v2287 = vshrl.u32 %v2286, 7
  %v2288 = vsub.s32 0, %v2287
  %v2289 = vrot.slane %v2282, %v2288
  %v2290 = vlaneseq
  %v2291 = vshrl.u32 %v2290, 7
  %v2292 = vsub.s32 1, %v2291
  %v2293 = vrot.slane %v2282, %v2292
  %v2294 = vlaneseq
  %v2295 = vshrl.u32 %v2294, 7
  %v2296 = vsub.s32 2, %v2295
  %v2297 = vrot.slane %v2282, %v2296
  %v2298 = vlaneseq
  %v2299 = vshrl.u32 %v2298, 7
  %v2300 = vsub.s32 3, %v2299
  %v2301 = vrot.slane %v2282, %v2300
  %v2306 = vmul.f32 %v2289, %v849
  %v2307 = vmul.f32 %v2293, %v850
  %v2308 = vmul.f32 %v2297, %v851
  %v2309 = vmul.f32 %v2301, %v852
  %v2311 = vlaneseq
  %v2312 = vshrl.u32 %v2311, 7
  %v2313 = vsub.s32 0, %v2312
  %v2314 = vrot.slane %v2284, %v2313
  %v2315 = vlaneseq
  %v2316 = vshrl.u32 %v2315, 7
  %v2317 = vsub.s32 1, %v2316
  %v2318 = vrot.slane %v2284, %v2317
  %v2319 = vlaneseq
  %v2320 = vshrl.u32 %v2319, 7
  %v2321 = vsub.s32 2, %v2320
  %v2322 = vrot.slane %v2284, %v2321
  %v2323 = vlaneseq
  %v2324 = vshrl.u32 %v2323, 7
  %v2325 = vsub.s32 3, %v2324
  %v2326 = vrot.slane %v2284, %v2325
  %v2331 = vmul.f32 %v2314, %v865
  %v2332 = vmul.f32 %v2318, %v866
  %v2333 = vmul.f32 %v2322, %v867
  %v2334 = vmul.f32 %v2326, %v868
  %v2335 = vadd.f32 %v2306, %v2331
  %v2336 = vadd.f32 %v2307, %v2332
  %v2337 = vadd.f32 %v2308, %v2333
  %v2338 = vadd.f32 %v2309, %v2334
  %2339 = vrot.lane.b32.xlu0 %v2335, 72
  %v2340 = vpop.permute.xlu0 %2339
  %2341 = vrot.lane.b32.xlu0 %v2336, 72
  %v2342 = vpop.permute.xlu0 %2341
  %2343 = vrot.lane.b32.xlu0 %v2337, 72
  %v2344 = vpop.permute.xlu0 %2343
  %2345 = vrot.lane.b32.xlu0 %v2338, 72
  %v2346 = vpop.permute.xlu0 %2345
  %v2347 = vsel %vm1011, %v2344, %v2346
  %v2348 = vsel %vm1011, %v2342, %v2344
  %v2349 = vsel %vm1011, %v2340, %v2342
  %v2350 = vsel %vm1011, %v2346, %v2340
  %v2351 = vadd.f32 %v2128, %v2349
  %v2352 = vadd.f32 %v2129, %v2348
  %v2353 = vadd.f32 %v2130, %v2347
  %v2354 = vadd.f32 %v2131, %v2350
  %s2355 = scalar_lea.vmem %s2, 68
  %v2356 = vld [vmem:[%s2355] ss:$8 sm:$0xf]
  %s2357 = scalar_lea.vmem %s2, 167
  %v2358 = vld [vmem:[%s2357] ss:$8 sm:$0xf]
  %v2360 = vlaneseq
  %v2361 = vshrl.u32 %v2360, 7
  %v2362 = vsub.s32 0, %v2361
  %v2363 = vrot.slane %v2356, %v2362
  %v2364 = vlaneseq
  %v2365 = vshrl.u32 %v2364, 7
  %v2366 = vsub.s32 1, %v2365
  %v2367 = vrot.slane %v2356, %v2366
  %v2368 = vlaneseq
  %v2369 = vshrl.u32 %v2368, 7
  %v2370 = vsub.s32 2, %v2369
  %v2371 = vrot.slane %v2356, %v2370
  %v2372 = vlaneseq
  %v2373 = vshrl.u32 %v2372, 7
  %v2374 = vsub.s32 3, %v2373
  %v2375 = vrot.slane %v2356, %v2374
  %v2380 = vmul.f32 %v2363, %v849
  %v2381 = vmul.f32 %v2367, %v850
  %v2382 = vmul.f32 %v2371, %v851
  %v2383 = vmul.f32 %v2375, %v852
  %v2385 = vlaneseq
  %v2386 = vshrl.u32 %v2385, 7
  %v2387 = vsub.s32 0, %v2386
  %v2388 = vrot.slane %v2358, %v2387
  %v2389 = vlaneseq
  %v2390 = vshrl.u32 %v2389, 7
  %v2391 = vsub.s32 1, %v2390
  %v2392 = vrot.slane %v2358, %v2391
  %v2393 = vlaneseq
  %v2394 = vshrl.u32 %v2393, 7
  %v2395 = vsub.s32 2, %v2394
  %v2396 = vrot.slane %v2358, %v2395
  %v2397 = vlaneseq
  %v2398 = vshrl.u32 %v2397, 7
  %v2399 = vsub.s32 3, %v2398
  %v2400 = vrot.slane %v2358, %v2399
  %v2405 = vmul.f32 %v2388, %v865
  %v2406 = vmul.f32 %v2392, %v866
  %v2407 = vmul.f32 %v2396, %v867
  %v2408 = vmul.f32 %v2400, %v868
  %v2409 = vadd.f32 %v2380, %v2405
  %v2410 = vadd.f32 %v2381, %v2406
  %v2411 = vadd.f32 %v2382, %v2407
  %v2412 = vadd.f32 %v2383, %v2408
  %2413 = vrot.lane.b32.xlu0 %v2409, 71
  %v2414 = vpop.permute.xlu0 %2413
  %2415 = vrot.lane.b32.xlu0 %v2410, 71
  %v2416 = vpop.permute.xlu0 %2415
  %2417 = vrot.lane.b32.xlu0 %v2411, 71
  %v2418 = vpop.permute.xlu0 %2417
  %2419 = vrot.lane.b32.xlu0 %v2412, 71
  %v2420 = vpop.permute.xlu0 %2419
  %v2421 = vsel %vm1086, %v2418, %v2420
  %v2422 = vsel %vm1086, %v2416, %v2418
  %v2423 = vsel %vm1086, %v2414, %v2416
  %v2424 = vsel %vm1086, %v2420, %v2414
  %v2425 = vadd.f32 %v2203, %v2423
  %v2426 = vadd.f32 %v2204, %v2422
  %v2427 = vadd.f32 %v2205, %v2421
  %v2428 = vadd.f32 %v2206, %v2424
  %s2429 = scalar_lea.vmem %s2, 69
  %v2430 = vld [vmem:[%s2429] ss:$8 sm:$0xf]
  %s2431 = scalar_lea.vmem %s2, 192
  %v2432 = vld [vmem:[%s2431] ss:$8 sm:$0xf]
  %v2434 = vlaneseq
  %v2435 = vshrl.u32 %v2434, 7
  %v2436 = vsub.s32 0, %v2435
  %v2437 = vrot.slane %v2430, %v2436
  %v2438 = vlaneseq
  %v2439 = vshrl.u32 %v2438, 7
  %v2440 = vsub.s32 1, %v2439
  %v2441 = vrot.slane %v2430, %v2440
  %v2442 = vlaneseq
  %v2443 = vshrl.u32 %v2442, 7
  %v2444 = vsub.s32 2, %v2443
  %v2445 = vrot.slane %v2430, %v2444
  %v2446 = vlaneseq
  %v2447 = vshrl.u32 %v2446, 7
  %v2448 = vsub.s32 3, %v2447
  %v2449 = vrot.slane %v2430, %v2448
  %v2454 = vmul.f32 %v2437, %v849
  %v2455 = vmul.f32 %v2441, %v850
  %v2456 = vmul.f32 %v2445, %v851
  %v2457 = vmul.f32 %v2449, %v852
  %v2459 = vlaneseq
  %v2460 = vshrl.u32 %v2459, 7
  %v2461 = vsub.s32 0, %v2460
  %v2462 = vrot.slane %v2432, %v2461
  %v2463 = vlaneseq
  %v2464 = vshrl.u32 %v2463, 7
  %v2465 = vsub.s32 1, %v2464
  %v2466 = vrot.slane %v2432, %v2465
  %v2467 = vlaneseq
  %v2468 = vshrl.u32 %v2467, 7
  %v2469 = vsub.s32 2, %v2468
  %v2470 = vrot.slane %v2432, %v2469
  %v2471 = vlaneseq
  %v2472 = vshrl.u32 %v2471, 7
  %v2473 = vsub.s32 3, %v2472
  %v2474 = vrot.slane %v2432, %v2473
  %v2479 = vmul.f32 %v2462, %v865
  %v2480 = vmul.f32 %v2466, %v866
  %v2481 = vmul.f32 %v2470, %v867
  %v2482 = vmul.f32 %v2474, %v868
  %v2483 = vadd.f32 %v2454, %v2479
  %v2484 = vadd.f32 %v2455, %v2480
  %v2485 = vadd.f32 %v2456, %v2481
  %v2486 = vadd.f32 %v2457, %v2482
  %2487 = vrot.lane.b32.xlu0 %v2483, 65
  %v2488 = vpop.permute.xlu0 %2487
  %2489 = vrot.lane.b32.xlu0 %v2484, 65
  %v2490 = vpop.permute.xlu0 %2489
  %2491 = vrot.lane.b32.xlu0 %v2485, 65
  %v2492 = vpop.permute.xlu0 %2491
  %2493 = vrot.lane.b32.xlu0 %v2486, 65
  %v2494 = vpop.permute.xlu0 %2493
  %v2495 = vsel %vm1161, %v2492, %v2494
  %v2496 = vsel %vm1161, %v2490, %v2492
  %v2497 = vsel %vm1161, %v2488, %v2490
  %v2498 = vsel %vm1161, %v2494, %v2488
  %v2499 = vadd.f32 %v2277, %v2497
  %v2500 = vadd.f32 %v2278, %v2496
  %v2501 = vadd.f32 %v2279, %v2495
  %v2502 = vadd.f32 %v2280, %v2498
  %s2503 = scalar_lea.vmem %s2, 70
  %v2504 = vld [vmem:[%s2503] ss:$8 sm:$0xf]
  %s2505 = scalar_lea.vmem %s2, 193
  %v2506 = vld [vmem:[%s2505] ss:$8 sm:$0xf]
  %v2508 = vlaneseq
  %v2509 = vshrl.u32 %v2508, 7
  %v2510 = vsub.s32 0, %v2509
  %v2511 = vrot.slane %v2504, %v2510
  %v2512 = vlaneseq
  %v2513 = vshrl.u32 %v2512, 7
  %v2514 = vsub.s32 1, %v2513
  %v2515 = vrot.slane %v2504, %v2514
  %v2516 = vlaneseq
  %v2517 = vshrl.u32 %v2516, 7
  %v2518 = vsub.s32 2, %v2517
  %v2519 = vrot.slane %v2504, %v2518
  %v2520 = vlaneseq
  %v2521 = vshrl.u32 %v2520, 7
  %v2522 = vsub.s32 3, %v2521
  %v2523 = vrot.slane %v2504, %v2522
  %v2528 = vmul.f32 %v2511, %v849
  %v2529 = vmul.f32 %v2515, %v850
  %v2530 = vmul.f32 %v2519, %v851
  %v2531 = vmul.f32 %v2523, %v852
  %v2533 = vlaneseq
  %v2534 = vshrl.u32 %v2533, 7
  %v2535 = vsub.s32 0, %v2534
  %v2536 = vrot.slane %v2506, %v2535
  %v2537 = vlaneseq
  %v2538 = vshrl.u32 %v2537, 7
  %v2539 = vsub.s32 1, %v2538
  %v2540 = vrot.slane %v2506, %v2539
  %v2541 = vlaneseq
  %v2542 = vshrl.u32 %v2541, 7
  %v2543 = vsub.s32 2, %v2542
  %v2544 = vrot.slane %v2506, %v2543
  %v2545 = vlaneseq
  %v2546 = vshrl.u32 %v2545, 7
  %v2547 = vsub.s32 3, %v2546
  %v2548 = vrot.slane %v2506, %v2547
  %v2553 = vmul.f32 %v2536, %v865
  %v2554 = vmul.f32 %v2540, %v866
  %v2555 = vmul.f32 %v2544, %v867
  %v2556 = vmul.f32 %v2548, %v868
  %v2557 = vadd.f32 %v2528, %v2553
  %v2558 = vadd.f32 %v2529, %v2554
  %v2559 = vadd.f32 %v2530, %v2555
  %v2560 = vadd.f32 %v2531, %v2556
  %2561 = vrot.lane.b32.xlu0 %v2557, 64
  %v2562 = vpop.permute.xlu0 %2561
  %2563 = vrot.lane.b32.xlu0 %v2558, 64
  %v2564 = vpop.permute.xlu0 %2563
  %2565 = vrot.lane.b32.xlu0 %v2559, 64
  %v2566 = vpop.permute.xlu0 %2565
  %2567 = vrot.lane.b32.xlu0 %v2560, 64
  %v2568 = vpop.permute.xlu0 %2567
  %v2569 = vsel %vm1236, %v2566, %v2568
  %v2570 = vsel %vm1236, %v2564, %v2566
  %v2571 = vsel %vm1236, %v2562, %v2564
  %v2572 = vsel %vm1236, %v2568, %v2562
  %v2573 = vadd.f32 %v2351, %v2571
  %v2574 = vadd.f32 %v2352, %v2570
  %v2575 = vadd.f32 %v2353, %v2569
  %v2576 = vadd.f32 %v2354, %v2572
  %s2577 = scalar_lea.vmem %s2, 71
  %v2578 = vld [vmem:[%s2577] ss:$8 sm:$0xf]
  %s2579 = scalar_lea.vmem %s2, 194
  %v2580 = vld [vmem:[%s2579] ss:$8 sm:$0xf]
  %v2582 = vlaneseq
  %v2583 = vshrl.u32 %v2582, 7
  %v2584 = vsub.s32 0, %v2583
  %v2585 = vrot.slane %v2578, %v2584
  %v2586 = vlaneseq
  %v2587 = vshrl.u32 %v2586, 7
  %v2588 = vsub.s32 1, %v2587
  %v2589 = vrot.slane %v2578, %v2588
  %v2590 = vlaneseq
  %v2591 = vshrl.u32 %v2590, 7
  %v2592 = vsub.s32 2, %v2591
  %v2593 = vrot.slane %v2578, %v2592
  %v2594 = vlaneseq
  %v2595 = vshrl.u32 %v2594, 7
  %v2596 = vsub.s32 3, %v2595
  %v2597 = vrot.slane %v2578, %v2596
  %v2602 = vmul.f32 %v2585, %v849
  %v2603 = vmul.f32 %v2589, %v850
  %v2604 = vmul.f32 %v2593, %v851
  %v2605 = vmul.f32 %v2597, %v852
  %v2607 = vlaneseq
  %v2608 = vshrl.u32 %v2607, 7
  %v2609 = vsub.s32 0, %v2608
  %v2610 = vrot.slane %v2580, %v2609
  %v2611 = vlaneseq
  %v2612 = vshrl.u32 %v2611, 7
  %v2613 = vsub.s32 1, %v2612
  %v2614 = vrot.slane %v2580, %v2613
  %v2615 = vlaneseq
  %v2616 = vshrl.u32 %v2615, 7
  %v2617 = vsub.s32 2, %v2616
  %v2618 = vrot.slane %v2580, %v2617
  %v2619 = vlaneseq
  %v2620 = vshrl.u32 %v2619, 7
  %v2621 = vsub.s32 3, %v2620
  %v2622 = vrot.slane %v2580, %v2621
  %v2627 = vmul.f32 %v2610, %v865
  %v2628 = vmul.f32 %v2614, %v866
  %v2629 = vmul.f32 %v2618, %v867
  %v2630 = vmul.f32 %v2622, %v868
  %v2631 = vadd.f32 %v2602, %v2627
  %v2632 = vadd.f32 %v2603, %v2628
  %v2633 = vadd.f32 %v2604, %v2629
  %v2634 = vadd.f32 %v2605, %v2630
  %2635 = vrot.lane.b32.xlu0 %v2631, 63
  %v2636 = vpop.permute.xlu0 %2635
  %2637 = vrot.lane.b32.xlu0 %v2632, 63
  %v2638 = vpop.permute.xlu0 %2637
  %2639 = vrot.lane.b32.xlu0 %v2633, 63
  %v2640 = vpop.permute.xlu0 %2639
  %2641 = vrot.lane.b32.xlu0 %v2634, 63
  %v2642 = vpop.permute.xlu0 %2641
  %v2643 = vsel %vm1311, %v2640, %v2642
  %v2644 = vsel %vm1311, %v2638, %v2640
  %v2645 = vsel %vm1311, %v2636, %v2638
  %v2646 = vsel %vm1311, %v2642, %v2636
  %v2647 = vadd.f32 %v2425, %v2645
  %v2648 = vadd.f32 %v2426, %v2644
  %v2649 = vadd.f32 %v2427, %v2643
  %v2650 = vadd.f32 %v2428, %v2646
  %s2651 = scalar_lea.vmem %s2, 96
  %v2652 = vld [vmem:[%s2651] ss:$8 sm:$0xf]
  %s2653 = scalar_lea.vmem %s2, 195
  %v2654 = vld [vmem:[%s2653] ss:$8 sm:$0xf]
  %v2656 = vlaneseq
  %v2657 = vshrl.u32 %v2656, 7
  %v2658 = vsub.s32 0, %v2657
  %v2659 = vrot.slane %v2652, %v2658
  %v2660 = vlaneseq
  %v2661 = vshrl.u32 %v2660, 7
  %v2662 = vsub.s32 1, %v2661
  %v2663 = vrot.slane %v2652, %v2662
  %v2664 = vlaneseq
  %v2665 = vshrl.u32 %v2664, 7
  %v2666 = vsub.s32 2, %v2665
  %v2667 = vrot.slane %v2652, %v2666
  %v2668 = vlaneseq
  %v2669 = vshrl.u32 %v2668, 7
  %v2670 = vsub.s32 3, %v2669
  %v2671 = vrot.slane %v2652, %v2670
  %v2676 = vmul.f32 %v2659, %v849
  %v2677 = vmul.f32 %v2663, %v850
  %v2678 = vmul.f32 %v2667, %v851
  %v2679 = vmul.f32 %v2671, %v852
  %v2681 = vlaneseq
  %v2682 = vshrl.u32 %v2681, 7
  %v2683 = vsub.s32 0, %v2682
  %v2684 = vrot.slane %v2654, %v2683
  %v2685 = vlaneseq
  %v2686 = vshrl.u32 %v2685, 7
  %v2687 = vsub.s32 1, %v2686
  %v2688 = vrot.slane %v2654, %v2687
  %v2689 = vlaneseq
  %v2690 = vshrl.u32 %v2689, 7
  %v2691 = vsub.s32 2, %v2690
  %v2692 = vrot.slane %v2654, %v2691
  %v2693 = vlaneseq
  %v2694 = vshrl.u32 %v2693, 7
  %v2695 = vsub.s32 3, %v2694
  %v2696 = vrot.slane %v2654, %v2695
  %v2701 = vmul.f32 %v2684, %v865
  %v2702 = vmul.f32 %v2688, %v866
  %v2703 = vmul.f32 %v2692, %v867
  %v2704 = vmul.f32 %v2696, %v868
  %v2705 = vadd.f32 %v2676, %v2701
  %v2706 = vadd.f32 %v2677, %v2702
  %v2707 = vadd.f32 %v2678, %v2703
  %v2708 = vadd.f32 %v2679, %v2704
  %2709 = vrot.lane.b32.xlu0 %v2705, 57
  %v2710 = vpop.permute.xlu0 %2709
  %2711 = vrot.lane.b32.xlu0 %v2706, 57
  %v2712 = vpop.permute.xlu0 %2711
  %2713 = vrot.lane.b32.xlu0 %v2707, 57
  %v2714 = vpop.permute.xlu0 %2713
  %2715 = vrot.lane.b32.xlu0 %v2708, 57
  %v2716 = vpop.permute.xlu0 %2715
  %v2717 = vsel %vm1386, %v2714, %v2716
  %v2718 = vsel %vm1386, %v2712, %v2714
  %v2719 = vsel %vm1386, %v2710, %v2712
  %v2720 = vsel %vm1386, %v2716, %v2710
  %v2721 = vadd.f32 %v2499, %v2719
  %v2722 = vadd.f32 %v2500, %v2718
  %v2723 = vadd.f32 %v2501, %v2717
  %v2724 = vadd.f32 %v2502, %v2720
  %s2725 = scalar_lea.vmem %s2, 97
  %v2726 = vld [vmem:[%s2725] ss:$8 sm:$0xf]
  %s2727 = scalar_lea.vmem %s2, 196
  %v2728 = vld [vmem:[%s2727] ss:$8 sm:$0xf]
  %v2730 = vlaneseq
  %v2731 = vshrl.u32 %v2730, 7
  %v2732 = vsub.s32 0, %v2731
  %v2733 = vrot.slane %v2726, %v2732
  %v2734 = vlaneseq
  %v2735 = vshrl.u32 %v2734, 7
  %v2736 = vsub.s32 1, %v2735
  %v2737 = vrot.slane %v2726, %v2736
  %v2738 = vlaneseq
  %v2739 = vshrl.u32 %v2738, 7
  %v2740 = vsub.s32 2, %v2739
  %v2741 = vrot.slane %v2726, %v2740
  %v2742 = vlaneseq
  %v2743 = vshrl.u32 %v2742, 7
  %v2744 = vsub.s32 3, %v2743
  %v2745 = vrot.slane %v2726, %v2744
  %v2750 = vmul.f32 %v2733, %v849
  %v2751 = vmul.f32 %v2737, %v850
  %v2752 = vmul.f32 %v2741, %v851
  %v2753 = vmul.f32 %v2745, %v852
  %v2755 = vlaneseq
  %v2756 = vshrl.u32 %v2755, 7
  %v2757 = vsub.s32 0, %v2756
  %v2758 = vrot.slane %v2728, %v2757
  %v2759 = vlaneseq
  %v2760 = vshrl.u32 %v2759, 7
  %v2761 = vsub.s32 1, %v2760
  %v2762 = vrot.slane %v2728, %v2761
  %v2763 = vlaneseq
  %v2764 = vshrl.u32 %v2763, 7
  %v2765 = vsub.s32 2, %v2764
  %v2766 = vrot.slane %v2728, %v2765
  %v2767 = vlaneseq
  %v2768 = vshrl.u32 %v2767, 7
  %v2769 = vsub.s32 3, %v2768
  %v2770 = vrot.slane %v2728, %v2769
  %v2775 = vmul.f32 %v2758, %v865
  %v2776 = vmul.f32 %v2762, %v866
  %v2777 = vmul.f32 %v2766, %v867
  %v2778 = vmul.f32 %v2770, %v868
  %v2779 = vadd.f32 %v2750, %v2775
  %v2780 = vadd.f32 %v2751, %v2776
  %v2781 = vadd.f32 %v2752, %v2777
  %v2782 = vadd.f32 %v2753, %v2778
  %2783 = vrot.lane.b32.xlu0 %v2779, 56
  %v2784 = vpop.permute.xlu0 %2783
  %2785 = vrot.lane.b32.xlu0 %v2780, 56
  %v2786 = vpop.permute.xlu0 %2785
  %2787 = vrot.lane.b32.xlu0 %v2781, 56
  %v2788 = vpop.permute.xlu0 %2787
  %2789 = vrot.lane.b32.xlu0 %v2782, 56
  %v2790 = vpop.permute.xlu0 %2789
  %v2791 = vsel %vm1461, %v2788, %v2790
  %v2792 = vsel %vm1461, %v2786, %v2788
  %v2793 = vsel %vm1461, %v2784, %v2786
  %v2794 = vsel %vm1461, %v2790, %v2784
  %v2795 = vadd.f32 %v2573, %v2793
  %v2796 = vadd.f32 %v2574, %v2792
  %v2797 = vadd.f32 %v2575, %v2791
  %v2798 = vadd.f32 %v2576, %v2794
  %s2799 = scalar_lea.vmem %s2, 98
  %v2800 = vld [vmem:[%s2799] ss:$8 sm:$0xf]
  %s2801 = scalar_lea.vmem %s2, 197
  %v2802 = vld [vmem:[%s2801] ss:$8 sm:$0xf]
  %v2804 = vlaneseq
  %v2805 = vshrl.u32 %v2804, 7
  %v2806 = vsub.s32 0, %v2805
  %v2807 = vrot.slane %v2800, %v2806
  %v2808 = vlaneseq
  %v2809 = vshrl.u32 %v2808, 7
  %v2810 = vsub.s32 1, %v2809
  %v2811 = vrot.slane %v2800, %v2810
  %v2812 = vlaneseq
  %v2813 = vshrl.u32 %v2812, 7
  %v2814 = vsub.s32 2, %v2813
  %v2815 = vrot.slane %v2800, %v2814
  %v2816 = vlaneseq
  %v2817 = vshrl.u32 %v2816, 7
  %v2818 = vsub.s32 3, %v2817
  %v2819 = vrot.slane %v2800, %v2818
  %v2824 = vmul.f32 %v2807, %v849
  %v2825 = vmul.f32 %v2811, %v850
  %v2826 = vmul.f32 %v2815, %v851
  %v2827 = vmul.f32 %v2819, %v852
  %v2829 = vlaneseq
  %v2830 = vshrl.u32 %v2829, 7
  %v2831 = vsub.s32 0, %v2830
  %v2832 = vrot.slane %v2802, %v2831
  %v2833 = vlaneseq
  %v2834 = vshrl.u32 %v2833, 7
  %v2835 = vsub.s32 1, %v2834
  %v2836 = vrot.slane %v2802, %v2835
  %v2837 = vlaneseq
  %v2838 = vshrl.u32 %v2837, 7
  %v2839 = vsub.s32 2, %v2838
  %v2840 = vrot.slane %v2802, %v2839
  %v2841 = vlaneseq
  %v2842 = vshrl.u32 %v2841, 7
  %v2843 = vsub.s32 3, %v2842
  %v2844 = vrot.slane %v2802, %v2843
  %v2849 = vmul.f32 %v2832, %v865
  %v2850 = vmul.f32 %v2836, %v866
  %v2851 = vmul.f32 %v2840, %v867
  %v2852 = vmul.f32 %v2844, %v868
  %v2853 = vadd.f32 %v2824, %v2849
  %v2854 = vadd.f32 %v2825, %v2850
  %v2855 = vadd.f32 %v2826, %v2851
  %v2856 = vadd.f32 %v2827, %v2852
  %2857 = vrot.lane.b32.xlu0 %v2853, 55
  %v2858 = vpop.permute.xlu0 %2857
  %2859 = vrot.lane.b32.xlu0 %v2854, 55
  %v2860 = vpop.permute.xlu0 %2859
  %2861 = vrot.lane.b32.xlu0 %v2855, 55
  %v2862 = vpop.permute.xlu0 %2861
  %2863 = vrot.lane.b32.xlu0 %v2856, 55
  %v2864 = vpop.permute.xlu0 %2863
  %v2865 = vsel %vm1536, %v2862, %v2864
  %v2866 = vsel %vm1536, %v2860, %v2862
  %v2867 = vsel %vm1536, %v2858, %v2860
  %v2868 = vsel %vm1536, %v2864, %v2858
  %v2869 = vadd.f32 %v2647, %v2867
  %v2870 = vadd.f32 %v2648, %v2866
  %v2871 = vadd.f32 %v2649, %v2865
  %v2872 = vadd.f32 %v2650, %v2868
  %v2873 = vadd.f32 %v2721, %v2795
  %v2874 = vadd.f32 %v2722, %v2796
  %v2875 = vadd.f32 %v2723, %v2797
  %v2876 = vadd.f32 %v2724, %v2798
  %v2877 = vadd.f32 %v2873, %v2869
  %v2878 = vadd.f32 %v2874, %v2870
  %v2879 = vadd.f32 %v2875, %v2871
  %v2880 = vadd.f32 %v2876, %v2872
  %v2881 = vsub.f32 0.0, %v2877
  %v2882 = vsub.f32 0.0, %v2878
  %v2883 = vsub.f32 0.0, %v2879
  %v2884 = vsub.f32 0.0, %v2880
  %v2885 = vmul.f32 %v2881, 1.442695
  %v2886 = vpow.pop %v2885
  %v2887 = vmul.f32 %v2882, 1.442695
  %v2888 = vpow.pop %v2887
  %v2889 = vmul.f32 %v2883, 1.442695
  %v2890 = vpow.pop %v2889
  %v2891 = vmul.f32 %v2884, 1.442695
  %v2892 = vpow.pop %v2891
  %v2893 = vadd.f32 %v2886, 1.0
  %v2894 = vadd.f32 %v2888, 1.0
  %v2895 = vadd.f32 %v2890, 1.0
  %v2896 = vadd.f32 %v2892, 1.0
  %v2897 = vrcp.pop %v2893
  %v2898 = vrcp.pop %v2894
  %v2899 = vrcp.pop %v2895
  %v2900 = vrcp.pop %v2896
  %v2901 = vadd.f32 %v2897, 1.0
  %v2902 = vadd.f32 %v2898, 1.0
  %v2903 = vadd.f32 %v2899, 1.0
  %v2904 = vadd.f32 %v2900, 1.0
  %v2905 = vlaneseq
  %v2906 = vshrl.u32 %v2905, 7
  %v2907 = vsub.s32 0, %v2906
  %v2908 = vrot.slane %v2901, %v2907
  %v2909 = vlaneseq
  %v2910 = vshrl.u32 %v2909, 7
  %v2911 = vsub.s32 0, %v2910
  %v2912 = vrot.slane %v2902, %v2911
  %v2913 = vlaneseq
  %v2914 = vshrl.u32 %v2913, 7
  %v2915 = vsub.s32 0, %v2914
  %v2916 = vrot.slane %v2903, %v2915
  %v2917 = vlaneseq
  %v2918 = vshrl.u32 %v2917, 7
  %v2919 = vsub.s32 0, %v2918
  %v2920 = vrot.slane %v2904, %v2919
  %v2921 = vmul.f32 %v2908, %v14
  %v2922 = vmul.f32 %v2912, %v15
  %v2923 = vmul.f32 %v2916, %v16
  %v2924 = vmul.f32 %v2920, %v17
  %2925 = vst [vmem:[%s3] sm:$0xff] %v2921
  %2926 = vst [vmem:[%s3 + $0x8] sm:$0xff] %v2922
  %2927 = vst [vmem:[%s3 + $0x10] sm:$0xff] %v2923
  %2928 = vst [vmem:[%s3 + $0x18] sm:$0xff] %v2924
  %v2929 = vld [vmem:[%s165] sm:$0xff]
  %v2930 = vld [vmem:[%s165 + $0x8] sm:$0xff]
  %v2931 = vld [vmem:[%s165 + $0x10] sm:$0xff]
  %v2932 = vld [vmem:[%s165 + $0x18] sm:$0xff]
  %v2933 = vlaneseq
  %v2934 = vshrl.u32 %v2933, 7
  %v2935 = vsub.s32 1, %v2934
  %v2936 = vrot.slane %v2901, %v2935
  %v2937 = vlaneseq
  %v2938 = vshrl.u32 %v2937, 7
  %v2939 = vsub.s32 1, %v2938
  %v2940 = vrot.slane %v2902, %v2939
  %v2941 = vlaneseq
  %v2942 = vshrl.u32 %v2941, 7
  %v2943 = vsub.s32 1, %v2942
  %v2944 = vrot.slane %v2903, %v2943
  %v2945 = vlaneseq
  %v2946 = vshrl.u32 %v2945, 7
  %v2947 = vsub.s32 1, %v2946
  %v2948 = vrot.slane %v2904, %v2947
  %v2949 = vmul.f32 %v2936, %v2929
  %v2950 = vmul.f32 %v2940, %v2930
  %v2951 = vmul.f32 %v2944, %v2931
  %v2952 = vmul.f32 %v2948, %v2932
  %s2953 = scalar_lea.vmem %s3, 32
  %2954 = vst [vmem:[%s2953] sm:$0xff] %v2949
  %2955 = vst [vmem:[%s2953 + $0x8] sm:$0xff] %v2950
  %2956 = vst [vmem:[%s2953 + $0x10] sm:$0xff] %v2951
  %2957 = vst [vmem:[%s2953 + $0x18] sm:$0xff] %v2952
  // Predicated region
  $region14: #{res_cbam_forward.1} parent=0 // pred_check
    _
  $region15: #{res_cbam_forward.1} parent=0 // pred_check_branch
    %2959 = sbr.rel (0) target = $region17
  $region16: #{res_cbam_forward.1} parent=0 // pred_region
    _
  $region17: #{res_cbam_forward.1} parent=0 // pred_fallthru
    _
  // Predicated region
  $region18: #{res_cbam_forward.1} parent=0 // pred_check
    _
  $region19: #{res_cbam_forward.1} parent=0 // pred_check_branch
    %2961 = sbr.rel (0) target = $region21
  $region20: #{res_cbam_forward.1} parent=0 // pred_region
    _
  $region21: #{res_cbam_forward.1} parent=0 // pred_fallthru
    _

</llo_original>
